<compile_context>
chip_gen: v6e
topology: v6e:2x2x1
jax: 0.10.0
libtpu: 0.0.40
codegen_flags: <defaults>
</compile_context>

<pallas_src>
import math

import jax
import jax.numpy as jnp
from jax import lax
from jax.experimental import pallas as pl
from jax.experimental.pallas import tpu as pltpu

EPS = 1e-6
NEG_INF = -1e9


def _make_decoder_kernel(S, S_enc, D, H, Dff):
    dk = D // H
    bf16 = jnp.bfloat16

    def layernorm(x, alpha, bias):
        # matches the tutorial LayerNormalization: unbiased std (N-1), eps added
        # to std (not var).  Reciprocal goes to the EUP slot.
        mean = jnp.mean(x, axis=-1, keepdims=True)
        var = jnp.sum((x - mean) ** 2, axis=-1, keepdims=True) / (x.shape[-1] - 1)
        inv = pl.reciprocal(jnp.sqrt(var) + EPS, approx=True)
        return alpha * (x - mean) * inv + bias

    def attention(q, k, v, mask_fn, wo):
        # q: (Sq, D) fp32, scale already folded into Wq.  k/v: (Sk, D) fp32.
        # Wo is folded into the head loop so every accumulator write is the full
        # lane-dense (Sq, D) width; Wo per-head slices are sublane slices (cheap).
        qb = q.astype(bf16)
        kb = k.astype(bf16)
        vb = v.astype(bf16)
        acc = None
        for h in range(H):                                   # static unroll
            sl = slice(h * dk, (h + 1) * dk)
            # q @ k^T without materializing a transpose (MXU "NT" matmul)
            scores = lax.dot_general(
                qb[:, sl], kb[:, sl],
                dimension_numbers=(((1,), (1,)), ((), ())),
                preferred_element_type=jnp.float32)
            scores = mask_fn(scores)                         # fp32 softmax path
            m = jnp.max(scores, axis=-1, keepdims=True)
            e = jnp.exp(scores - m)
            inv = pl.reciprocal(jnp.sum(e, axis=-1, keepdims=True), approx=True)
            p = (e * inv).astype(bf16)
            head = jnp.dot(p, vb[:, sl],
                           preferred_element_type=jnp.float32).astype(bf16)
            contrib = jnp.dot(head, wo[sl, :],               # (Sq, D) lane-dense
                              preferred_element_type=jnp.float32)
            acc = contrib if acc is None else acc + contrib
        return acc

    def causal_mask(scores):
        # recomputed per head: iota + compare + select, no dense fp32 bias kept live
        r = lax.broadcasted_iota(jnp.int32, scores.shape, 0)
        c = lax.broadcasted_iota(jnp.int32, scores.shape, 1)
        return jnp.where(r >= c, scores, NEG_INF)

    def kernel(x_ref, enc_ref, src_bias_ref,
               wqkv1_ref, wo1_ref,
               wq2_ref, wkv2_ref, wo2_ref,
               w1_ref, b1_ref, w2_ref, b2_ref,
               ln_a_ref, ln_b_ref,
               out_ref):
        x = x_ref[0]                    # (S, D)      fp32
        enc = enc_ref[0]                # (S_enc, D)  bf16
        src_bias = src_bias_ref[0]      # (1, S_enc)  fp32 additive key-padding bias

        # --- residual connection 0: self-attention (causal) ---
        xn = layernorm(x, ln_a_ref[0], ln_b_ref[0])
        qkv = jnp.dot(xn.astype(bf16), wqkv1_ref[...],
                      preferred_element_type=jnp.float32)        # fused Q|K|V
        x = x + attention(qkv[:, :D], qkv[:, D:2 * D], qkv[:, 2 * D:],
                          causal_mask, wo1_ref[...])

        # --- residual connection 1: cross-attention (K/V from encoder output) ---
        xn = layernorm(x, ln_a_ref[1], ln_b_ref[1])
        q = jnp.dot(xn.astype(bf16), wq2_ref[...],
                    preferred_element_type=jnp.float32)
        kv = jnp.dot(enc, wkv2_ref[...],
                     preferred_element_type=jnp.float32)          # fused K|V
        x = x + attention(q, kv[:, :D], kv[:, D:],
                          lambda s: s + src_bias, wo2_ref[...])

        # --- residual connection 2: feed-forward (Linear -> ReLU -> Linear) ---
        xn = layernorm(x, ln_a_ref[2], ln_b_ref[2])
        hidden = jnp.maximum(
            jnp.dot(xn.astype(bf16), w1_ref[...],
                    preferred_element_type=jnp.float32) + b1_ref[0], 0.0)
        x = x + (jnp.dot(hidden.astype(bf16), w2_ref[...],
                         preferred_element_type=jnp.float32) + b2_ref[0])

        out_ref[0] = x

    return kernel


def prepare_decoder_params(params, num_heads):
    """One-time weight fusion / bf16 cast (do NOT redo this per call)."""
    D = params["wq1"].shape[0]
    dk = D // num_heads
    scale = 1.0 / math.sqrt(dk)
    bf16 = jnp.bfloat16
    return {
        # 1/sqrt(dk) folded into the Wq columns (scale the weight, not q)
        "wqkv1": jnp.concatenate(
            [params["wq1"] * scale, params["wk1"], params["wv1"]],
            axis=1).astype(bf16),
        "wo1": params["wo1"].astype(bf16),
        "wq2": (params["wq2"] * scale).astype(bf16),
        "wkv2": jnp.concatenate([params["wk2"], params["wv2"]], axis=1).astype(bf16),
        "wo2": params["wo2"].astype(bf16),
        "w1": params["w1"].astype(bf16),
        "b1": params["b1"].astype(jnp.float32),
        "w2": params["w2"].astype(bf16),
        "b2": params["b2"].astype(jnp.float32),
        "ln_alpha": params["ln_alpha"].astype(jnp.float32),
        "ln_bias": params["ln_bias"].astype(jnp.float32),
    }


def decoder_block_pallas(x, enc, src_key_mask, prepared, num_heads):
    """x: (B, S, D) fp32.  enc: (B, S_enc, D).  src_key_mask: (B, S_enc) int (1=keep).
    The target mask is the causal mask, generated in-kernel."""
    B, S, D = x.shape
    S_enc = enc.shape[1]
    Dff = prepared["w1"].shape[1]

    enc_bf = enc.astype(jnp.bfloat16)
    # additive key-padding bias (B, 1, S_enc), broadcast over queries/heads in-kernel
    src_bias = jnp.where(src_key_mask[:, None, :] == 0, NEG_INF, 0.0).astype(jnp.float32)

    kernel = _make_decoder_kernel(S, S_enc, D, num_heads, Dff)

    def build_call(single_buffer_weights):
        def wspec(shape):
            idx = lambda b: tuple(0 for _ in shape)
            if single_buffer_weights:
                # constant block every grid step -> no need to double-buffer it
                return pl.BlockSpec(shape, idx, pipeline_mode=pl.Buffered(1))
            return pl.BlockSpec(shape, idx)

        in_specs = [
            pl.BlockSpec((1, S, D), lambda b: (b, 0, 0)),          # x (fp32)
            pl.BlockSpec((1, S_enc, D), lambda b: (b, 0, 0)),      # encoder output (bf16)
            pl.BlockSpec((1, 1, S_enc), lambda b: (b, 0, 0)),      # src additive bias
            wspec((D, 3 * D)), wspec((D, D)),                      # self-attn Wqkv, Wo
            wspec((D, D)), wspec((D, 2 * D)), wspec((D, D)),       # cross-attn Wq, Wkv, Wo
            wspec((D, Dff)), wspec((1, Dff)),                      # FFN W1, b1
            wspec((Dff, D)), wspec((1, D)),                        # FFN W2, b2
            wspec((3, D)), wspec((3, D)),                          # 3x LayerNorm alpha/bias
        ]
        out_specs = pl.BlockSpec((1, S, D), lambda b: (b, 0, 0))

        return pl.pallas_call(
            kernel,
            out_shape=jax.ShapeDtypeStruct((B, S, D), jnp.float32),
            grid_spec=pltpu.PrefetchScalarGridSpec(
                num_scalar_prefetch=0,
                grid=(B,),
                in_specs=in_specs,
                out_specs=out_specs,
            ),
            compiler_params=pltpu.CompilerParams(
                dimension_semantics=("parallel",),
                # <= half of v7x's 64 MiB physical VMEM; plenty for v5e/v6e too.
                vmem_limit_bytes=32 * 1024 * 1024,
            ),
        )

    args = (x, enc_bf, src_bias,
            prepared["wqkv1"], prepared["wo1"],
            prepared["wq2"], prepared["wkv2"], prepared["wo2"],
            prepared["w1"], prepared["b1"], prepared["w2"], prepared["b2"],
            prepared["ln_alpha"], prepared["ln_bias"])

    # Prefer single-buffered constant weights (halves resident weight VMEM);
    # fall back to default double buffering if this jax build rejects it.
    try:
        return build_call(True)(*args)
    except Exception:
        return build_call(False)(*args)


# ----------------------------- pure-JAX reference -----------------------------
def decoder_block_ref(x, enc, src_mask, tgt_mask, p, H):
    def ln(x, a, b):
        mean = x.mean(-1, keepdims=True)
        var = ((x - mean) ** 2).sum(-1, keepdims=True) / (x.shape[-1] - 1)
        return a * (x - mean) / (jnp.sqrt(var) + EPS) + b

    def mha(q_in, k_in, v_in, mask, wq, wk, wv, wo):
        B, Sq, D = q_in.shape
        Sk = k_in.shape[1]
        dk = D // H
        q = (q_in @ wq).reshape(B, Sq, H, dk).transpose(0, 2, 1, 3)
        k = (k_in @ wk).reshape(B, Sk, H, dk).transpose(0, 2, 1, 3)
        v = (v_in @ wv).reshape(B, Sk, H, dk).transpose(0, 2, 1, 3)
        s = (q @ k.transpose(0, 1, 3, 2)) / math.sqrt(dk)
        s = jnp.where(mask[:, None, :, :] == 0, -1e9, s)
        a = jax.nn.softmax(s, axis=-1)
        o = (a @ v).transpose(0, 2, 1, 3).reshape(B, Sq, D)
        return o @ wo

    xn = ln(x, p["ln_alpha"][0], p["ln_bias"][0])
    x = x + mha(xn, xn, xn, tgt_mask, p["wq1"], p["wk1"], p["wv1"], p["wo1"])
    xn = ln(x, p["ln_alpha"][1], p["ln_bias"][1])
    x = x + mha(xn, enc, enc, src_mask, p["wq2"], p["wk2"], p["wv2"], p["wo2"])
    xn = ln(x, p["ln_alpha"][2], p["ln_bias"][2])
    h = jnp.maximum(xn @ p["w1"] + p["b1"][0], 0.0)
    return x + h @ p["w2"] + p["b2"][0]


if __name__ == "__main__":
    B, S, S_ENC, D, H, DFF = 2, 8, 10, 32, 4, 64

    key = jax.random.PRNGKey(0)
    keys = jax.random.split(key, 16)

    def w(k, shape, scale=0.1):
        return (scale * jax.random.normal(k, shape)).astype(jnp.float32)

    params = {
        "wq1": w(keys[0], (D, D)), "wk1": w(keys[1], (D, D)),
        "wv1": w(keys[2], (D, D)), "wo1": w(keys[3], (D, D)),
        "wq2": w(keys[4], (D, D)), "wk2": w(keys[5], (D, D)),
        "wv2": w(keys[6], (D, D)), "wo2": w(keys[7], (D, D)),
        "w1": w(keys[8], (D, DFF)), "b1": w(keys[9], (1, DFF)),
        "w2": w(keys[10], (DFF, D)), "b2": w(keys[11], (1, D)),
        "ln_alpha": jnp.ones((3, D), jnp.float32),
        "ln_bias": jnp.zeros((3, D), jnp.float32),
    }

    x = jax.random.normal(keys[12], (B, S, D), jnp.float32)
    enc = jax.random.normal(keys[13], (B, S_ENC, D), jnp.float32)

    # src key-padding mask: batch 1 has the last 2 encoder positions padded out
    src_key_mask = jnp.stack([
        jnp.ones((S_ENC,), jnp.int32),
        jnp.concatenate([jnp.ones((S_ENC - 2,), jnp.int32),
                         jnp.zeros((2,), jnp.int32)]),
    ])

    prepared = prepare_decoder_params(params, H)   # one-time weight fusion / cast
    out = decoder_block_pallas(x, enc, src_key_mask, prepared, H)
    out = jax.block_until_ready(out)

    # dense masks for the fp32 reference (same semantics as the kernel)
    tgt_mask = jnp.broadcast_to(
        jnp.tril(jnp.ones((S, S), jnp.int32)), (B, S, S)).astype(jnp.int32)
    src_mask = jnp.broadcast_to(
        src_key_mask[:, None, :], (B, S, S_ENC)).astype(jnp.int32)
    ref = decoder_block_ref(x, enc, src_mask, tgt_mask, params, H)

    assert out.shape == (B, S, D)
    err = float(jnp.max(jnp.abs(out - ref)))
    # bf16 matmul operands (fp32 accumulation) vs. fp32 reference -> loosened tol.
    assert err < 3e-2, err

    # dropout prob treated as 0.0 (eval mode); nn.Dropout is identity here.
    print("KERNEL_OK")
</pallas_src>

<mosaic_0001>
module attributes {stable_mosaic.version = 11 : i64} {
  func.func @kernel(%arg0: i32, %arg1: memref<1x8x32xf32, #tpu.memory_space<vmem>>, %arg2: memref<1x10x32xbf16, #tpu.memory_space<vmem>>, %arg3: memref<1x1x10xf32, #tpu.memory_space<vmem>>, %arg4: memref<32x96xbf16, #tpu.memory_space<vmem>>, %arg5: memref<32x32xbf16, #tpu.memory_space<vmem>>, %arg6: memref<32x32xbf16, #tpu.memory_space<vmem>>, %arg7: memref<32x64xbf16, #tpu.memory_space<vmem>>, %arg8: memref<32x32xbf16, #tpu.memory_space<vmem>>, %arg9: memref<32x64xbf16, #tpu.memory_space<vmem>>, %arg10: memref<1x64xf32, #tpu.memory_space<vmem>>, %arg11: memref<64x32xbf16, #tpu.memory_space<vmem>>, %arg12: memref<1x32xf32, #tpu.memory_space<vmem>>, %arg13: memref<3x32xf32, #tpu.memory_space<vmem>>, %arg14: memref<3x32xf32, #tpu.memory_space<vmem>>, %arg15: memref<1x8x32xf32, #tpu.memory_space<vmem>>) attributes {dimension_semantics = [#tpu.dimension_semantics<parallel>], iteration_bounds = array<i64: 2>, scalar_prefetch = 0 : i64, scratch_operands = 0 : i64, tpu.core_type = #tpu.core_type<tc>, window_params = [{transform_indices = @transform_0, window_bounds = array<i64: 1, 8, 32>}, {transform_indices = @transform_1, window_bounds = array<i64: 1, 10, 32>}, {transform_indices = @transform_2, window_bounds = array<i64: 1, 1, 10>}, {pipeline_mode = #tpu.pipeline_mode<synchronous>, transform_indices = @transform_3, window_bounds = array<i64: 32, 96>}, {pipeline_mode = #tpu.pipeline_mode<synchronous>, transform_indices = @transform_4, window_bounds = array<i64: 32, 32>}, {pipeline_mode = #tpu.pipeline_mode<synchronous>, transform_indices = @transform_5, window_bounds = array<i64: 32, 32>}, {pipeline_mode = #tpu.pipeline_mode<synchronous>, transform_indices = @transform_6, window_bounds = array<i64: 32, 64>}, {pipeline_mode = #tpu.pipeline_mode<synchronous>, transform_indices = @transform_7, window_bounds = array<i64: 32, 32>}, {pipeline_mode = #tpu.pipeline_mode<synchronous>, transform_indices = @transform_8, window_bounds = array<i64: 32, 64>}, {pipeline_mode = #tpu.pipeline_mode<synchronous>, transform_indices = @transform_9, window_bounds = array<i64: 1, 64>}, {pipeline_mode = #tpu.pipeline_mode<synchronous>, transform_indices = @transform_10, window_bounds = array<i64: 64, 32>}, {pipeline_mode = #tpu.pipeline_mode<synchronous>, transform_indices = @transform_11, window_bounds = array<i64: 1, 32>}, {pipeline_mode = #tpu.pipeline_mode<synchronous>, transform_indices = @transform_12, window_bounds = array<i64: 3, 32>}, {pipeline_mode = #tpu.pipeline_mode<synchronous>, transform_indices = @transform_13, window_bounds = array<i64: 3, 32>}, {transform_indices = @transform_14, window_bounds = array<i64: 1, 8, 32>}]} {
    %c0 = arith.constant 0 : index
    %c0_0 = arith.constant 0 : index
    %c0_1 = arith.constant 0 : index
    %0 = vector.load %arg1[%c0, %c0_0, %c0_1] : memref<1x8x32xf32, #tpu.memory_space<vmem>>, vector<1x8x32xf32>
    %1 = vector.shape_cast %0 : vector<1x8x32xf32> to vector<8x32xf32>
    %c0_2 = arith.constant 0 : index
    %c0_3 = arith.constant 0 : index
    %c0_4 = arith.constant 0 : index
    %2 = vector.load %arg2[%c0_2, %c0_3, %c0_4] : memref<1x10x32xbf16, #tpu.memory_space<vmem>>, vector<1x10x32xbf16>
    %3 = vector.shape_cast %2 : vector<1x10x32xbf16> to vector<10x32xbf16>
    %c0_5 = arith.constant 0 : index
    %c0_6 = arith.constant 0 : index
    %c0_7 = arith.constant 0 : index
    %4 = vector.load %arg3[%c0_5, %c0_6, %c0_7] : memref<1x1x10xf32, #tpu.memory_space<vmem>>, vector<1x1x10xf32>
    %5 = vector.shape_cast %4 : vector<1x1x10xf32> to vector<1x10xf32>
    %c0_8 = arith.constant 0 : index
    %c0_9 = arith.constant 0 : index
    %6 = vector.load %arg13[%c0_8, %c0_9] : memref<3x32xf32, #tpu.memory_space<vmem>>, vector<1x32xf32>
    %7 = vector.shape_cast %6 : vector<1x32xf32> to vector<32xf32>
    %c0_10 = arith.constant 0 : index
    %c0_11 = arith.constant 0 : index
    %8 = vector.load %arg14[%c0_10, %c0_11] : memref<3x32xf32, #tpu.memory_space<vmem>>, vector<1x32xf32>
    %9 = vector.shape_cast %8 : vector<1x32xf32> to vector<32xf32>
    %cst = arith.constant dense<0.000000e+00> : vector<8xf32>
    %10 = vector.multi_reduction <add>, %1, %cst [1] : vector<8x32xf32> to vector<8xf32>
    %11 = vector.shape_cast %10 : vector<8xf32> to vector<8x1xf32>
    %cst_12 = arith.constant 3.200000e+01 : f32
    %12 = vector.broadcast %cst_12 : f32 to vector<8x1xf32>
    %13 = arith.divf %11, %12 : vector<8x1xf32>
    %14 = vector.broadcast %13 : vector<8x1xf32> to vector<8x32xf32>
    %15 = arith.subf %1, %14 : vector<8x32xf32>
    %16 = arith.mulf %15, %15 : vector<8x32xf32>
    %cst_13 = arith.constant dense<0.000000e+00> : vector<8xf32>
    %17 = vector.multi_reduction <add>, %16, %cst_13 [1] : vector<8x32xf32> to vector<8xf32>
    %18 = vector.shape_cast %17 : vector<8xf32> to vector<8x1xf32>
    %cst_14 = arith.constant 3.100000e+01 : f32
    %19 = vector.broadcast %cst_14 : f32 to vector<8x1xf32>
    %20 = arith.divf %18, %19 : vector<8x1xf32>
    %21 = math.sqrt %20 : vector<8x1xf32>
    %cst_15 = arith.constant 9.99999997E-7 : f32
    %22 = vector.broadcast %cst_15 : f32 to vector<8x1xf32>
    %23 = arith.addf %21, %22 : vector<8x1xf32>
    %24 = tpu.reciprocal %23 {approx = true} : vector<8x1xf32> -> vector<8x1xf32>
    %25 = vector.broadcast %13 : vector<8x1xf32> to vector<8x32xf32>
    %26 = arith.subf %1, %25 : vector<8x32xf32>
    %27 = vector.shape_cast %7 : vector<32xf32> to vector<1x32xf32>
    %28 = vector.broadcast %27 : vector<1x32xf32> to vector<8x32xf32>
    %29 = arith.mulf %28, %26 : vector<8x32xf32>
    %30 = vector.broadcast %24 : vector<8x1xf32> to vector<8x32xf32>
    %31 = arith.mulf %29, %30 : vector<8x32xf32>
    %32 = vector.shape_cast %9 : vector<32xf32> to vector<1x32xf32>
    %33 = vector.broadcast %32 : vector<1x32xf32> to vector<8x32xf32>
    %34 = arith.addf %31, %33 : vector<8x32xf32>
    %35 = arith.truncf %34 : vector<8x32xf32> to vector<8x32xbf16>
    %c0_16 = arith.constant 0 : index
    %c0_17 = arith.constant 0 : index
    %36 = vector.load %arg4[%c0_16, %c0_17] : memref<32x96xbf16, #tpu.memory_space<vmem>>, vector<32x96xbf16>
    %cst_18 = arith.constant dense<0.000000e+00> : vector<8x96xf32>
    %37 = tpu.matmul %35, %36, %cst_18 {dimension_numbers = #tpu.dot_dimension_numbers<[1], [0], [0], [1], [0, 0, 1, 1], [], []>} : vector<8x32xbf16>, vector<32x96xbf16>, vector<8x96xf32> -> vector<8x96xf32>
    %38 = vector.extract_strided_slice %37 {offsets = [0, 0], sizes = [8, 32], strides = [1, 1]} : vector<8x96xf32> to vector<8x32xf32>
    %39 = vector.extract_strided_slice %37 {offsets = [0, 32], sizes = [8, 32], strides = [1, 1]} : vector<8x96xf32> to vector<8x32xf32>
    %40 = vector.extract_strided_slice %37 {offsets = [0, 64], sizes = [8, 32], strides = [1, 1]} : vector<8x96xf32> to vector<8x32xf32>
    %c0_19 = arith.constant 0 : index
    %c0_20 = arith.constant 0 : index
    %41 = vector.load %arg5[%c0_19, %c0_20] : memref<32x32xbf16, #tpu.memory_space<vmem>>, vector<32x32xbf16>
    %42 = arith.truncf %38 : vector<8x32xf32> to vector<8x32xbf16>
    %43 = arith.truncf %39 : vector<8x32xf32> to vector<8x32xbf16>
    %44 = arith.truncf %40 : vector<8x32xf32> to vector<8x32xbf16>
    %45 = vector.extract_strided_slice %42 {offsets = [0, 0], sizes = [8, 8], strides = [1, 1]} : vector<8x32xbf16> to vector<8x8xbf16>
    %46 = vector.extract_strided_slice %43 {offsets = [0, 0], sizes = [8, 8], strides = [1, 1]} : vector<8x32xbf16> to vector<8x8xbf16>
    %cst_21 = arith.constant dense<0.000000e+00> : vector<8x8xf32>
    %47 = tpu.matmul %45, %46, %cst_21 {dimension_numbers = #tpu.dot_dimension_numbers<[1], [1], [0], [0], [0, 0, 1, 0], [], []>} : vector<8x8xbf16>, vector<8x8xbf16>, vector<8x8xf32> -> vector<8x8xf32>
    %48 = tpu.iota {dimensions = array<i32: 0>} : vector<8x8xi32>
    %49 = tpu.iota {dimensions = array<i32: 1>} : vector<8x8xi32>
    %50 = arith.cmpi sge, %48, %49 : vector<8x8xi32>
    %cst_22 = arith.constant -1.000000e+09 : f32
    %51 = vector.broadcast %cst_22 : f32 to vector<8x8xf32>
    %52 = arith.select %50, %47, %51 : vector<8x8xi1>, vector<8x8xf32>
    %cst_23 = arith.constant dense<0xFF800000> : vector<8xf32>
    %53 = vector.multi_reduction <maximumf>, %52, %cst_23 [1] : vector<8x8xf32> to vector<8xf32>
    %54 = vector.shape_cast %53 : vector<8xf32> to vector<8x1xf32>
    %55 = vector.broadcast %54 : vector<8x1xf32> to vector<8x8xf32>
    %56 = arith.subf %52, %55 : vector<8x8xf32>
    %57 = math.exp %56 : vector<8x8xf32>
    %cst_24 = arith.constant dense<0.000000e+00> : vector<8xf32>
    %58 = vector.multi_reduction <add>, %57, %cst_24 [1] : vector<8x8xf32> to vector<8xf32>
    %59 = vector.shape_cast %58 : vector<8xf32> to vector<8x1xf32>
    %60 = tpu.reciprocal %59 {approx = true} : vector<8x1xf32> -> vector<8x1xf32>
    %61 = vector.broadcast %60 : vector<8x1xf32> to vector<8x8xf32>
    %62 = arith.mulf %57, %61 : vector<8x8xf32>
    %63 = arith.truncf %62 : vector<8x8xf32> to vector<8x8xbf16>
    %64 = vector.extract_strided_slice %44 {offsets = [0, 0], sizes = [8, 8], strides = [1, 1]} : vector<8x32xbf16> to vector<8x8xbf16>
    %cst_25 = arith.constant dense<0.000000e+00> : vector<8x8xf32>
    %65 = tpu.matmul %63, %64, %cst_25 {dimension_numbers = #tpu.dot_dimension_numbers<[1], [0], [0], [1], [0, 0, 1, 1], [], []>} : vector<8x8xbf16>, vector<8x8xbf16>, vector<8x8xf32> -> vector<8x8xf32>
    %66 = arith.truncf %65 : vector<8x8xf32> to vector<8x8xbf16>
    %67 = vector.extract_strided_slice %41 {offsets = [0, 0], sizes = [8, 32], strides = [1, 1]} : vector<32x32xbf16> to vector<8x32xbf16>
    %cst_26 = arith.constant dense<0.000000e+00> : vector<8x32xf32>
    %68 = tpu.matmul %66, %67, %cst_26 {dimension_numbers = #tpu.dot_dimension_numbers<[1], [0], [0], [1], [0, 0, 1, 1], [], []>} : vector<8x8xbf16>, vector<8x32xbf16>, vector<8x32xf32> -> vector<8x32xf32>
    %69 = vector.extract_strided_slice %42 {offsets = [0, 8], sizes = [8, 8], strides = [1, 1]} : vector<8x32xbf16> to vector<8x8xbf16>
    %70 = vector.extract_strided_slice %43 {offsets = [0, 8], sizes = [8, 8], strides = [1, 1]} : vector<8x32xbf16> to vector<8x8xbf16>
    %cst_27 = arith.constant dense<0.000000e+00> : vector<8x8xf32>
    %71 = tpu.matmul %69, %70, %cst_27 {dimension_numbers = #tpu.dot_dimension_numbers<[1], [1], [0], [0], [0, 0, 1, 0], [], []>} : vector<8x8xbf16>, vector<8x8xbf16>, vector<8x8xf32> -> vector<8x8xf32>
    %72 = tpu.iota {dimensions = array<i32: 0>} : vector<8x8xi32>
    %73 = tpu.iota {dimensions = array<i32: 1>} : vector<8x8xi32>
    %74 = arith.cmpi sge, %72, %73 : vector<8x8xi32>
    %cst_28 = arith.constant -1.000000e+09 : f32
    %75 = vector.broadcast %cst_28 : f32 to vector<8x8xf32>
    %76 = arith.select %74, %71, %75 : vector<8x8xi1>, vector<8x8xf32>
    %cst_29 = arith.constant dense<0xFF800000> : vector<8xf32>
    %77 = vector.multi_reduction <maximumf>, %76, %cst_29 [1] : vector<8x8xf32> to vector<8xf32>
    %78 = vector.shape_cast %77 : vector<8xf32> to vector<8x1xf32>
    %79 = vector.broadcast %78 : vector<8x1xf32> to vector<8x8xf32>
    %80 = arith.subf %76, %79 : vector<8x8xf32>
    %81 = math.exp %80 : vector<8x8xf32>
    %cst_30 = arith.constant dense<0.000000e+00> : vector<8xf32>
    %82 = vector.multi_reduction <add>, %81, %cst_30 [1] : vector<8x8xf32> to vector<8xf32>
    %83 = vector.shape_cast %82 : vector<8xf32> to vector<8x1xf32>
    %84 = tpu.reciprocal %83 {approx = true} : vector<8x1xf32> -> vector<8x1xf32>
    %85 = vector.broadcast %84 : vector<8x1xf32> to vector<8x8xf32>
    %86 = arith.mulf %81, %85 : vector<8x8xf32>
    %87 = arith.truncf %86 : vector<8x8xf32> to vector<8x8xbf16>
    %88 = vector.extract_strided_slice %44 {offsets = [0, 8], sizes = [8, 8], strides = [1, 1]} : vector<8x32xbf16> to vector<8x8xbf16>
    %cst_31 = arith.constant dense<0.000000e+00> : vector<8x8xf32>
    %89 = tpu.matmul %87, %88, %cst_31 {dimension_numbers = #tpu.dot_dimension_numbers<[1], [0], [0], [1], [0, 0, 1, 1], [], []>} : vector<8x8xbf16>, vector<8x8xbf16>, vector<8x8xf32> -> vector<8x8xf32>
    %90 = arith.truncf %89 : vector<8x8xf32> to vector<8x8xbf16>
    %91 = vector.extract_strided_slice %41 {offsets = [8, 0], sizes = [8, 32], strides = [1, 1]} : vector<32x32xbf16> to vector<8x32xbf16>
    %cst_32 = arith.constant dense<0.000000e+00> : vector<8x32xf32>
    %92 = tpu.matmul %90, %91, %cst_32 {dimension_numbers = #tpu.dot_dimension_numbers<[1], [0], [0], [1], [0, 0, 1, 1], [], []>} : vector<8x8xbf16>, vector<8x32xbf16>, vector<8x32xf32> -> vector<8x32xf32>
    %93 = arith.addf %68, %92 : vector<8x32xf32>
    %94 = vector.extract_strided_slice %42 {offsets = [0, 16], sizes = [8, 8], strides = [1, 1]} : vector<8x32xbf16> to vector<8x8xbf16>
    %95 = vector.extract_strided_slice %43 {offsets = [0, 16], sizes = [8, 8], strides = [1, 1]} : vector<8x32xbf16> to vector<8x8xbf16>
    %cst_33 = arith.constant dense<0.000000e+00> : vector<8x8xf32>
    %96 = tpu.matmul %94, %95, %cst_33 {dimension_numbers = #tpu.dot_dimension_numbers<[1], [1], [0], [0], [0, 0, 1, 0], [], []>} : vector<8x8xbf16>, vector<8x8xbf16>, vector<8x8xf32> -> vector<8x8xf32>
    %97 = tpu.iota {dimensions = array<i32: 0>} : vector<8x8xi32>
    %98 = tpu.iota {dimensions = array<i32: 1>} : vector<8x8xi32>
    %99 = arith.cmpi sge, %97, %98 : vector<8x8xi32>
    %cst_34 = arith.constant -1.000000e+09 : f32
    %100 = vector.broadcast %cst_34 : f32 to vector<8x8xf32>
    %101 = arith.select %99, %96, %100 : vector<8x8xi1>, vector<8x8xf32>
    %cst_35 = arith.constant dense<0xFF800000> : vector<8xf32>
    %102 = vector.multi_reduction <maximumf>, %101, %cst_35 [1] : vector<8x8xf32> to vector<8xf32>
    %103 = vector.shape_cast %102 : vector<8xf32> to vector<8x1xf32>
    %104 = vector.broadcast %103 : vector<8x1xf32> to vector<8x8xf32>
    %105 = arith.subf %101, %104 : vector<8x8xf32>
    %106 = math.exp %105 : vector<8x8xf32>
    %cst_36 = arith.constant dense<0.000000e+00> : vector<8xf32>
    %107 = vector.multi_reduction <add>, %106, %cst_36 [1] : vector<8x8xf32> to vector<8xf32>
    %108 = vector.shape_cast %107 : vector<8xf32> to vector<8x1xf32>
    %109 = tpu.reciprocal %108 {approx = true} : vector<8x1xf32> -> vector<8x1xf32>
    %110 = vector.broadcast %109 : vector<8x1xf32> to vector<8x8xf32>
    %111 = arith.mulf %106, %110 : vector<8x8xf32>
    %112 = arith.truncf %111 : vector<8x8xf32> to vector<8x8xbf16>
    %113 = vector.extract_strided_slice %44 {offsets = [0, 16], sizes = [8, 8], strides = [1, 1]} : vector<8x32xbf16> to vector<8x8xbf16>
    %cst_37 = arith.constant dense<0.000000e+00> : vector<8x8xf32>
    %114 = tpu.matmul %112, %113, %cst_37 {dimension_numbers = #tpu.dot_dimension_numbers<[1], [0], [0], [1], [0, 0, 1, 1], [], []>} : vector<8x8xbf16>, vector<8x8xbf16>, vector<8x8xf32> -> vector<8x8xf32>
    %115 = arith.truncf %114 : vector<8x8xf32> to vector<8x8xbf16>
    %116 = vector.extract_strided_slice %41 {offsets = [16, 0], sizes = [8, 32], strides = [1, 1]} : vector<32x32xbf16> to vector<8x32xbf16>
    %cst_38 = arith.constant dense<0.000000e+00> : vector<8x32xf32>
    %117 = tpu.matmul %115, %116, %cst_38 {dimension_numbers = #tpu.dot_dimension_numbers<[1], [0], [0], [1], [0, 0, 1, 1], [], []>} : vector<8x8xbf16>, vector<8x32xbf16>, vector<8x32xf32> -> vector<8x32xf32>
    %118 = arith.addf %93, %117 : vector<8x32xf32>
    %119 = vector.extract_strided_slice %42 {offsets = [0, 24], sizes = [8, 8], strides = [1, 1]} : vector<8x32xbf16> to vector<8x8xbf16>
    %120 = vector.extract_strided_slice %43 {offsets = [0, 24], sizes = [8, 8], strides = [1, 1]} : vector<8x32xbf16> to vector<8x8xbf16>
    %cst_39 = arith.constant dense<0.000000e+00> : vector<8x8xf32>
    %121 = tpu.matmul %119, %120, %cst_39 {dimension_numbers = #tpu.dot_dimension_numbers<[1], [1], [0], [0], [0, 0, 1, 0], [], []>} : vector<8x8xbf16>, vector<8x8xbf16>, vector<8x8xf32> -> vector<8x8xf32>
    %122 = tpu.iota {dimensions = array<i32: 0>} : vector<8x8xi32>
    %123 = tpu.iota {dimensions = array<i32: 1>} : vector<8x8xi32>
    %124 = arith.cmpi sge, %122, %123 : vector<8x8xi32>
    %cst_40 = arith.constant -1.000000e+09 : f32
    %125 = vector.broadcast %cst_40 : f32 to vector<8x8xf32>
    %126 = arith.select %124, %121, %125 : vector<8x8xi1>, vector<8x8xf32>
    %cst_41 = arith.constant dense<0xFF800000> : vector<8xf32>
    %127 = vector.multi_reduction <maximumf>, %126, %cst_41 [1] : vector<8x8xf32> to vector<8xf32>
    %128 = vector.shape_cast %127 : vector<8xf32> to vector<8x1xf32>
    %129 = vector.broadcast %128 : vector<8x1xf32> to vector<8x8xf32>
    %130 = arith.subf %126, %129 : vector<8x8xf32>
    %131 = math.exp %130 : vector<8x8xf32>
    %cst_42 = arith.constant dense<0.000000e+00> : vector<8xf32>
    %132 = vector.multi_reduction <add>, %131, %cst_42 [1] : vector<8x8xf32> to vector<8xf32>
    %133 = vector.shape_cast %132 : vector<8xf32> to vector<8x1xf32>
    %134 = tpu.reciprocal %133 {approx = true} : vector<8x1xf32> -> vector<8x1xf32>
    %135 = vector.broadcast %134 : vector<8x1xf32> to vector<8x8xf32>
    %136 = arith.mulf %131, %135 : vector<8x8xf32>
    %137 = arith.truncf %136 : vector<8x8xf32> to vector<8x8xbf16>
    %138 = vector.extract_strided_slice %44 {offsets = [0, 24], sizes = [8, 8], strides = [1, 1]} : vector<8x32xbf16> to vector<8x8xbf16>
    %cst_43 = arith.constant dense<0.000000e+00> : vector<8x8xf32>
    %139 = tpu.matmul %137, %138, %cst_43 {dimension_numbers = #tpu.dot_dimension_numbers<[1], [0], [0], [1], [0, 0, 1, 1], [], []>} : vector<8x8xbf16>, vector<8x8xbf16>, vector<8x8xf32> -> vector<8x8xf32>
    %140 = arith.truncf %139 : vector<8x8xf32> to vector<8x8xbf16>
    %141 = vector.extract_strided_slice %41 {offsets = [24, 0], sizes = [8, 32], strides = [1, 1]} : vector<32x32xbf16> to vector<8x32xbf16>
    %cst_44 = arith.constant dense<0.000000e+00> : vector<8x32xf32>
    %142 = tpu.matmul %140, %141, %cst_44 {dimension_numbers = #tpu.dot_dimension_numbers<[1], [0], [0], [1], [0, 0, 1, 1], [], []>} : vector<8x8xbf16>, vector<8x32xbf16>, vector<8x32xf32> -> vector<8x32xf32>
    %143 = arith.addf %118, %142 : vector<8x32xf32>
    %144 = arith.addf %1, %143 : vector<8x32xf32>
    %c1 = arith.constant 1 : index
    %c0_45 = arith.constant 0 : index
    %145 = vector.load %arg13[%c1, %c0_45] : memref<3x32xf32, #tpu.memory_space<vmem>>, vector<1x32xf32>
    %146 = vector.shape_cast %145 : vector<1x32xf32> to vector<32xf32>
    %c1_46 = arith.constant 1 : index
    %c0_47 = arith.constant 0 : index
    %147 = vector.load %arg14[%c1_46, %c0_47] : memref<3x32xf32, #tpu.memory_space<vmem>>, vector<1x32xf32>
    %148 = vector.shape_cast %147 : vector<1x32xf32> to vector<32xf32>
    %cst_48 = arith.constant dense<0.000000e+00> : vector<8xf32>
    %149 = vector.multi_reduction <add>, %144, %cst_48 [1] : vector<8x32xf32> to vector<8xf32>
    %150 = vector.shape_cast %149 : vector<8xf32> to vector<8x1xf32>
    %cst_49 = arith.constant 3.200000e+01 : f32
    %151 = vector.broadcast %cst_49 : f32 to vector<8x1xf32>
    %152 = arith.divf %150, %151 : vector<8x1xf32>
    %153 = vector.broadcast %152 : vector<8x1xf32> to vector<8x32xf32>
    %154 = arith.subf %144, %153 : vector<8x32xf32>
    %155 = arith.mulf %154, %154 : vector<8x32xf32>
    %cst_50 = arith.constant dense<0.000000e+00> : vector<8xf32>
    %156 = vector.multi_reduction <add>, %155, %cst_50 [1] : vector<8x32xf32> to vector<8xf32>
    %157 = vector.shape_cast %156 : vector<8xf32> to vector<8x1xf32>
    %cst_51 = arith.constant 3.100000e+01 : f32
    %158 = vector.broadcast %cst_51 : f32 to vector<8x1xf32>
    %159 = arith.divf %157, %158 : vector<8x1xf32>
    %160 = math.sqrt %159 : vector<8x1xf32>
    %cst_52 = arith.constant 9.99999997E-7 : f32
    %161 = vector.broadcast %cst_52 : f32 to vector<8x1xf32>
    %162 = arith.addf %160, %161 : vector<8x1xf32>
    %163 = tpu.reciprocal %162 {approx = true} : vector<8x1xf32> -> vector<8x1xf32>
    %164 = vector.broadcast %152 : vector<8x1xf32> to vector<8x32xf32>
    %165 = arith.subf %144, %164 : vector<8x32xf32>
    %166 = vector.shape_cast %146 : vector<32xf32> to vector<1x32xf32>
    %167 = vector.broadcast %166 : vector<1x32xf32> to vector<8x32xf32>
    %168 = arith.mulf %167, %165 : vector<8x32xf32>
    %169 = vector.broadcast %163 : vector<8x1xf32> to vector<8x32xf32>
    %170 = arith.mulf %168, %169 : vector<8x32xf32>
    %171 = vector.shape_cast %148 : vector<32xf32> to vector<1x32xf32>
    %172 = vector.broadcast %171 : vector<1x32xf32> to vector<8x32xf32>
    %173 = arith.addf %170, %172 : vector<8x32xf32>
    %174 = arith.truncf %173 : vector<8x32xf32> to vector<8x32xbf16>
    %c0_53 = arith.constant 0 : index
    %c0_54 = arith.constant 0 : index
    %175 = vector.load %arg6[%c0_53, %c0_54] : memref<32x32xbf16, #tpu.memory_space<vmem>>, vector<32x32xbf16>
    %cst_55 = arith.constant dense<0.000000e+00> : vector<8x32xf32>
    %176 = tpu.matmul %174, %175, %cst_55 {dimension_numbers = #tpu.dot_dimension_numbers<[1], [0], [0], [1], [0, 0, 1, 1], [], []>} : vector<8x32xbf16>, vector<32x32xbf16>, vector<8x32xf32> -> vector<8x32xf32>
    %c0_56 = arith.constant 0 : index
    %c0_57 = arith.constant 0 : index
    %177 = vector.load %arg7[%c0_56, %c0_57] : memref<32x64xbf16, #tpu.memory_space<vmem>>, vector<32x64xbf16>
    %cst_58 = arith.constant dense<0.000000e+00> : vector<10x64xf32>
    %178 = tpu.matmul %3, %177, %cst_58 {dimension_numbers = #tpu.dot_dimension_numbers<[1], [0], [0], [1], [0, 0, 1, 1], [], []>} : vector<10x32xbf16>, vector<32x64xbf16>, vector<10x64xf32> -> vector<10x64xf32>
    %179 = vector.extract_strided_slice %178 {offsets = [0, 0], sizes = [10, 32], strides = [1, 1]} : vector<10x64xf32> to vector<10x32xf32>
    %180 = vector.extract_strided_slice %178 {offsets = [0, 32], sizes = [10, 32], strides = [1, 1]} : vector<10x64xf32> to vector<10x32xf32>
    %c0_59 = arith.constant 0 : index
    %c0_60 = arith.constant 0 : index
    %181 = vector.load %arg8[%c0_59, %c0_60] : memref<32x32xbf16, #tpu.memory_space<vmem>>, vector<32x32xbf16>
    %182 = arith.truncf %176 : vector<8x32xf32> to vector<8x32xbf16>
    %183 = arith.truncf %179 : vector<10x32xf32> to vector<10x32xbf16>
    %184 = arith.truncf %180 : vector<10x32xf32> to vector<10x32xbf16>
    %185 = vector.extract_strided_slice %182 {offsets = [0, 0], sizes = [8, 8], strides = [1, 1]} : vector<8x32xbf16> to vector<8x8xbf16>
    %186 = vector.extract_strided_slice %183 {offsets = [0, 0], sizes = [10, 8], strides = [1, 1]} : vector<10x32xbf16> to vector<10x8xbf16>
    %cst_61 = arith.constant dense<0.000000e+00> : vector<8x10xf32>
    %187 = tpu.matmul %185, %186, %cst_61 {dimension_numbers = #tpu.dot_dimension_numbers<[1], [1], [0], [0], [0, 0, 1, 0], [], []>} : vector<8x8xbf16>, vector<10x8xbf16>, vector<8x10xf32> -> vector<8x10xf32>
    %188 = vector.broadcast %5 : vector<1x10xf32> to vector<8x10xf32>
    %189 = arith.addf %187, %188 : vector<8x10xf32>
    %cst_62 = arith.constant dense<0xFF800000> : vector<8xf32>
    %190 = vector.multi_reduction <maximumf>, %189, %cst_62 [1] : vector<8x10xf32> to vector<8xf32>
    %191 = vector.shape_cast %190 : vector<8xf32> to vector<8x1xf32>
    %192 = vector.broadcast %191 : vector<8x1xf32> to vector<8x10xf32>
    %193 = arith.subf %189, %192 : vector<8x10xf32>
    %194 = math.exp %193 : vector<8x10xf32>
    %cst_63 = arith.constant dense<0.000000e+00> : vector<8xf32>
    %195 = vector.multi_reduction <add>, %194, %cst_63 [1] : vector<8x10xf32> to vector<8xf32>
    %196 = vector.shape_cast %195 : vector<8xf32> to vector<8x1xf32>
    %197 = tpu.reciprocal %196 {approx = true} : vector<8x1xf32> -> vector<8x1xf32>
    %198 = vector.broadcast %197 : vector<8x1xf32> to vector<8x10xf32>
    %199 = arith.mulf %194, %198 : vector<8x10xf32>
    %200 = arith.truncf %199 : vector<8x10xf32> to vector<8x10xbf16>
    %201 = vector.extract_strided_slice %184 {offsets = [0, 0], sizes = [10, 8], strides = [1, 1]} : vector<10x32xbf16> to vector<10x8xbf16>
    %cst_64 = arith.constant dense<0.000000e+00> : vector<8x8xf32>
    %202 = tpu.matmul %200, %201, %cst_64 {dimension_numbers = #tpu.dot_dimension_numbers<[1], [0], [0], [1], [0, 0, 1, 1], [], []>} : vector<8x10xbf16>, vector<10x8xbf16>, vector<8x8xf32> -> vector<8x8xf32>
    %203 = arith.truncf %202 : vector<8x8xf32> to vector<8x8xbf16>
    %204 = vector.extract_strided_slice %181 {offsets = [0, 0], sizes = [8, 32], strides = [1, 1]} : vector<32x32xbf16> to vector<8x32xbf16>
    %cst_65 = arith.constant dense<0.000000e+00> : vector<8x32xf32>
    %205 = tpu.matmul %203, %204, %cst_65 {dimension_numbers = #tpu.dot_dimension_numbers<[1], [0], [0], [1], [0, 0, 1, 1], [], []>} : vector<8x8xbf16>, vector<8x32xbf16>, vector<8x32xf32> -> vector<8x32xf32>
    %206 = vector.extract_strided_slice %182 {offsets = [0, 8], sizes = [8, 8], strides = [1, 1]} : vector<8x32xbf16> to vector<8x8xbf16>
    %207 = vector.extract_strided_slice %183 {offsets = [0, 8], sizes = [10, 8], strides = [1, 1]} : vector<10x32xbf16> to vector<10x8xbf16>
    %cst_66 = arith.constant dense<0.000000e+00> : vector<8x10xf32>
    %208 = tpu.matmul %206, %207, %cst_66 {dimension_numbers = #tpu.dot_dimension_numbers<[1], [1], [0], [0], [0, 0, 1, 0], [], []>} : vector<8x8xbf16>, vector<10x8xbf16>, vector<8x10xf32> -> vector<8x10xf32>
    %209 = vector.broadcast %5 : vector<1x10xf32> to vector<8x10xf32>
    %210 = arith.addf %208, %209 : vector<8x10xf32>
    %cst_67 = arith.constant dense<0xFF800000> : vector<8xf32>
    %211 = vector.multi_reduction <maximumf>, %210, %cst_67 [1] : vector<8x10xf32> to vector<8xf32>
    %212 = vector.shape_cast %211 : vector<8xf32> to vector<8x1xf32>
    %213 = vector.broadcast %212 : vector<8x1xf32> to vector<8x10xf32>
    %214 = arith.subf %210, %213 : vector<8x10xf32>
    %215 = math.exp %214 : vector<8x10xf32>
    %cst_68 = arith.constant dense<0.000000e+00> : vector<8xf32>
    %216 = vector.multi_reduction <add>, %215, %cst_68 [1] : vector<8x10xf32> to vector<8xf32>
    %217 = vector.shape_cast %216 : vector<8xf32> to vector<8x1xf32>
    %218 = tpu.reciprocal %217 {approx = true} : vector<8x1xf32> -> vector<8x1xf32>
    %219 = vector.broadcast %218 : vector<8x1xf32> to vector<8x10xf32>
    %220 = arith.mulf %215, %219 : vector<8x10xf32>
    %221 = arith.truncf %220 : vector<8x10xf32> to vector<8x10xbf16>
    %222 = vector.extract_strided_slice %184 {offsets = [0, 8], sizes = [10, 8], strides = [1, 1]} : vector<10x32xbf16> to vector<10x8xbf16>
    %cst_69 = arith.constant dense<0.000000e+00> : vector<8x8xf32>
    %223 = tpu.matmul %221, %222, %cst_69 {dimension_numbers = #tpu.dot_dimension_numbers<[1], [0], [0], [1], [0, 0, 1, 1], [], []>} : vector<8x10xbf16>, vector<10x8xbf16>, vector<8x8xf32> -> vector<8x8xf32>
    %224 = arith.truncf %223 : vector<8x8xf32> to vector<8x8xbf16>
    %225 = vector.extract_strided_slice %181 {offsets = [8, 0], sizes = [8, 32], strides = [1, 1]} : vector<32x32xbf16> to vector<8x32xbf16>
    %cst_70 = arith.constant dense<0.000000e+00> : vector<8x32xf32>
    %226 = tpu.matmul %224, %225, %cst_70 {dimension_numbers = #tpu.dot_dimension_numbers<[1], [0], [0], [1], [0, 0, 1, 1], [], []>} : vector<8x8xbf16>, vector<8x32xbf16>, vector<8x32xf32> -> vector<8x32xf32>
    %227 = arith.addf %205, %226 : vector<8x32xf32>
    %228 = vector.extract_strided_slice %182 {offsets = [0, 16], sizes = [8, 8], strides = [1, 1]} : vector<8x32xbf16> to vector<8x8xbf16>
    %229 = vector.extract_strided_slice %183 {offsets = [0, 16], sizes = [10, 8], strides = [1, 1]} : vector<10x32xbf16> to vector<10x8xbf16>
    %cst_71 = arith.constant dense<0.000000e+00> : vector<8x10xf32>
    %230 = tpu.matmul %228, %229, %cst_71 {dimension_numbers = #tpu.dot_dimension_numbers<[1], [1], [0], [0], [0, 0, 1, 0], [], []>} : vector<8x8xbf16>, vector<10x8xbf16>, vector<8x10xf32> -> vector<8x10xf32>
    %231 = vector.broadcast %5 : vector<1x10xf32> to vector<8x10xf32>
    %232 = arith.addf %230, %231 : vector<8x10xf32>
    %cst_72 = arith.constant dense<0xFF800000> : vector<8xf32>
    %233 = vector.multi_reduction <maximumf>, %232, %cst_72 [1] : vector<8x10xf32> to vector<8xf32>
    %234 = vector.shape_cast %233 : vector<8xf32> to vector<8x1xf32>
    %235 = vector.broadcast %234 : vector<8x1xf32> to vector<8x10xf32>
    %236 = arith.subf %232, %235 : vector<8x10xf32>
    %237 = math.exp %236 : vector<8x10xf32>
    %cst_73 = arith.constant dense<0.000000e+00> : vector<8xf32>
    %238 = vector.multi_reduction <add>, %237, %cst_73 [1] : vector<8x10xf32> to vector<8xf32>
    %239 = vector.shape_cast %238 : vector<8xf32> to vector<8x1xf32>
    %240 = tpu.reciprocal %239 {approx = true} : vector<8x1xf32> -> vector<8x1xf32>
    %241 = vector.broadcast %240 : vector<8x1xf32> to vector<8x10xf32>
    %242 = arith.mulf %237, %241 : vector<8x10xf32>
    %243 = arith.truncf %242 : vector<8x10xf32> to vector<8x10xbf16>
    %244 = vector.extract_strided_slice %184 {offsets = [0, 16], sizes = [10, 8], strides = [1, 1]} : vector<10x32xbf16> to vector<10x8xbf16>
    %cst_74 = arith.constant dense<0.000000e+00> : vector<8x8xf32>
    %245 = tpu.matmul %243, %244, %cst_74 {dimension_numbers = #tpu.dot_dimension_numbers<[1], [0], [0], [1], [0, 0, 1, 1], [], []>} : vector<8x10xbf16>, vector<10x8xbf16>, vector<8x8xf32> -> vector<8x8xf32>
    %246 = arith.truncf %245 : vector<8x8xf32> to vector<8x8xbf16>
    %247 = vector.extract_strided_slice %181 {offsets = [16, 0], sizes = [8, 32], strides = [1, 1]} : vector<32x32xbf16> to vector<8x32xbf16>
    %cst_75 = arith.constant dense<0.000000e+00> : vector<8x32xf32>
    %248 = tpu.matmul %246, %247, %cst_75 {dimension_numbers = #tpu.dot_dimension_numbers<[1], [0], [0], [1], [0, 0, 1, 1], [], []>} : vector<8x8xbf16>, vector<8x32xbf16>, vector<8x32xf32> -> vector<8x32xf32>
    %249 = arith.addf %227, %248 : vector<8x32xf32>
    %250 = vector.extract_strided_slice %182 {offsets = [0, 24], sizes = [8, 8], strides = [1, 1]} : vector<8x32xbf16> to vector<8x8xbf16>
    %251 = vector.extract_strided_slice %183 {offsets = [0, 24], sizes = [10, 8], strides = [1, 1]} : vector<10x32xbf16> to vector<10x8xbf16>
    %cst_76 = arith.constant dense<0.000000e+00> : vector<8x10xf32>
    %252 = tpu.matmul %250, %251, %cst_76 {dimension_numbers = #tpu.dot_dimension_numbers<[1], [1], [0], [0], [0, 0, 1, 0], [], []>} : vector<8x8xbf16>, vector<10x8xbf16>, vector<8x10xf32> -> vector<8x10xf32>
    %253 = vector.broadcast %5 : vector<1x10xf32> to vector<8x10xf32>
    %254 = arith.addf %252, %253 : vector<8x10xf32>
    %cst_77 = arith.constant dense<0xFF800000> : vector<8xf32>
    %255 = vector.multi_reduction <maximumf>, %254, %cst_77 [1] : vector<8x10xf32> to vector<8xf32>
    %256 = vector.shape_cast %255 : vector<8xf32> to vector<8x1xf32>
    %257 = vector.broadcast %256 : vector<8x1xf32> to vector<8x10xf32>
    %258 = arith.subf %254, %257 : vector<8x10xf32>
    %259 = math.exp %258 : vector<8x10xf32>
    %cst_78 = arith.constant dense<0.000000e+00> : vector<8xf32>
    %260 = vector.multi_reduction <add>, %259, %cst_78 [1] : vector<8x10xf32> to vector<8xf32>
    %261 = vector.shape_cast %260 : vector<8xf32> to vector<8x1xf32>
    %262 = tpu.reciprocal %261 {approx = true} : vector<8x1xf32> -> vector<8x1xf32>
    %263 = vector.broadcast %262 : vector<8x1xf32> to vector<8x10xf32>
    %264 = arith.mulf %259, %263 : vector<8x10xf32>
    %265 = arith.truncf %264 : vector<8x10xf32> to vector<8x10xbf16>
    %266 = vector.extract_strided_slice %184 {offsets = [0, 24], sizes = [10, 8], strides = [1, 1]} : vector<10x32xbf16> to vector<10x8xbf16>
    %cst_79 = arith.constant dense<0.000000e+00> : vector<8x8xf32>
    %267 = tpu.matmul %265, %266, %cst_79 {dimension_numbers = #tpu.dot_dimension_numbers<[1], [0], [0], [1], [0, 0, 1, 1], [], []>} : vector<8x10xbf16>, vector<10x8xbf16>, vector<8x8xf32> -> vector<8x8xf32>
    %268 = arith.truncf %267 : vector<8x8xf32> to vector<8x8xbf16>
    %269 = vector.extract_strided_slice %181 {offsets = [24, 0], sizes = [8, 32], strides = [1, 1]} : vector<32x32xbf16> to vector<8x32xbf16>
    %cst_80 = arith.constant dense<0.000000e+00> : vector<8x32xf32>
    %270 = tpu.matmul %268, %269, %cst_80 {dimension_numbers = #tpu.dot_dimension_numbers<[1], [0], [0], [1], [0, 0, 1, 1], [], []>} : vector<8x8xbf16>, vector<8x32xbf16>, vector<8x32xf32> -> vector<8x32xf32>
    %271 = arith.addf %249, %270 : vector<8x32xf32>
    %272 = arith.addf %144, %271 : vector<8x32xf32>
    %c2 = arith.constant 2 : index
    %c0_81 = arith.constant 0 : index
    %273 = vector.load %arg13[%c2, %c0_81] : memref<3x32xf32, #tpu.memory_space<vmem>>, vector<1x32xf32>
    %274 = vector.shape_cast %273 : vector<1x32xf32> to vector<32xf32>
    %c2_82 = arith.constant 2 : index
    %c0_83 = arith.constant 0 : index
    %275 = vector.load %arg14[%c2_82, %c0_83] : memref<3x32xf32, #tpu.memory_space<vmem>>, vector<1x32xf32>
    %276 = vector.shape_cast %275 : vector<1x32xf32> to vector<32xf32>
    %cst_84 = arith.constant dense<0.000000e+00> : vector<8xf32>
    %277 = vector.multi_reduction <add>, %272, %cst_84 [1] : vector<8x32xf32> to vector<8xf32>
    %278 = vector.shape_cast %277 : vector<8xf32> to vector<8x1xf32>
    %cst_85 = arith.constant 3.200000e+01 : f32
    %279 = vector.broadcast %cst_85 : f32 to vector<8x1xf32>
    %280 = arith.divf %278, %279 : vector<8x1xf32>
    %281 = vector.broadcast %280 : vector<8x1xf32> to vector<8x32xf32>
    %282 = arith.subf %272, %281 : vector<8x32xf32>
    %283 = arith.mulf %282, %282 : vector<8x32xf32>
    %cst_86 = arith.constant dense<0.000000e+00> : vector<8xf32>
    %284 = vector.multi_reduction <add>, %283, %cst_86 [1] : vector<8x32xf32> to vector<8xf32>
    %285 = vector.shape_cast %284 : vector<8xf32> to vector<8x1xf32>
    %cst_87 = arith.constant 3.100000e+01 : f32
    %286 = vector.broadcast %cst_87 : f32 to vector<8x1xf32>
    %287 = arith.divf %285, %286 : vector<8x1xf32>
    %288 = math.sqrt %287 : vector<8x1xf32>
    %cst_88 = arith.constant 9.99999997E-7 : f32
    %289 = vector.broadcast %cst_88 : f32 to vector<8x1xf32>
    %290 = arith.addf %288, %289 : vector<8x1xf32>
    %291 = tpu.reciprocal %290 {approx = true} : vector<8x1xf32> -> vector<8x1xf32>
    %292 = vector.broadcast %280 : vector<8x1xf32> to vector<8x32xf32>
    %293 = arith.subf %272, %292 : vector<8x32xf32>
    %294 = vector.shape_cast %274 : vector<32xf32> to vector<1x32xf32>
    %295 = vector.broadcast %294 : vector<1x32xf32> to vector<8x32xf32>
    %296 = arith.mulf %295, %293 : vector<8x32xf32>
    %297 = vector.broadcast %291 : vector<8x1xf32> to vector<8x32xf32>
    %298 = arith.mulf %296, %297 : vector<8x32xf32>
    %299 = vector.shape_cast %276 : vector<32xf32> to vector<1x32xf32>
    %300 = vector.broadcast %299 : vector<1x32xf32> to vector<8x32xf32>
    %301 = arith.addf %298, %300 : vector<8x32xf32>
    %302 = arith.truncf %301 : vector<8x32xf32> to vector<8x32xbf16>
    %c0_89 = arith.constant 0 : index
    %c0_90 = arith.constant 0 : index
    %303 = vector.load %arg9[%c0_89, %c0_90] : memref<32x64xbf16, #tpu.memory_space<vmem>>, vector<32x64xbf16>
    %cst_91 = arith.constant dense<0.000000e+00> : vector<8x64xf32>
    %304 = tpu.matmul %302, %303, %cst_91 {dimension_numbers = #tpu.dot_dimension_numbers<[1], [0], [0], [1], [0, 0, 1, 1], [], []>} : vector<8x32xbf16>, vector<32x64xbf16>, vector<8x64xf32> -> vector<8x64xf32>
    %c0_92 = arith.constant 0 : index
    %c0_93 = arith.constant 0 : index
    %305 = vector.load %arg10[%c0_92, %c0_93] : memref<1x64xf32, #tpu.memory_space<vmem>>, vector<1x64xf32>
    %306 = vector.shape_cast %305 : vector<1x64xf32> to vector<64xf32>
    %307 = vector.shape_cast %306 : vector<64xf32> to vector<1x64xf32>
    %308 = vector.broadcast %307 : vector<1x64xf32> to vector<8x64xf32>
    %309 = arith.addf %304, %308 : vector<8x64xf32>
    %cst_94 = arith.constant 0.000000e+00 : f32
    %310 = vector.broadcast %cst_94 : f32 to vector<8x64xf32>
    %311 = arith.maximumf %309, %310 : vector<8x64xf32>
    %312 = arith.truncf %311 : vector<8x64xf32> to vector<8x64xbf16>
    %c0_95 = arith.constant 0 : index
    %c0_96 = arith.constant 0 : index
    %313 = vector.load %arg11[%c0_95, %c0_96] : memref<64x32xbf16, #tpu.memory_space<vmem>>, vector<64x32xbf16>
    %cst_97 = arith.constant dense<0.000000e+00> : vector<8x32xf32>
    %314 = tpu.matmul %312, %313, %cst_97 {dimension_numbers = #tpu.dot_dimension_numbers<[1], [0], [0], [1], [0, 0, 1, 1], [], []>} : vector<8x64xbf16>, vector<64x32xbf16>, vector<8x32xf32> -> vector<8x32xf32>
    %c0_98 = arith.constant 0 : index
    %c0_99 = arith.constant 0 : index
    %315 = vector.load %arg12[%c0_98, %c0_99] : memref<1x32xf32, #tpu.memory_space<vmem>>, vector<1x32xf32>
    %316 = vector.shape_cast %315 : vector<1x32xf32> to vector<32xf32>
    %317 = vector.shape_cast %316 : vector<32xf32> to vector<1x32xf32>
    %318 = vector.broadcast %317 : vector<1x32xf32> to vector<8x32xf32>
    %319 = arith.addf %314, %318 : vector<8x32xf32>
    %320 = arith.addf %272, %319 : vector<8x32xf32>
    %c0_100 = arith.constant 0 : index
    %c0_101 = arith.constant 0 : index
    %c0_102 = arith.constant 0 : index
    %321 = vector.load %arg15[%c0_100, %c0_101, %c0_102] : memref<1x8x32xf32, #tpu.memory_space<vmem>>, vector<1x8x32xf32>
    %322 = vector.shape_cast %321 : vector<1x8x32xf32> to vector<8x32xf32>
    %323 = vector.shape_cast %320 : vector<8x32xf32> to vector<1x8x32xf32>
    tpu.vector_store %arg15[%c0_100, %c0_101, %c0_102], %323 {strides = array<i32>} : memref<1x8x32xf32, #tpu.memory_space<vmem>>, vector<1x8x32xf32>,
    return
  }
  func.func @transform_0(%arg0: i32) -> (i32, i32, i32) {
    %c0_i32 = arith.constant 0 : i32
    %c0_i32_0 = arith.constant 0 : i32
    %c0_i32_1 = arith.constant 0 : i32
    return %arg0, %c0_i32, %c0_i32_0 : i32, i32, i32
  }
  func.func @transform_1(%arg0: i32) -> (i32, i32, i32) {
    %c0_i32 = arith.constant 0 : i32
    %c0_i32_0 = arith.constant 0 : i32
    %c0_i32_1 = arith.constant 0 : i32
    return %arg0, %c0_i32, %c0_i32_0 : i32, i32, i32
  }
  func.func @transform_2(%arg0: i32) -> (i32, i32, i32) {
    %c0_i32 = arith.constant 0 : i32
    %c0_i32_0 = arith.constant 0 : i32
    %c0_i32_1 = arith.constant 0 : i32
    return %arg0, %c0_i32, %c0_i32_0 : i32, i32, i32
  }
  func.func @transform_3(%arg0: i32) -> (i32, i32) {
    %c0_i32 = arith.constant 0 : i32
    %c0_i32_0 = arith.constant 0 : i32
    %c0_i32_1 = arith.constant 0 : i32
    return %c0_i32, %c0_i32_0 : i32, i32
  }
  func.func @transform_4(%arg0: i32) -> (i32, i32) {
    %c0_i32 = arith.constant 0 : i32
    %c0_i32_0 = arith.constant 0 : i32
    %c0_i32_1 = arith.constant 0 : i32
    return %c0_i32, %c0_i32_0 : i32, i32
  }
  func.func @transform_5(%arg0: i32) -> (i32, i32) {
    %c0_i32 = arith.constant 0 : i32
    %c0_i32_0 = arith.constant 0 : i32
    %c0_i32_1 = arith.constant 0 : i32
    return %c0_i32, %c0_i32_0 : i32, i32
  }
  func.func @transform_6(%arg0: i32) -> (i32, i32) {
    %c0_i32 = arith.constant 0 : i32
    %c0_i32_0 = arith.constant 0 : i32
    %c0_i32_1 = arith.constant 0 : i32
    return %c0_i32, %c0_i32_0 : i32, i32
  }
  func.func @transform_7(%arg0: i32) -> (i32, i32) {
    %c0_i32 = arith.constant 0 : i32
    %c0_i32_0 = arith.constant 0 : i32
    %c0_i32_1 = arith.constant 0 : i32
    return %c0_i32, %c0_i32_0 : i32, i32
  }
  func.func @transform_8(%arg0: i32) -> (i32, i32) {
    %c0_i32 = arith.constant 0 : i32
    %c0_i32_0 = arith.constant 0 : i32
    %c0_i32_1 = arith.constant 0 : i32
    return %c0_i32, %c0_i32_0 : i32, i32
  }
  func.func @transform_9(%arg0: i32) -> (i32, i32) {
    %c0_i32 = arith.constant 0 : i32
    %c0_i32_0 = arith.constant 0 : i32
    %c0_i32_1 = arith.constant 0 : i32
    return %c0_i32, %c0_i32_0 : i32, i32
  }
  func.func @transform_10(%arg0: i32) -> (i32, i32) {
    %c0_i32 = arith.constant 0 : i32
    %c0_i32_0 = arith.constant 0 : i32
    %c0_i32_1 = arith.constant 0 : i32
    return %c0_i32, %c0_i32_0 : i32, i32
  }
  func.func @transform_11(%arg0: i32) -> (i32, i32) {
    %c0_i32 = arith.constant 0 : i32
    %c0_i32_0 = arith.constant 0 : i32
    %c0_i32_1 = arith.constant 0 : i32
    return %c0_i32, %c0_i32_0 : i32, i32
  }
  func.func @transform_12(%arg0: i32) -> (i32, i32) {
    %c0_i32 = arith.constant 0 : i32
    %c0_i32_0 = arith.constant 0 : i32
    %c0_i32_1 = arith.constant 0 : i32
    return %c0_i32, %c0_i32_0 : i32, i32
  }
  func.func @transform_13(%arg0: i32) -> (i32, i32) {
    %c0_i32 = arith.constant 0 : i32
    %c0_i32_0 = arith.constant 0 : i32
    %c0_i32_1 = arith.constant 0 : i32
    return %c0_i32, %c0_i32_0 : i32, i32
  }
  func.func @transform_14(%arg0: i32) -> (i32, i32, i32) {
    %c0_i32 = arith.constant 0 : i32
    %c0_i32_0 = arith.constant 0 : i32
    %c0_i32_1 = arith.constant 0 : i32
    return %arg0, %c0_i32, %c0_i32_0 : i32, i32, i32
  }
}

module attributes {stable_mosaic.version = 11 : i64} {
  func.func @kernel(%arg0: i32, %arg1: memref<1x8x32xf32, #tpu.memory_space<vmem>>, %arg2: memref<1x10x32xbf16, #tpu.memory_space<vmem>>, %arg3: memref<1x1x10xf32, #tpu.memory_space<vmem>>, %arg4: memref<32x96xbf16, #tpu.memory_space<vmem>>, %arg5: memref<32x32xbf16, #tpu.memory_space<vmem>>, %arg6: memref<32x32xbf16, #tpu.memory_space<vmem>>, %arg7: memref<32x64xbf16, #tpu.memory_space<vmem>>, %arg8: memref<32x32xbf16, #tpu.memory_space<vmem>>, %arg9: memref<32x64xbf16, #tpu.memory_space<vmem>>, %arg10: memref<1x64xf32, #tpu.memory_space<vmem>>, %arg11: memref<64x32xbf16, #tpu.memory_space<vmem>>, %arg12: memref<1x32xf32, #tpu.memory_space<vmem>>, %arg13: memref<3x32xf32, #tpu.memory_space<vmem>>, %arg14: memref<3x32xf32, #tpu.memory_space<vmem>>, %arg15: memref<1x8x32xf32, #tpu.memory_space<vmem>>) attributes {dimension_semantics = [#tpu.dimension_semantics<parallel>], iteration_bounds = array<i64: 2>, scalar_prefetch = 0 : i64, scratch_operands = 0 : i64, tpu.core_type = #tpu.core_type<tc>, window_params = [{transform_indices = @transform_0, window_bounds = array<i64: 1, 8, 32>}, {transform_indices = @transform_1, window_bounds = array<i64: 1, 10, 32>}, {transform_indices = @transform_2, window_bounds = array<i64: 1, 1, 10>}, {pipeline_mode = #tpu.pipeline_mode<synchronous>, transform_indices = @transform_3, window_bounds = array<i64: 32, 96>}, {pipeline_mode = #tpu.pipeline_mode<synchronous>, transform_indices = @transform_4, window_bounds = array<i64: 32, 32>}, {pipeline_mode = #tpu.pipeline_mode<synchronous>, transform_indices = @transform_5, window_bounds = array<i64: 32, 32>}, {pipeline_mode = #tpu.pipeline_mode<synchronous>, transform_indices = @transform_6, window_bounds = array<i64: 32, 64>}, {pipeline_mode = #tpu.pipeline_mode<synchronous>, transform_indices = @transform_7, window_bounds = array<i64: 32, 32>}, {pipeline_mode = #tpu.pipeline_mode<synchronous>, transform_indices = @transform_8, window_bounds = array<i64: 32, 64>}, {pipeline_mode = #tpu.pipeline_mode<synchronous>, transform_indices = @transform_9, window_bounds = array<i64: 1, 64>}, {pipeline_mode = #tpu.pipeline_mode<synchronous>, transform_indices = @transform_10, window_bounds = array<i64: 64, 32>}, {pipeline_mode = #tpu.pipeline_mode<synchronous>, transform_indices = @transform_11, window_bounds = array<i64: 1, 32>}, {pipeline_mode = #tpu.pipeline_mode<synchronous>, transform_indices = @transform_12, window_bounds = array<i64: 3, 32>}, {pipeline_mode = #tpu.pipeline_mode<synchronous>, transform_indices = @transform_13, window_bounds = array<i64: 3, 32>}, {transform_indices = @transform_14, window_bounds = array<i64: 1, 8, 32>}]} {
    %c0 = arith.constant 0 : index
    %c0_0 = arith.constant 0 : index
    %c0_1 = arith.constant 0 : index
    %0 = vector.load %arg1[%c0, %c0_0, %c0_1] : memref<1x8x32xf32, #tpu.memory_space<vmem>>, vector<1x8x32xf32>
    %1 = vector.shape_cast %0 : vector<1x8x32xf32> to vector<8x32xf32>
    %c0_2 = arith.constant 0 : index
    %c0_3 = arith.constant 0 : index
    %c0_4 = arith.constant 0 : index
    %2 = vector.load %arg2[%c0_2, %c0_3, %c0_4] : memref<1x10x32xbf16, #tpu.memory_space<vmem>>, vector<1x10x32xbf16>
    %3 = vector.shape_cast %2 : vector<1x10x32xbf16> to vector<10x32xbf16>
    %c0_5 = arith.constant 0 : index
    %c0_6 = arith.constant 0 : index
    %c0_7 = arith.constant 0 : index
    %4 = vector.load %arg3[%c0_5, %c0_6, %c0_7] : memref<1x1x10xf32, #tpu.memory_space<vmem>>, vector<1x1x10xf32>
    %5 = vector.shape_cast %4 : vector<1x1x10xf32> to vector<1x10xf32>
    %c0_8 = arith.constant 0 : index
    %c0_9 = arith.constant 0 : index
    %6 = vector.load %arg13[%c0_8, %c0_9] : memref<3x32xf32, #tpu.memory_space<vmem>>, vector<1x32xf32>
    %7 = vector.shape_cast %6 : vector<1x32xf32> to vector<32xf32>
    %c0_10 = arith.constant 0 : index
    %c0_11 = arith.constant 0 : index
    %8 = vector.load %arg14[%c0_10, %c0_11] : memref<3x32xf32, #tpu.memory_space<vmem>>, vector<1x32xf32>
    %9 = vector.shape_cast %8 : vector<1x32xf32> to vector<32xf32>
    %cst = arith.constant dense<0.000000e+00> : vector<8xf32>
    %10 = vector.multi_reduction <add>, %1, %cst [1] : vector<8x32xf32> to vector<8xf32>
    %11 = vector.shape_cast %10 : vector<8xf32> to vector<8x1xf32>
    %cst_12 = arith.constant 3.200000e+01 : f32
    %12 = vector.broadcast %cst_12 : f32 to vector<8x1xf32>
    %13 = arith.divf %11, %12 : vector<8x1xf32>
    %14 = vector.broadcast %13 : vector<8x1xf32> to vector<8x32xf32>
    %15 = arith.subf %1, %14 : vector<8x32xf32>
    %16 = arith.mulf %15, %15 : vector<8x32xf32>
    %cst_13 = arith.constant dense<0.000000e+00> : vector<8xf32>
    %17 = vector.multi_reduction <add>, %16, %cst_13 [1] : vector<8x32xf32> to vector<8xf32>
    %18 = vector.shape_cast %17 : vector<8xf32> to vector<8x1xf32>
    %cst_14 = arith.constant 3.100000e+01 : f32
    %19 = vector.broadcast %cst_14 : f32 to vector<8x1xf32>
    %20 = arith.divf %18, %19 : vector<8x1xf32>
    %21 = math.sqrt %20 : vector<8x1xf32>
    %cst_15 = arith.constant 9.99999997E-7 : f32
    %22 = vector.broadcast %cst_15 : f32 to vector<8x1xf32>
    %23 = arith.addf %21, %22 : vector<8x1xf32>
    %24 = tpu.reciprocal %23 {approx = true} : vector<8x1xf32> -> vector<8x1xf32>
    %25 = vector.broadcast %13 : vector<8x1xf32> to vector<8x32xf32>
    %26 = arith.subf %1, %25 : vector<8x32xf32>
    %27 = vector.shape_cast %7 : vector<32xf32> to vector<1x32xf32>
    %28 = vector.broadcast %27 : vector<1x32xf32> to vector<8x32xf32>
    %29 = arith.mulf %28, %26 : vector<8x32xf32>
    %30 = vector.broadcast %24 : vector<8x1xf32> to vector<8x32xf32>
    %31 = arith.mulf %29, %30 : vector<8x32xf32>
    %32 = vector.shape_cast %9 : vector<32xf32> to vector<1x32xf32>
    %33 = vector.broadcast %32 : vector<1x32xf32> to vector<8x32xf32>
    %34 = arith.addf %31, %33 : vector<8x32xf32>
    %35 = arith.truncf %34 : vector<8x32xf32> to vector<8x32xbf16>
    %c0_16 = arith.constant 0 : index
    %c0_17 = arith.constant 0 : index
    %36 = vector.load %arg4[%c0_16, %c0_17] : memref<32x96xbf16, #tpu.memory_space<vmem>>, vector<32x96xbf16>
    %cst_18 = arith.constant dense<0.000000e+00> : vector<8x96xf32>
    %37 = tpu.matmul %35, %36, %cst_18 {dimension_numbers = #tpu.dot_dimension_numbers<[1], [0], [0], [1], [0, 0, 1, 1], [], []>} : vector<8x32xbf16>, vector<32x96xbf16>, vector<8x96xf32> -> vector<8x96xf32>
    %38 = vector.extract_strided_slice %37 {offsets = [0, 0], sizes = [8, 32], strides = [1, 1]} : vector<8x96xf32> to vector<8x32xf32>
    %39 = vector.extract_strided_slice %37 {offsets = [0, 32], sizes = [8, 32], strides = [1, 1]} : vector<8x96xf32> to vector<8x32xf32>
    %40 = vector.extract_strided_slice %37 {offsets = [0, 64], sizes = [8, 32], strides = [1, 1]} : vector<8x96xf32> to vector<8x32xf32>
    %c0_19 = arith.constant 0 : index
    %c0_20 = arith.constant 0 : index
    %41 = vector.load %arg5[%c0_19, %c0_20] : memref<32x32xbf16, #tpu.memory_space<vmem>>, vector<32x32xbf16>
    %42 = arith.truncf %38 : vector<8x32xf32> to vector<8x32xbf16>
    %43 = arith.truncf %39 : vector<8x32xf32> to vector<8x32xbf16>
    %44 = arith.truncf %40 : vector<8x32xf32> to vector<8x32xbf16>
    %45 = vector.extract_strided_slice %42 {offsets = [0, 0], sizes = [8, 8], strides = [1, 1]} : vector<8x32xbf16> to vector<8x8xbf16>
    %46 = vector.extract_strided_slice %43 {offsets = [0, 0], sizes = [8, 8], strides = [1, 1]} : vector<8x32xbf16> to vector<8x8xbf16>
    %cst_21 = arith.constant dense<0.000000e+00> : vector<8x8xf32>
    %47 = tpu.matmul %45, %46, %cst_21 {dimension_numbers = #tpu.dot_dimension_numbers<[1], [1], [0], [0], [0, 0, 1, 0], [], []>} : vector<8x8xbf16>, vector<8x8xbf16>, vector<8x8xf32> -> vector<8x8xf32>
    %48 = tpu.iota {dimensions = array<i32: 0>} : vector<8x8xi32>
    %49 = tpu.iota {dimensions = array<i32: 1>} : vector<8x8xi32>
    %50 = arith.cmpi sge, %48, %49 : vector<8x8xi32>
    %cst_22 = arith.constant -1.000000e+09 : f32
    %51 = vector.broadcast %cst_22 : f32 to vector<8x8xf32>
    %52 = arith.select %50, %47, %51 : vector<8x8xi1>, vector<8x8xf32>
    %cst_23 = arith.constant dense<0xFF800000> : vector<8xf32>
    %53 = vector.multi_reduction <maximumf>, %52, %cst_23 [1] : vector<8x8xf32> to vector<8xf32>
    %54 = vector.shape_cast %53 : vector<8xf32> to vector<8x1xf32>
    %55 = vector.broadcast %54 : vector<8x1xf32> to vector<8x8xf32>
    %56 = arith.subf %52, %55 : vector<8x8xf32>
    %57 = math.exp %56 : vector<8x8xf32>
    %cst_24 = arith.constant dense<0.000000e+00> : vector<8xf32>
    %58 = vector.multi_reduction <add>, %57, %cst_24 [1] : vector<8x8xf32> to vector<8xf32>
    %59 = vector.shape_cast %58 : vector<8xf32> to vector<8x1xf32>
    %60 = tpu.reciprocal %59 {approx = true} : vector<8x1xf32> -> vector<8x1xf32>
    %61 = vector.broadcast %60 : vector<8x1xf32> to vector<8x8xf32>
    %62 = arith.mulf %57, %61 : vector<8x8xf32>
    %63 = arith.truncf %62 : vector<8x8xf32> to vector<8x8xbf16>
    %64 = vector.extract_strided_slice %44 {offsets = [0, 0], sizes = [8, 8], strides = [1, 1]} : vector<8x32xbf16> to vector<8x8xbf16>
    %cst_25 = arith.constant dense<0.000000e+00> : vector<8x8xf32>
    %65 = tpu.matmul %63, %64, %cst_25 {dimension_numbers = #tpu.dot_dimension_numbers<[1], [0], [0], [1], [0, 0, 1, 1], [], []>} : vector<8x8xbf16>, vector<8x8xbf16>, vector<8x8xf32> -> vector<8x8xf32>
    %66 = arith.truncf %65 : vector<8x8xf32> to vector<8x8xbf16>
    %67 = vector.extract_strided_slice %41 {offsets = [0, 0], sizes = [8, 32], strides = [1, 1]} : vector<32x32xbf16> to vector<8x32xbf16>
    %cst_26 = arith.constant dense<0.000000e+00> : vector<8x32xf32>
    %68 = tpu.matmul %66, %67, %cst_26 {dimension_numbers = #tpu.dot_dimension_numbers<[1], [0], [0], [1], [0, 0, 1, 1], [], []>} : vector<8x8xbf16>, vector<8x32xbf16>, vector<8x32xf32> -> vector<8x32xf32>
    %69 = vector.extract_strided_slice %42 {offsets = [0, 8], sizes = [8, 8], strides = [1, 1]} : vector<8x32xbf16> to vector<8x8xbf16>
    %70 = vector.extract_strided_slice %43 {offsets = [0, 8], sizes = [8, 8], strides = [1, 1]} : vector<8x32xbf16> to vector<8x8xbf16>
    %cst_27 = arith.constant dense<0.000000e+00> : vector<8x8xf32>
    %71 = tpu.matmul %69, %70, %cst_27 {dimension_numbers = #tpu.dot_dimension_numbers<[1], [1], [0], [0], [0, 0, 1, 0], [], []>} : vector<8x8xbf16>, vector<8x8xbf16>, vector<8x8xf32> -> vector<8x8xf32>
    %72 = tpu.iota {dimensions = array<i32: 0>} : vector<8x8xi32>
    %73 = tpu.iota {dimensions = array<i32: 1>} : vector<8x8xi32>
    %74 = arith.cmpi sge, %72, %73 : vector<8x8xi32>
    %cst_28 = arith.constant -1.000000e+09 : f32
    %75 = vector.broadcast %cst_28 : f32 to vector<8x8xf32>
    %76 = arith.select %74, %71, %75 : vector<8x8xi1>, vector<8x8xf32>
    %cst_29 = arith.constant dense<0xFF800000> : vector<8xf32>
    %77 = vector.multi_reduction <maximumf>, %76, %cst_29 [1] : vector<8x8xf32> to vector<8xf32>
    %78 = vector.shape_cast %77 : vector<8xf32> to vector<8x1xf32>
    %79 = vector.broadcast %78 : vector<8x1xf32> to vector<8x8xf32>
    %80 = arith.subf %76, %79 : vector<8x8xf32>
    %81 = math.exp %80 : vector<8x8xf32>
    %cst_30 = arith.constant dense<0.000000e+00> : vector<8xf32>
    %82 = vector.multi_reduction <add>, %81, %cst_30 [1] : vector<8x8xf32> to vector<8xf32>
    %83 = vector.shape_cast %82 : vector<8xf32> to vector<8x1xf32>
    %84 = tpu.reciprocal %83 {approx = true} : vector<8x1xf32> -> vector<8x1xf32>
    %85 = vector.broadcast %84 : vector<8x1xf32> to vector<8x8xf32>
    %86 = arith.mulf %81, %85 : vector<8x8xf32>
    %87 = arith.truncf %86 : vector<8x8xf32> to vector<8x8xbf16>
    %88 = vector.extract_strided_slice %44 {offsets = [0, 8], sizes = [8, 8], strides = [1, 1]} : vector<8x32xbf16> to vector<8x8xbf16>
    %cst_31 = arith.constant dense<0.000000e+00> : vector<8x8xf32>
    %89 = tpu.matmul %87, %88, %cst_31 {dimension_numbers = #tpu.dot_dimension_numbers<[1], [0], [0], [1], [0, 0, 1, 1], [], []>} : vector<8x8xbf16>, vector<8x8xbf16>, vector<8x8xf32> -> vector<8x8xf32>
    %90 = arith.truncf %89 : vector<8x8xf32> to vector<8x8xbf16>
    %91 = vector.extract_strided_slice %41 {offsets = [8, 0], sizes = [8, 32], strides = [1, 1]} : vector<32x32xbf16> to vector<8x32xbf16>
    %cst_32 = arith.constant dense<0.000000e+00> : vector<8x32xf32>
    %92 = tpu.matmul %90, %91, %cst_32 {dimension_numbers = #tpu.dot_dimension_numbers<[1], [0], [0], [1], [0, 0, 1, 1], [], []>} : vector<8x8xbf16>, vector<8x32xbf16>, vector<8x32xf32> -> vector<8x32xf32>
    %93 = arith.addf %68, %92 : vector<8x32xf32>
    %94 = vector.extract_strided_slice %42 {offsets = [0, 16], sizes = [8, 8], strides = [1, 1]} : vector<8x32xbf16> to vector<8x8xbf16>
    %95 = vector.extract_strided_slice %43 {offsets = [0, 16], sizes = [8, 8], strides = [1, 1]} : vector<8x32xbf16> to vector<8x8xbf16>
    %cst_33 = arith.constant dense<0.000000e+00> : vector<8x8xf32>
    %96 = tpu.matmul %94, %95, %cst_33 {dimension_numbers = #tpu.dot_dimension_numbers<[1], [1], [0], [0], [0, 0, 1, 0], [], []>} : vector<8x8xbf16>, vector<8x8xbf16>, vector<8x8xf32> -> vector<8x8xf32>
    %97 = tpu.iota {dimensions = array<i32: 0>} : vector<8x8xi32>
    %98 = tpu.iota {dimensions = array<i32: 1>} : vector<8x8xi32>
    %99 = arith.cmpi sge, %97, %98 : vector<8x8xi32>
    %cst_34 = arith.constant -1.000000e+09 : f32
    %100 = vector.broadcast %cst_34 : f32 to vector<8x8xf32>
    %101 = arith.select %99, %96, %100 : vector<8x8xi1>, vector<8x8xf32>
    %cst_35 = arith.constant dense<0xFF800000> : vector<8xf32>
    %102 = vector.multi_reduction <maximumf>, %101, %cst_35 [1] : vector<8x8xf32> to vector<8xf32>
    %103 = vector.shape_cast %102 : vector<8xf32> to vector<8x1xf32>
    %104 = vector.broadcast %103 : vector<8x1xf32> to vector<8x8xf32>
    %105 = arith.subf %101, %104 : vector<8x8xf32>
    %106 = math.exp %105 : vector<8x8xf32>
    %cst_36 = arith.constant dense<0.000000e+00> : vector<8xf32>
    %107 = vector.multi_reduction <add>, %106, %cst_36 [1] : vector<8x8xf32> to vector<8xf32>
    %108 = vector.shape_cast %107 : vector<8xf32> to vector<8x1xf32>
    %109 = tpu.reciprocal %108 {approx = true} : vector<8x1xf32> -> vector<8x1xf32>
    %110 = vector.broadcast %109 : vector<8x1xf32> to vector<8x8xf32>
    %111 = arith.mulf %106, %110 : vector<8x8xf32>
    %112 = arith.truncf %111 : vector<8x8xf32> to vector<8x8xbf16>
    %113 = vector.extract_strided_slice %44 {offsets = [0, 16], sizes = [8, 8], strides = [1, 1]} : vector<8x32xbf16> to vector<8x8xbf16>
    %cst_37 = arith.constant dense<0.000000e+00> : vector<8x8xf32>
    %114 = tpu.matmul %112, %113, %cst_37 {dimension_numbers = #tpu.dot_dimension_numbers<[1], [0], [0], [1], [0, 0, 1, 1], [], []>} : vector<8x8xbf16>, vector<8x8xbf16>, vector<8x8xf32> -> vector<8x8xf32>
    %115 = arith.truncf %114 : vector<8x8xf32> to vector<8x8xbf16>
    %116 = vector.extract_strided_slice %41 {offsets = [16, 0], sizes = [8, 32], strides = [1, 1]} : vector<32x32xbf16> to vector<8x32xbf16>
    %cst_38 = arith.constant dense<0.000000e+00> : vector<8x32xf32>
    %117 = tpu.matmul %115, %116, %cst_38 {dimension_numbers = #tpu.dot_dimension_numbers<[1], [0], [0], [1], [0, 0, 1, 1], [], []>} : vector<8x8xbf16>, vector<8x32xbf16>, vector<8x32xf32> -> vector<8x32xf32>
    %118 = arith.addf %93, %117 : vector<8x32xf32>
    %119 = vector.extract_strided_slice %42 {offsets = [0, 24], sizes = [8, 8], strides = [1, 1]} : vector<8x32xbf16> to vector<8x8xbf16>
    %120 = vector.extract_strided_slice %43 {offsets = [0, 24], sizes = [8, 8], strides = [1, 1]} : vector<8x32xbf16> to vector<8x8xbf16>
    %cst_39 = arith.constant dense<0.000000e+00> : vector<8x8xf32>
    %121 = tpu.matmul %119, %120, %cst_39 {dimension_numbers = #tpu.dot_dimension_numbers<[1], [1], [0], [0], [0, 0, 1, 0], [], []>} : vector<8x8xbf16>, vector<8x8xbf16>, vector<8x8xf32> -> vector<8x8xf32>
    %122 = tpu.iota {dimensions = array<i32: 0>} : vector<8x8xi32>
    %123 = tpu.iota {dimensions = array<i32: 1>} : vector<8x8xi32>
    %124 = arith.cmpi sge, %122, %123 : vector<8x8xi32>
    %cst_40 = arith.constant -1.000000e+09 : f32
    %125 = vector.broadcast %cst_40 : f32 to vector<8x8xf32>
    %126 = arith.select %124, %121, %125 : vector<8x8xi1>, vector<8x8xf32>
    %cst_41 = arith.constant dense<0xFF800000> : vector<8xf32>
    %127 = vector.multi_reduction <maximumf>, %126, %cst_41 [1] : vector<8x8xf32> to vector<8xf32>
    %128 = vector.shape_cast %127 : vector<8xf32> to vector<8x1xf32>
    %129 = vector.broadcast %128 : vector<8x1xf32> to vector<8x8xf32>
    %130 = arith.subf %126, %129 : vector<8x8xf32>
    %131 = math.exp %130 : vector<8x8xf32>
    %cst_42 = arith.constant dense<0.000000e+00> : vector<8xf32>
    %132 = vector.multi_reduction <add>, %131, %cst_42 [1] : vector<8x8xf32> to vector<8xf32>
    %133 = vector.shape_cast %132 : vector<8xf32> to vector<8x1xf32>
    %134 = tpu.reciprocal %133 {approx = true} : vector<8x1xf32> -> vector<8x1xf32>
    %135 = vector.broadcast %134 : vector<8x1xf32> to vector<8x8xf32>
    %136 = arith.mulf %131, %135 : vector<8x8xf32>
    %137 = arith.truncf %136 : vector<8x8xf32> to vector<8x8xbf16>
    %138 = vector.extract_strided_slice %44 {offsets = [0, 24], sizes = [8, 8], strides = [1, 1]} : vector<8x32xbf16> to vector<8x8xbf16>
    %cst_43 = arith.constant dense<0.000000e+00> : vector<8x8xf32>
    %139 = tpu.matmul %137, %138, %cst_43 {dimension_numbers = #tpu.dot_dimension_numbers<[1], [0], [0], [1], [0, 0, 1, 1], [], []>} : vector<8x8xbf16>, vector<8x8xbf16>, vector<8x8xf32> -> vector<8x8xf32>
    %140 = arith.truncf %139 : vector<8x8xf32> to vector<8x8xbf16>
    %141 = vector.extract_strided_slice %41 {offsets = [24, 0], sizes = [8, 32], strides = [1, 1]} : vector<32x32xbf16> to vector<8x32xbf16>
    %cst_44 = arith.constant dense<0.000000e+00> : vector<8x32xf32>
    %142 = tpu.matmul %140, %141, %cst_44 {dimension_numbers = #tpu.dot_dimension_numbers<[1], [0], [0], [1], [0, 0, 1, 1], [], []>} : vector<8x8xbf16>, vector<8x32xbf16>, vector<8x32xf32> -> vector<8x32xf32>
    %143 = arith.addf %118, %142 : vector<8x32xf32>
    %144 = arith.addf %1, %143 : vector<8x32xf32>
    %c1 = arith.constant 1 : index
    %c0_45 = arith.constant 0 : index
    %145 = vector.load %arg13[%c1, %c0_45] : memref<3x32xf32, #tpu.memory_space<vmem>>, vector<1x32xf32>
    %146 = vector.shape_cast %145 : vector<1x32xf32> to vector<32xf32>
    %c1_46 = arith.constant 1 : index
    %c0_47 = arith.constant 0 : index
    %147 = vector.load %arg14[%c1_46, %c0_47] : memref<3x32xf32, #tpu.memory_space<vmem>>, vector<1x32xf32>
    %148 = vector.shape_cast %147 : vector<1x32xf32> to vector<32xf32>
    %cst_48 = arith.constant dense<0.000000e+00> : vector<8xf32>
    %149 = vector.multi_reduction <add>, %144, %cst_48 [1] : vector<8x32xf32> to vector<8xf32>
    %150 = vector.shape_cast %149 : vector<8xf32> to vector<8x1xf32>
    %cst_49 = arith.constant 3.200000e+01 : f32
    %151 = vector.broadcast %cst_49 : f32 to vector<8x1xf32>
    %152 = arith.divf %150, %151 : vector<8x1xf32>
    %153 = vector.broadcast %152 : vector<8x1xf32> to vector<8x32xf32>
    %154 = arith.subf %144, %153 : vector<8x32xf32>
    %155 = arith.mulf %154, %154 : vector<8x32xf32>
    %cst_50 = arith.constant dense<0.000000e+00> : vector<8xf32>
    %156 = vector.multi_reduction <add>, %155, %cst_50 [1] : vector<8x32xf32> to vector<8xf32>
    %157 = vector.shape_cast %156 : vector<8xf32> to vector<8x1xf32>
    %cst_51 = arith.constant 3.100000e+01 : f32
    %158 = vector.broadcast %cst_51 : f32 to vector<8x1xf32>
    %159 = arith.divf %157, %158 : vector<8x1xf32>
    %160 = math.sqrt %159 : vector<8x1xf32>
    %cst_52 = arith.constant 9.99999997E-7 : f32
    %161 = vector.broadcast %cst_52 : f32 to vector<8x1xf32>
    %162 = arith.addf %160, %161 : vector<8x1xf32>
    %163 = tpu.reciprocal %162 {approx = true} : vector<8x1xf32> -> vector<8x1xf32>
    %164 = vector.broadcast %152 : vector<8x1xf32> to vector<8x32xf32>
    %165 = arith.subf %144, %164 : vector<8x32xf32>
    %166 = vector.shape_cast %146 : vector<32xf32> to vector<1x32xf32>
    %167 = vector.broadcast %166 : vector<1x32xf32> to vector<8x32xf32>
    %168 = arith.mulf %167, %165 : vector<8x32xf32>
    %169 = vector.broadcast %163 : vector<8x1xf32> to vector<8x32xf32>
    %170 = arith.mulf %168, %169 : vector<8x32xf32>
    %171 = vector.shape_cast %148 : vector<32xf32> to vector<1x32xf32>
    %172 = vector.broadcast %171 : vector<1x32xf32> to vector<8x32xf32>
    %173 = arith.addf %170, %172 : vector<8x32xf32>
    %174 = arith.truncf %173 : vector<8x32xf32> to vector<8x32xbf16>
    %c0_53 = arith.constant 0 : index
    %c0_54 = arith.constant 0 : index
    %175 = vector.load %arg6[%c0_53, %c0_54] : memref<32x32xbf16, #tpu.memory_space<vmem>>, vector<32x32xbf16>
    %cst_55 = arith.constant dense<0.000000e+00> : vector<8x32xf32>
    %176 = tpu.matmul %174, %175, %cst_55 {dimension_numbers = #tpu.dot_dimension_numbers<[1], [0], [0], [1], [0, 0, 1, 1], [], []>} : vector<8x32xbf16>, vector<32x32xbf16>, vector<8x32xf32> -> vector<8x32xf32>
    %c0_56 = arith.constant 0 : index
    %c0_57 = arith.constant 0 : index
    %177 = vector.load %arg7[%c0_56, %c0_57] : memref<32x64xbf16, #tpu.memory_space<vmem>>, vector<32x64xbf16>
    %cst_58 = arith.constant dense<0.000000e+00> : vector<10x64xf32>
    %178 = tpu.matmul %3, %177, %cst_58 {dimension_numbers = #tpu.dot_dimension_numbers<[1], [0], [0], [1], [0, 0, 1, 1], [], []>} : vector<10x32xbf16>, vector<32x64xbf16>, vector<10x64xf32> -> vector<10x64xf32>
    %179 = vector.extract_strided_slice %178 {offsets = [0, 0], sizes = [10, 32], strides = [1, 1]} : vector<10x64xf32> to vector<10x32xf32>
    %180 = vector.extract_strided_slice %178 {offsets = [0, 32], sizes = [10, 32], strides = [1, 1]} : vector<10x64xf32> to vector<10x32xf32>
    %c0_59 = arith.constant 0 : index
    %c0_60 = arith.constant 0 : index
    %181 = vector.load %arg8[%c0_59, %c0_60] : memref<32x32xbf16, #tpu.memory_space<vmem>>, vector<32x32xbf16>
    %182 = arith.truncf %176 : vector<8x32xf32> to vector<8x32xbf16>
    %183 = arith.truncf %179 : vector<10x32xf32> to vector<10x32xbf16>
    %184 = arith.truncf %180 : vector<10x32xf32> to vector<10x32xbf16>
    %185 = vector.extract_strided_slice %182 {offsets = [0, 0], sizes = [8, 8], strides = [1, 1]} : vector<8x32xbf16> to vector<8x8xbf16>
    %186 = vector.extract_strided_slice %183 {offsets = [0, 0], sizes = [10, 8], strides = [1, 1]} : vector<10x32xbf16> to vector<10x8xbf16>
    %cst_61 = arith.constant dense<0.000000e+00> : vector<8x10xf32>
    %187 = tpu.matmul %185, %186, %cst_61 {dimension_numbers = #tpu.dot_dimension_numbers<[1], [1], [0], [0], [0, 0, 1, 0], [], []>} : vector<8x8xbf16>, vector<10x8xbf16>, vector<8x10xf32> -> vector<8x10xf32>
    %188 = vector.broadcast %5 : vector<1x10xf32> to vector<8x10xf32>
    %189 = arith.addf %187, %188 : vector<8x10xf32>
    %cst_62 = arith.constant dense<0xFF800000> : vector<8xf32>
    %190 = vector.multi_reduction <maximumf>, %189, %cst_62 [1] : vector<8x10xf32> to vector<8xf32>
    %191 = vector.shape_cast %190 : vector<8xf32> to vector<8x1xf32>
    %192 = vector.broadcast %191 : vector<8x1xf32> to vector<8x10xf32>
    %193 = arith.subf %189, %192 : vector<8x10xf32>
    %194 = math.exp %193 : vector<8x10xf32>
    %cst_63 = arith.constant dense<0.000000e+00> : vector<8xf32>
    %195 = vector.multi_reduction <add>, %194, %cst_63 [1] : vector<8x10xf32> to vector<8xf32>
    %196 = vector.shape_cast %195 : vector<8xf32> to vector<8x1xf32>
    %197 = tpu.reciprocal %196 {approx = true} : vector<8x1xf32> -> vector<8x1xf32>
    %198 = vector.broadcast %197 : vector<8x1xf32> to vector<8x10xf32>
    %199 = arith.mulf %194, %198 : vector<8x10xf32>
    %200 = arith.truncf %199 : vector<8x10xf32> to vector<8x10xbf16>
    %201 = vector.extract_strided_slice %184 {offsets = [0, 0], sizes = [10, 8], strides = [1, 1]} : vector<10x32xbf16> to vector<10x8xbf16>
    %cst_64 = arith.constant dense<0.000000e+00> : vector<8x8xf32>
    %202 = tpu.matmul %200, %201, %cst_64 {dimension_numbers = #tpu.dot_dimension_numbers<[1], [0], [0], [1], [0, 0, 1, 1], [], []>} : vector<8x10xbf16>, vector<10x8xbf16>, vector<8x8xf32> -> vector<8x8xf32>
    %203 = arith.truncf %202 : vector<8x8xf32> to vector<8x8xbf16>
    %204 = vector.extract_strided_slice %181 {offsets = [0, 0], sizes = [8, 32], strides = [1, 1]} : vector<32x32xbf16> to vector<8x32xbf16>
    %cst_65 = arith.constant dense<0.000000e+00> : vector<8x32xf32>
    %205 = tpu.matmul %203, %204, %cst_65 {dimension_numbers = #tpu.dot_dimension_numbers<[1], [0], [0], [1], [0, 0, 1, 1], [], []>} : vector<8x8xbf16>, vector<8x32xbf16>, vector<8x32xf32> -> vector<8x32xf32>
    %206 = vector.extract_strided_slice %182 {offsets = [0, 8], sizes = [8, 8], strides = [1, 1]} : vector<8x32xbf16> to vector<8x8xbf16>
    %207 = vector.extract_strided_slice %183 {offsets = [0, 8], sizes = [10, 8], strides = [1, 1]} : vector<10x32xbf16> to vector<10x8xbf16>
    %cst_66 = arith.constant dense<0.000000e+00> : vector<8x10xf32>
    %208 = tpu.matmul %206, %207, %cst_66 {dimension_numbers = #tpu.dot_dimension_numbers<[1], [1], [0], [0], [0, 0, 1, 0], [], []>} : vector<8x8xbf16>, vector<10x8xbf16>, vector<8x10xf32> -> vector<8x10xf32>
    %209 = vector.broadcast %5 : vector<1x10xf32> to vector<8x10xf32>
    %210 = arith.addf %208, %209 : vector<8x10xf32>
    %cst_67 = arith.constant dense<0xFF800000> : vector<8xf32>
    %211 = vector.multi_reduction <maximumf>, %210, %cst_67 [1] : vector<8x10xf32> to vector<8xf32>
    %212 = vector.shape_cast %211 : vector<8xf32> to vector<8x1xf32>
    %213 = vector.broadcast %212 : vector<8x1xf32> to vector<8x10xf32>
    %214 = arith.subf %210, %213 : vector<8x10xf32>
    %215 = math.exp %214 : vector<8x10xf32>
    %cst_68 = arith.constant dense<0.000000e+00> : vector<8xf32>
    %216 = vector.multi_reduction <add>, %215, %cst_68 [1] : vector<8x10xf32> to vector<8xf32>
    %217 = vector.shape_cast %216 : vector<8xf32> to vector<8x1xf32>
    %218 = tpu.reciprocal %217 {approx = true} : vector<8x1xf32> -> vector<8x1xf32>
    %219 = vector.broadcast %218 : vector<8x1xf32> to vector<8x10xf32>
    %220 = arith.mulf %215, %219 : vector<8x10xf32>
    %221 = arith.truncf %220 : vector<8x10xf32> to vector<8x10xbf16>
    %222 = vector.extract_strided_slice %184 {offsets = [0, 8], sizes = [10, 8], strides = [1, 1]} : vector<10x32xbf16> to vector<10x8xbf16>
    %cst_69 = arith.constant dense<0.000000e+00> : vector<8x8xf32>
    %223 = tpu.matmul %221, %222, %cst_69 {dimension_numbers = #tpu.dot_dimension_numbers<[1], [0], [0], [1], [0, 0, 1, 1], [], []>} : vector<8x10xbf16>, vector<10x8xbf16>, vector<8x8xf32> -> vector<8x8xf32>
    %224 = arith.truncf %223 : vector<8x8xf32> to vector<8x8xbf16>
    %225 = vector.extract_strided_slice %181 {offsets = [8, 0], sizes = [8, 32], strides = [1, 1]} : vector<32x32xbf16> to vector<8x32xbf16>
    %cst_70 = arith.constant dense<0.000000e+00> : vector<8x32xf32>
    %226 = tpu.matmul %224, %225, %cst_70 {dimension_numbers = #tpu.dot_dimension_numbers<[1], [0], [0], [1], [0, 0, 1, 1], [], []>} : vector<8x8xbf16>, vector<8x32xbf16>, vector<8x32xf32> -> vector<8x32xf32>
    %227 = arith.addf %205, %226 : vector<8x32xf32>
    %228 = vector.extract_strided_slice %182 {offsets = [0, 16], sizes = [8, 8], strides = [1, 1]} : vector<8x32xbf16> to vector<8x8xbf16>
    %229 = vector.extract_strided_slice %183 {offsets = [0, 16], sizes = [10, 8], strides = [1, 1]} : vector<10x32xbf16> to vector<10x8xbf16>
    %cst_71 = arith.constant dense<0.000000e+00> : vector<8x10xf32>
    %230 = tpu.matmul %228, %229, %cst_71 {dimension_numbers = #tpu.dot_dimension_numbers<[1], [1], [0], [0], [0, 0, 1, 0], [], []>} : vector<8x8xbf16>, vector<10x8xbf16>, vector<8x10xf32> -> vector<8x10xf32>
    %231 = vector.broadcast %5 : vector<1x10xf32> to vector<8x10xf32>
    %232 = arith.addf %230, %231 : vector<8x10xf32>
    %cst_72 = arith.constant dense<0xFF800000> : vector<8xf32>
    %233 = vector.multi_reduction <maximumf>, %232, %cst_72 [1] : vector<8x10xf32> to vector<8xf32>
    %234 = vector.shape_cast %233 : vector<8xf32> to vector<8x1xf32>
    %235 = vector.broadcast %234 : vector<8x1xf32> to vector<8x10xf32>
    %236 = arith.subf %232, %235 : vector<8x10xf32>
    %237 = math.exp %236 : vector<8x10xf32>
    %cst_73 = arith.constant dense<0.000000e+00> : vector<8xf32>
    %238 = vector.multi_reduction <add>, %237, %cst_73 [1] : vector<8x10xf32> to vector<8xf32>
    %239 = vector.shape_cast %238 : vector<8xf32> to vector<8x1xf32>
    %240 = tpu.reciprocal %239 {approx = true} : vector<8x1xf32> -> vector<8x1xf32>
    %241 = vector.broadcast %240 : vector<8x1xf32> to vector<8x10xf32>
    %242 = arith.mulf %237, %241 : vector<8x10xf32>
    %243 = arith.truncf %242 : vector<8x10xf32> to vector<8x10xbf16>
    %244 = vector.extract_strided_slice %184 {offsets = [0, 16], sizes = [10, 8], strides = [1, 1]} : vector<10x32xbf16> to vector<10x8xbf16>
    %cst_74 = arith.constant dense<0.000000e+00> : vector<8x8xf32>
    %245 = tpu.matmul %243, %244, %cst_74 {dimension_numbers = #tpu.dot_dimension_numbers<[1], [0], [0], [1], [0, 0, 1, 1], [], []>} : vector<8x10xbf16>, vector<10x8xbf16>, vector<8x8xf32> -> vector<8x8xf32>
    %246 = arith.truncf %245 : vector<8x8xf32> to vector<8x8xbf16>
    %247 = vector.extract_strided_slice %181 {offsets = [16, 0], sizes = [8, 32], strides = [1, 1]} : vector<32x32xbf16> to vector<8x32xbf16>
    %cst_75 = arith.constant dense<0.000000e+00> : vector<8x32xf32>
    %248 = tpu.matmul %246, %247, %cst_75 {dimension_numbers = #tpu.dot_dimension_numbers<[1], [0], [0], [1], [0, 0, 1, 1], [], []>} : vector<8x8xbf16>, vector<8x32xbf16>, vector<8x32xf32> -> vector<8x32xf32>
    %249 = arith.addf %227, %248 : vector<8x32xf32>
    %250 = vector.extract_strided_slice %182 {offsets = [0, 24], sizes = [8, 8], strides = [1, 1]} : vector<8x32xbf16> to vector<8x8xbf16>
    %251 = vector.extract_strided_slice %183 {offsets = [0, 24], sizes = [10, 8], strides = [1, 1]} : vector<10x32xbf16> to vector<10x8xbf16>
    %cst_76 = arith.constant dense<0.000000e+00> : vector<8x10xf32>
    %252 = tpu.matmul %250, %251, %cst_76 {dimension_numbers = #tpu.dot_dimension_numbers<[1], [1], [0], [0], [0, 0, 1, 0], [], []>} : vector<8x8xbf16>, vector<10x8xbf16>, vector<8x10xf32> -> vector<8x10xf32>
    %253 = vector.broadcast %5 : vector<1x10xf32> to vector<8x10xf32>
    %254 = arith.addf %252, %253 : vector<8x10xf32>
    %cst_77 = arith.constant dense<0xFF800000> : vector<8xf32>
    %255 = vector.multi_reduction <maximumf>, %254, %cst_77 [1] : vector<8x10xf32> to vector<8xf32>
    %256 = vector.shape_cast %255 : vector<8xf32> to vector<8x1xf32>
    %257 = vector.broadcast %256 : vector<8x1xf32> to vector<8x10xf32>
    %258 = arith.subf %254, %257 : vector<8x10xf32>
    %259 = math.exp %258 : vector<8x10xf32>
    %cst_78 = arith.constant dense<0.000000e+00> : vector<8xf32>
    %260 = vector.multi_reduction <add>, %259, %cst_78 [1] : vector<8x10xf32> to vector<8xf32>
    %261 = vector.shape_cast %260 : vector<8xf32> to vector<8x1xf32>
    %262 = tpu.reciprocal %261 {approx = true} : vector<8x1xf32> -> vector<8x1xf32>
    %263 = vector.broadcast %262 : vector<8x1xf32> to vector<8x10xf32>
    %264 = arith.mulf %259, %263 : vector<8x10xf32>
    %265 = arith.truncf %264 : vector<8x10xf32> to vector<8x10xbf16>
    %266 = vector.extract_strided_slice %184 {offsets = [0, 24], sizes = [10, 8], strides = [1, 1]} : vector<10x32xbf16> to vector<10x8xbf16>
    %cst_79 = arith.constant dense<0.000000e+00> : vector<8x8xf32>
    %267 = tpu.matmul %265, %266, %cst_79 {dimension_numbers = #tpu.dot_dimension_numbers<[1], [0], [0], [1], [0, 0, 1, 1], [], []>} : vector<8x10xbf16>, vector<10x8xbf16>, vector<8x8xf32> -> vector<8x8xf32>
    %268 = arith.truncf %267 : vector<8x8xf32> to vector<8x8xbf16>
    %269 = vector.extract_strided_slice %181 {offsets = [24, 0], sizes = [8, 32], strides = [1, 1]} : vector<32x32xbf16> to vector<8x32xbf16>
    %cst_80 = arith.constant dense<0.000000e+00> : vector<8x32xf32>
    %270 = tpu.matmul %268, %269, %cst_80 {dimension_numbers = #tpu.dot_dimension_numbers<[1], [0], [0], [1], [0, 0, 1, 1], [], []>} : vector<8x8xbf16>, vector<8x32xbf16>, vector<8x32xf32> -> vector<8x32xf32>
    %271 = arith.addf %249, %270 : vector<8x32xf32>
    %272 = arith.addf %144, %271 : vector<8x32xf32>
    %c2 = arith.constant 2 : index
    %c0_81 = arith.constant 0 : index
    %273 = vector.load %arg13[%c2, %c0_81] : memref<3x32xf32, #tpu.memory_space<vmem>>, vector<1x32xf32>
    %274 = vector.shape_cast %273 : vector<1x32xf32> to vector<32xf32>
    %c2_82 = arith.constant 2 : index
    %c0_83 = arith.constant 0 : index
    %275 = vector.load %arg14[%c2_82, %c0_83] : memref<3x32xf32, #tpu.memory_space<vmem>>, vector<1x32xf32>
    %276 = vector.shape_cast %275 : vector<1x32xf32> to vector<32xf32>
    %cst_84 = arith.constant dense<0.000000e+00> : vector<8xf32>
    %277 = vector.multi_reduction <add>, %272, %cst_84 [1] : vector<8x32xf32> to vector<8xf32>
    %278 = vector.shape_cast %277 : vector<8xf32> to vector<8x1xf32>
    %cst_85 = arith.constant 3.200000e+01 : f32
    %279 = vector.broadcast %cst_85 : f32 to vector<8x1xf32>
    %280 = arith.divf %278, %279 : vector<8x1xf32>
    %281 = vector.broadcast %280 : vector<8x1xf32> to vector<8x32xf32>
    %282 = arith.subf %272, %281 : vector<8x32xf32>
    %283 = arith.mulf %282, %282 : vector<8x32xf32>
    %cst_86 = arith.constant dense<0.000000e+00> : vector<8xf32>
    %284 = vector.multi_reduction <add>, %283, %cst_86 [1] : vector<8x32xf32> to vector<8xf32>
    %285 = vector.shape_cast %284 : vector<8xf32> to vector<8x1xf32>
    %cst_87 = arith.constant 3.100000e+01 : f32
    %286 = vector.broadcast %cst_87 : f32 to vector<8x1xf32>
    %287 = arith.divf %285, %286 : vector<8x1xf32>
    %288 = math.sqrt %287 : vector<8x1xf32>
    %cst_88 = arith.constant 9.99999997E-7 : f32
    %289 = vector.broadcast %cst_88 : f32 to vector<8x1xf32>
    %290 = arith.addf %288, %289 : vector<8x1xf32>
    %291 = tpu.reciprocal %290 {approx = true} : vector<8x1xf32> -> vector<8x1xf32>
    %292 = vector.broadcast %280 : vector<8x1xf32> to vector<8x32xf32>
    %293 = arith.subf %272, %292 : vector<8x32xf32>
    %294 = vector.shape_cast %274 : vector<32xf32> to vector<1x32xf32>
    %295 = vector.broadcast %294 : vector<1x32xf32> to vector<8x32xf32>
    %296 = arith.mulf %295, %293 : vector<8x32xf32>
    %297 = vector.broadcast %291 : vector<8x1xf32> to vector<8x32xf32>
    %298 = arith.mulf %296, %297 : vector<8x32xf32>
    %299 = vector.shape_cast %276 : vector<32xf32> to vector<1x32xf32>
    %300 = vector.broadcast %299 : vector<1x32xf32> to vector<8x32xf32>
    %301 = arith.addf %298, %300 : vector<8x32xf32>
    %302 = arith.truncf %301 : vector<8x32xf32> to vector<8x32xbf16>
    %c0_89 = arith.constant 0 : index
    %c0_90 = arith.constant 0 : index
    %303 = vector.load %arg9[%c0_89, %c0_90] : memref<32x64xbf16, #tpu.memory_space<vmem>>, vector<32x64xbf16>
    %cst_91 = arith.constant dense<0.000000e+00> : vector<8x64xf32>
    %304 = tpu.matmul %302, %303, %cst_91 {dimension_numbers = #tpu.dot_dimension_numbers<[1], [0], [0], [1], [0, 0, 1, 1], [], []>} : vector<8x32xbf16>, vector<32x64xbf16>, vector<8x64xf32> -> vector<8x64xf32>
    %c0_92 = arith.constant 0 : index
    %c0_93 = arith.constant 0 : index
    %305 = vector.load %arg10[%c0_92, %c0_93] : memref<1x64xf32, #tpu.memory_space<vmem>>, vector<1x64xf32>
    %306 = vector.shape_cast %305 : vector<1x64xf32> to vector<64xf32>
    %307 = vector.shape_cast %306 : vector<64xf32> to vector<1x64xf32>
    %308 = vector.broadcast %307 : vector<1x64xf32> to vector<8x64xf32>
    %309 = arith.addf %304, %308 : vector<8x64xf32>
    %cst_94 = arith.constant 0.000000e+00 : f32
    %310 = vector.broadcast %cst_94 : f32 to vector<8x64xf32>
    %311 = arith.maximumf %309, %310 : vector<8x64xf32>
    %312 = arith.truncf %311 : vector<8x64xf32> to vector<8x64xbf16>
    %c0_95 = arith.constant 0 : index
    %c0_96 = arith.constant 0 : index
    %313 = vector.load %arg11[%c0_95, %c0_96] : memref<64x32xbf16, #tpu.memory_space<vmem>>, vector<64x32xbf16>
    %cst_97 = arith.constant dense<0.000000e+00> : vector<8x32xf32>
    %314 = tpu.matmul %312, %313, %cst_97 {dimension_numbers = #tpu.dot_dimension_numbers<[1], [0], [0], [1], [0, 0, 1, 1], [], []>} : vector<8x64xbf16>, vector<64x32xbf16>, vector<8x32xf32> -> vector<8x32xf32>
    %c0_98 = arith.constant 0 : index
    %c0_99 = arith.constant 0 : index
    %315 = vector.load %arg12[%c0_98, %c0_99] : memref<1x32xf32, #tpu.memory_space<vmem>>, vector<1x32xf32>
    %316 = vector.shape_cast %315 : vector<1x32xf32> to vector<32xf32>
    %317 = vector.shape_cast %316 : vector<32xf32> to vector<1x32xf32>
    %318 = vector.broadcast %317 : vector<1x32xf32> to vector<8x32xf32>
    %319 = arith.addf %314, %318 : vector<8x32xf32>
    %320 = arith.addf %272, %319 : vector<8x32xf32>
    %c0_100 = arith.constant 0 : index
    %c0_101 = arith.constant 0 : index
    %c0_102 = arith.constant 0 : index
    %321 = vector.load %arg15[%c0_100, %c0_101, %c0_102] : memref<1x8x32xf32, #tpu.memory_space<vmem>>, vector<1x8x32xf32>
    %322 = vector.shape_cast %321 : vector<1x8x32xf32> to vector<8x32xf32>
    %323 = vector.shape_cast %320 : vector<8x32xf32> to vector<1x8x32xf32>
    tpu.vector_store %arg15[%c0_100, %c0_101, %c0_102], %323 {strides = array<i32>} : memref<1x8x32xf32, #tpu.memory_space<vmem>>, vector<1x8x32xf32>,
    return
  }
  func.func @transform_0(%arg0: i32) -> (i32, i32, i32) {
    %c0_i32 = arith.constant 0 : i32
    %c0_i32_0 = arith.constant 0 : i32
    %c0_i32_1 = arith.constant 0 : i32
    return %arg0, %c0_i32, %c0_i32_0 : i32, i32, i32
  }
  func.func @transform_1(%arg0: i32) -> (i32, i32, i32) {
    %c0_i32 = arith.constant 0 : i32
    %c0_i32_0 = arith.constant 0 : i32
    %c0_i32_1 = arith.constant 0 : i32
    return %arg0, %c0_i32, %c0_i32_0 : i32, i32, i32
  }
  func.func @transform_2(%arg0: i32) -> (i32, i32, i32) {
    %c0_i32 = arith.constant 0 : i32
    %c0_i32_0 = arith.constant 0 : i32
    %c0_i32_1 = arith.constant 0 : i32
    return %arg0, %c0_i32, %c0_i32_0 : i32, i32, i32
  }
  func.func @transform_3(%arg0: i32) -> (i32, i32) {
    %c0_i32 = arith.constant 0 : i32
    %c0_i32_0 = arith.constant 0 : i32
    %c0_i32_1 = arith.constant 0 : i32
    return %c0_i32, %c0_i32_0 : i32, i32
  }
  func.func @transform_4(%arg0: i32) -> (i32, i32) {
    %c0_i32 = arith.constant 0 : i32
    %c0_i32_0 = arith.constant 0 : i32
    %c0_i32_1 = arith.constant 0 : i32
    return %c0_i32, %c0_i32_0 : i32, i32
  }
  func.func @transform_5(%arg0: i32) -> (i32, i32) {
    %c0_i32 = arith.constant 0 : i32
    %c0_i32_0 = arith.constant 0 : i32
    %c0_i32_1 = arith.constant 0 : i32
    return %c0_i32, %c0_i32_0 : i32, i32
  }
  func.func @transform_6(%arg0: i32) -> (i32, i32) {
    %c0_i32 = arith.constant 0 : i32
    %c0_i32_0 = arith.constant 0 : i32
    %c0_i32_1 = arith.constant 0 : i32
    return %c0_i32, %c0_i32_0 : i32, i32
  }
  func.func @transform_7(%arg0: i32) -> (i32, i32) {
    %c0_i32 = arith.constant 0 : i32
    %c0_i32_0 = arith.constant 0 : i32
    %c0_i32_1 = arith.constant 0 : i32
    return %c0_i32, %c0_i32_0 : i32, i32
  }
  func.func @transform_8(%arg0: i32) -> (i32, i32) {
    %c0_i32 = arith.constant 0 : i32
    %c0_i32_0 = arith.constant 0 : i32
    %c0_i32_1 = arith.constant 0 : i32
    return %c0_i32, %c0_i32_0 : i32, i32
  }
  func.func @transform_9(%arg0: i32) -> (i32, i32) {
    %c0_i32 = arith.constant 0 : i32
    %c0_i32_0 = arith.constant 0 : i32
    %c0_i32_1 = arith.constant 0 : i32
    return %c0_i32, %c0_i32_0 : i32, i32
  }
  func.func @transform_10(%arg0: i32) -> (i32, i32) {
    %c0_i32 = arith.constant 0 : i32
    %c0_i32_0 = arith.constant 0 : i32
    %c0_i32_1 = arith.constant 0 : i32
    return %c0_i32, %c0_i32_0 : i32, i32
  }
  func.func @transform_11(%arg0: i32) -> (i32, i32) {
    %c0_i32 = arith.constant 0 : i32
    %c0_i32_0 = arith.constant 0 : i32
    %c0_i32_1 = arith.constant 0 : i32
    return %c0_i32, %c0_i32_0 : i32, i32
  }
  func.func @transform_12(%arg0: i32) -> (i32, i32) {
    %c0_i32 = arith.constant 0 : i32
    %c0_i32_0 = arith.constant 0 : i32
    %c0_i32_1 = arith.constant 0 : i32
    return %c0_i32, %c0_i32_0 : i32, i32
  }
  func.func @transform_13(%arg0: i32) -> (i32, i32) {
    %c0_i32 = arith.constant 0 : i32
    %c0_i32_0 = arith.constant 0 : i32
    %c0_i32_1 = arith.constant 0 : i32
    return %c0_i32, %c0_i32_0 : i32, i32
  }
  func.func @transform_14(%arg0: i32) -> (i32, i32, i32) {
    %c0_i32 = arith.constant 0 : i32
    %c0_i32_0 = arith.constant 0 : i32
    %c0_i32_1 = arith.constant 0 : i32
    return %arg0, %c0_i32, %c0_i32_0 : i32, i32, i32
  }
}

</mosaic_0001>

<llo_original>
// kernel: tpu_custom_call.1
$region0: #{tpu_custom_call.1}
  #allocation0 [shape = 'u32[]', space=smem, size = 0x4, offset = 0x4, fixed_abs, tag = 'smem constant byte address 0x4 - core index']
  #allocation1 [shape = 'u32[144,128]{1,0:T(1,128)}', space=vmem, size = 0x12000, scoped, tag = 'internal scratch']
  %s0 = inlined_call_operand.vmem [shape: f32[2,8,32], index: 0, kind: input, shape index: {}]
  %s1 = inlined_call_operand.vmem [shape: bf16[2,10,32], index: 1, kind: input, shape index: {}]
  %s2 = inlined_call_operand.hbm [shape: f32[2,1,10], index: 2, kind: input, shape index: {}]
  %s3 = inlined_call_operand.vmem [shape: bf16[32,96], index: 3, kind: input, shape index: {}]
  %s4 = inlined_call_operand.vmem [shape: bf16[32,32], index: 4, kind: input, shape index: {}]
  %s5 = inlined_call_operand.vmem [shape: bf16[32,32], index: 5, kind: input, shape index: {}]
  %s6 = inlined_call_operand.hbm [shape: bf16[32,64], index: 6, kind: input, shape index: {}]
  %s7 = inlined_call_operand.hbm [shape: bf16[32,32], index: 7, kind: input, shape index: {}]
  %s8 = inlined_call_operand.hbm [shape: bf16[32,64], index: 8, kind: input, shape index: {}]
  %s9 = inlined_call_operand.vmem [shape: f32[1,64], index: 9, kind: input, shape index: {}]
  %s10 = inlined_call_operand.vmem [shape: bf16[64,32], index: 10, kind: input, shape index: {}]
  %s11 = inlined_call_operand.vmem [shape: f32[1,32], index: 11, kind: input, shape index: {}]
  %s12 = inlined_call_operand.vmem [shape: f32[3,32], index: 12, kind: input, shape index: {}]
  %s13 = inlined_call_operand.vmem [shape: f32[3,32], index: 13, kind: input, shape index: {}]
  %s14 = inlined_call_operand.hbm [shape: f32[2,8,32], index: 14, kind: output, shape index: {}]
  %s15 = sld [smem:[#allocation0]]
  $region105: #{tpu_custom_call.1} parent=0
    _
  %s17 = ssub.s32 1, %s15
  %s18 = scalar_select 0, %s17, %s15
  $region1: #{tpu_custom_call.1} parent=0
    #allocation2 [shape = 'u8[1024]{0}', space=vmem, size = 0x400, scoped, tag = 'input window, operand 2']
    #allocation3 [shape = 's32[2]{0}', space=sflag, size = 0x8, scoped, tag = 'scoped memory for tpu_custom_call.1']
    #allocation4 [shape = 's32[2]{0}', space=sflag, size = 0x8, scoped, tag = 'scoped memory for tpu_custom_call.1']
    #allocation5 [shape = 'u8[8192]{0}', space=vmem, size = 0x2000, scoped, tag = 'input window, operand 6, single buffered']
    #allocation6 [shape = 's32[1]{0}', space=sflag, size = 0x4, scoped, tag = 'scoped memory for tpu_custom_call.1']
    #allocation7 [shape = 'u8[8192]{0}', space=vmem, size = 0x2000, scoped, tag = 'input window, operand 7, single buffered']
    #allocation8 [shape = 'u8[8192]{0}', space=vmem, size = 0x2000, scoped, tag = 'input window, operand 8, single buffered']
    #allocation9 [shape = 's32[1]{0}', space=sflag, size = 0x4, scoped, tag = 'scoped memory for tpu_custom_call.1']
    #allocation10 [shape = 'u8[8192]{0}', space=vmem, size = 0x2000, scoped, tag = 'output window, operand 0']
    %19 = vsyncpa [#allocation3], 0
    %s20 = scalar_lea.sflag [#allocation3], 1
    %21 = vsyncpa %s20, 0
    %22 = vsyncpa [#allocation6], 0
    %23 = vsyncpa [#allocation9], 0
    %24 = vsyncpa [#allocation4], 0
    %s25 = scalar_lea.sflag [#allocation4], 1
    %26 = vsyncpa %s25, 0
    loop: start=0, step=1, limit=4
    $region2: #{tpu_custom_call.1} parent=1 // loop_pre_header
      _
    $region3: #{tpu_custom_call.1} parent=1 // loop_header
      %s28 = sphi 0, %s32
      %p29 = scmp.ge.s32.totalorder %s28, 4
      %s38 = sphi 0, %s40
      %s41 = sphi 0, %s38
      %s42 = sphi 0, %s41
      %s58 = sphi 0, %s42
      %s64 = sphi 0, %s66
      %s67 = sphi 0, %s64
      %s68 = sphi 0, %s67
      %s84 = sphi 0, %s68
      %s90 = sphi 0, %s92
      %s93 = sphi 0, %s90
      %s94 = sphi 0, %s93
      %s110 = sphi 0, %s94
      %s114 = sphi 0, %s114
      %s116 = sphi 0, %s114
      %s117 = sphi 0, %s116
      %s131 = sphi 0, %s117
      %s135 = sphi 0, %s135
      %s137 = sphi 0, %s135
      %s138 = sphi 0, %s137
      %s152 = sphi 0, %s138
      %s156 = sphi 0, %s156
      %s158 = sphi 0, %s156
      %s159 = sphi 0, %s158
      %s173 = sphi 0, %s159
      %s177 = sphi 0, %s177
      %s179 = sphi 0, %s177
      %s180 = sphi 0, %s179
      %s194 = sphi 0, %s180
      %s198 = sphi 0, %s198
      %s200 = sphi 0, %s198
      %s201 = sphi 0, %s200
      %s215 = sphi 0, %s201
      %s219 = sphi 0, %s219
      %s221 = sphi 0, %s219
      %s222 = sphi 0, %s221
      %s236 = sphi 0, %s222
      %s240 = sphi 0, %s240
      %s242 = sphi 0, %s240
      %s243 = sphi 0, %s242
      %s257 = sphi 0, %s243
      %s261 = sphi 0, %s261
      %s263 = sphi 0, %s261
      %s264 = sphi 0, %s263
      %s278 = sphi 0, %s264
      %s282 = sphi 0, %s282
      %s284 = sphi 0, %s282
      %s285 = sphi 0, %s284
      %s299 = sphi 0, %s285
      %s303 = sphi 0, %s303
      %s305 = sphi 0, %s303
      %s306 = sphi 0, %s305
      %s320 = sphi 0, %s306
      %s324 = sphi 0, %s324
      %s326 = sphi 0, %s324
      %s327 = sphi 0, %s326
      %s341 = sphi 0, %s327
      %s347 = sphi 0, %s349
      %s350 = sphi 0, %s347
      %s351 = sphi 0, %s350
      %s367 = sphi 0, %s351
    $region4: #{tpu_custom_call.1} parent=1 // loop_header_branch
      %31 = sbr.rel (%p29) target = $region8
    $region5: #{tpu_custom_call.1} parent=1 // loop_body
      %s33 = ssub.s32 %s28, 1
      %s34 = ssub.s32 %s28, 2
      %s35 = sadd.s32 %s28, 1
      %s36 = ssub.s32 %s28, %s35
      %p37 = scmp.eq.s32.totalorder %s36, 0
      %s39 = sadd.s32 %s38, 1
      %s40 = scalar_select %p37, %s38, %s39
      %p43 = pneg %p37
      %p44 = scmp.eq.s32.totalorder %s28, 1
      %p45 = por %p43, %p44
      %p46 = scmp.ne.s32.totalorder %s38, %s41
      %p47 = scmp.eq.s32.totalorder %s28, 0
      %p48 = por %p46, %p47
      %p49 = scmp.ne.s32.totalorder %s38, %s41
      %p50 = scmp.eq.s32.totalorder %s33, 1
      %p51 = por %p49, %p50
      %p52 = scmp.ne.s32.totalorder %s41, %s42
      %p53 = scmp.eq.s32.totalorder %s33, 0
      %p54 = por %p52, %p53
      %p55 = scmp.ne.s32.totalorder %s41, %s42
      %p56 = scmp.eq.s32.totalorder %s34, 1
      %p57 = por %p55, %p56
      %p59 = scmp.ne.s32.totalorder %s42, %s58
      %p60 = scmp.eq.s32.totalorder %s34, 0
      %p61 = por %p59, %p60
      %s62 = ssub.s32 %s28, %s35
      %p63 = scmp.eq.s32.totalorder %s62, 0
      %s65 = sadd.s32 %s64, 1
      %s66 = scalar_select %p63, %s64, %s65
      %p69 = pneg %p63
      %p70 = scmp.eq.s32.totalorder %s28, 1
      %p71 = por %p69, %p70
      %p72 = scmp.ne.s32.totalorder %s64, %s67
      %p73 = scmp.eq.s32.totalorder %s28, 0
      %p74 = por %p72, %p73
      %p75 = scmp.ne.s32.totalorder %s64, %s67
      %p76 = scmp.eq.s32.totalorder %s33, 1
      %p77 = por %p75, %p76
      %p78 = scmp.ne.s32.totalorder %s67, %s68
      %p79 = scmp.eq.s32.totalorder %s33, 0
      %p80 = por %p78, %p79
      %p81 = scmp.ne.s32.totalorder %s67, %s68
      %p82 = scmp.eq.s32.totalorder %s34, 1
      %p83 = por %p81, %p82
      %p85 = scmp.ne.s32.totalorder %s68, %s84
      %p86 = scmp.eq.s32.totalorder %s34, 0
      %p87 = por %p85, %p86
      %s88 = ssub.s32 %s28, %s35
      %p89 = scmp.eq.s32.totalorder %s88, 0
      %s91 = sadd.s32 %s90, 1
      %s92 = scalar_select %p89, %s90, %s91
      %p95 = pneg %p89
      %p96 = scmp.eq.s32.totalorder %s28, 1
      %p97 = por %p95, %p96
      %p98 = scmp.ne.s32.totalorder %s90, %s93
      %p99 = scmp.eq.s32.totalorder %s28, 0
      %p100 = por %p98, %p99
      %p101 = scmp.ne.s32.totalorder %s90, %s93
      %p102 = scmp.eq.s32.totalorder %s33, 1
      %p103 = por %p101, %p102
      %p104 = scmp.ne.s32.totalorder %s93, %s94
      %p105 = scmp.eq.s32.totalorder %s33, 0
      %p106 = por %p104, %p105
      %p107 = scmp.ne.s32.totalorder %s93, %s94
      %p108 = scmp.eq.s32.totalorder %s34, 1
      %p109 = por %p107, %p108
      %p111 = scmp.ne.s32.totalorder %s94, %s110
      %p112 = scmp.eq.s32.totalorder %s34, 0
      %p113 = por %p111, %p112
      %s115 = sadd.s32 %s114, 1
      %p118 = scmp.eq.s32.totalorder %s28, 1
      %p119 = scmp.ne.s32.totalorder %s114, %s116
      %p120 = scmp.eq.s32.totalorder %s28, 0
      %p121 = por %p119, %p120
      %p122 = scmp.ne.s32.totalorder %s114, %s116
      %p123 = scmp.eq.s32.totalorder %s33, 1
      %p124 = por %p122, %p123
      %p125 = scmp.ne.s32.totalorder %s116, %s117
      %p126 = scmp.eq.s32.totalorder %s33, 0
      %p127 = por %p125, %p126
      %p128 = scmp.ne.s32.totalorder %s116, %s117
      %p129 = scmp.eq.s32.totalorder %s34, 1
      %p130 = por %p128, %p129
      %p132 = scmp.ne.s32.totalorder %s117, %s131
      %p133 = scmp.eq.s32.totalorder %s34, 0
      %p134 = por %p132, %p133
      %s136 = sadd.s32 %s135, 1
      %p139 = scmp.eq.s32.totalorder %s28, 1
      %p140 = scmp.ne.s32.totalorder %s135, %s137
      %p141 = scmp.eq.s32.totalorder %s28, 0
      %p142 = por %p140, %p141
      %p143 = scmp.ne.s32.totalorder %s135, %s137
      %p144 = scmp.eq.s32.totalorder %s33, 1
      %p145 = por %p143, %p144
      %p146 = scmp.ne.s32.totalorder %s137, %s138
      %p147 = scmp.eq.s32.totalorder %s33, 0
      %p148 = por %p146, %p147
      %p149 = scmp.ne.s32.totalorder %s137, %s138
      %p150 = scmp.eq.s32.totalorder %s34, 1
      %p151 = por %p149, %p150
      %p153 = scmp.ne.s32.totalorder %s138, %s152
      %p154 = scmp.eq.s32.totalorder %s34, 0
      %p155 = por %p153, %p154
      %s157 = sadd.s32 %s156, 1
      %p160 = scmp.eq.s32.totalorder %s28, 1
      %p161 = scmp.ne.s32.totalorder %s156, %s158
      %p162 = scmp.eq.s32.totalorder %s28, 0
      %p163 = por %p161, %p162
      %p164 = scmp.ne.s32.totalorder %s156, %s158
      %p165 = scmp.eq.s32.totalorder %s33, 1
      %p166 = por %p164, %p165
      %p167 = scmp.ne.s32.totalorder %s158, %s159
      %p168 = scmp.eq.s32.totalorder %s33, 0
      %p169 = por %p167, %p168
      %p170 = scmp.ne.s32.totalorder %s158, %s159
      %p171 = scmp.eq.s32.totalorder %s34, 1
      %p172 = por %p170, %p171
      %p174 = scmp.ne.s32.totalorder %s159, %s173
      %p175 = scmp.eq.s32.totalorder %s34, 0
      %p176 = por %p174, %p175
      %s178 = sadd.s32 %s177, 1
      %p181 = scmp.eq.s32.totalorder %s28, 1
      %p182 = scmp.ne.s32.totalorder %s177, %s179
      %p183 = scmp.eq.s32.totalorder %s28, 0
      %p184 = por %p182, %p183
      %p185 = scmp.ne.s32.totalorder %s177, %s179
      %p186 = scmp.eq.s32.totalorder %s33, 1
      %p187 = por %p185, %p186
      %p188 = scmp.ne.s32.totalorder %s179, %s180
      %p189 = scmp.eq.s32.totalorder %s33, 0
      %p190 = por %p188, %p189
      %p191 = scmp.ne.s32.totalorder %s179, %s180
      %p192 = scmp.eq.s32.totalorder %s34, 1
      %p193 = por %p191, %p192
      %p195 = scmp.ne.s32.totalorder %s180, %s194
      %p196 = scmp.eq.s32.totalorder %s34, 0
      %p197 = por %p195, %p196
      %s199 = sadd.s32 %s198, 1
      %p202 = scmp.eq.s32.totalorder %s28, 1
      %p203 = scmp.ne.s32.totalorder %s198, %s200
      %p204 = scmp.eq.s32.totalorder %s28, 0
      %p205 = por %p203, %p204
      %p206 = scmp.ne.s32.totalorder %s198, %s200
      %p207 = scmp.eq.s32.totalorder %s33, 1
      %p208 = por %p206, %p207
      %p209 = scmp.ne.s32.totalorder %s200, %s201
      %p210 = scmp.eq.s32.totalorder %s33, 0
      %p211 = por %p209, %p210
      %p212 = scmp.ne.s32.totalorder %s200, %s201
      %p213 = scmp.eq.s32.totalorder %s34, 1
      %p214 = por %p212, %p213
      %p216 = scmp.ne.s32.totalorder %s201, %s215
      %p217 = scmp.eq.s32.totalorder %s34, 0
      %p218 = por %p216, %p217
      %s220 = sadd.s32 %s219, 1
      %p223 = scmp.eq.s32.totalorder %s28, 1
      %p224 = scmp.ne.s32.totalorder %s219, %s221
      %p225 = scmp.eq.s32.totalorder %s28, 0
      %p226 = por %p224, %p225
      %p227 = scmp.ne.s32.totalorder %s219, %s221
      %p228 = scmp.eq.s32.totalorder %s33, 1
      %p229 = por %p227, %p228
      %p230 = scmp.ne.s32.totalorder %s221, %s222
      %p231 = scmp.eq.s32.totalorder %s33, 0
      %p232 = por %p230, %p231
      %p233 = scmp.ne.s32.totalorder %s221, %s222
      %p234 = scmp.eq.s32.totalorder %s34, 1
      %p235 = por %p233, %p234
      %p237 = scmp.ne.s32.totalorder %s222, %s236
      %p238 = scmp.eq.s32.totalorder %s34, 0
      %p239 = por %p237, %p238
      %s241 = sadd.s32 %s240, 1
      %p244 = scmp.eq.s32.totalorder %s28, 1
      %p245 = scmp.ne.s32.totalorder %s240, %s242
      %p246 = scmp.eq.s32.totalorder %s28, 0
      %p247 = por %p245, %p246
      %p248 = scmp.ne.s32.totalorder %s240, %s242
      %p249 = scmp.eq.s32.totalorder %s33, 1
      %p250 = por %p248, %p249
      %p251 = scmp.ne.s32.totalorder %s242, %s243
      %p252 = scmp.eq.s32.totalorder %s33, 0
      %p253 = por %p251, %p252
      %p254 = scmp.ne.s32.totalorder %s242, %s243
      %p255 = scmp.eq.s32.totalorder %s34, 1
      %p256 = por %p254, %p255
      %p258 = scmp.ne.s32.totalorder %s243, %s257
      %p259 = scmp.eq.s32.totalorder %s34, 0
      %p260 = por %p258, %p259
      %s262 = sadd.s32 %s261, 1
      %p265 = scmp.eq.s32.totalorder %s28, 1
      %p266 = scmp.ne.s32.totalorder %s261, %s263
      %p267 = scmp.eq.s32.totalorder %s28, 0
      %p268 = por %p266, %p267
      %p269 = scmp.ne.s32.totalorder %s261, %s263
      %p270 = scmp.eq.s32.totalorder %s33, 1
      %p271 = por %p269, %p270
      %p272 = scmp.ne.s32.totalorder %s263, %s264
      %p273 = scmp.eq.s32.totalorder %s33, 0
      %p274 = por %p272, %p273
      %p275 = scmp.ne.s32.totalorder %s263, %s264
      %p276 = scmp.eq.s32.totalorder %s34, 1
      %p277 = por %p275, %p276
      %p279 = scmp.ne.s32.totalorder %s264, %s278
      %p280 = scmp.eq.s32.totalorder %s34, 0
      %p281 = por %p279, %p280
      %s283 = sadd.s32 %s282, 1
      %p286 = scmp.eq.s32.totalorder %s28, 1
      %p287 = scmp.ne.s32.totalorder %s282, %s284
      %p288 = scmp.eq.s32.totalorder %s28, 0
      %p289 = por %p287, %p288
      %p290 = scmp.ne.s32.totalorder %s282, %s284
      %p291 = scmp.eq.s32.totalorder %s33, 1
      %p292 = por %p290, %p291
      %p293 = scmp.ne.s32.totalorder %s284, %s285
      %p294 = scmp.eq.s32.totalorder %s33, 0
      %p295 = por %p293, %p294
      %p296 = scmp.ne.s32.totalorder %s284, %s285
      %p297 = scmp.eq.s32.totalorder %s34, 1
      %p298 = por %p296, %p297
      %p300 = scmp.ne.s32.totalorder %s285, %s299
      %p301 = scmp.eq.s32.totalorder %s34, 0
      %p302 = por %p300, %p301
      %s304 = sadd.s32 %s303, 1
      %p307 = scmp.eq.s32.totalorder %s28, 1
      %p308 = scmp.ne.s32.totalorder %s303, %s305
      %p309 = scmp.eq.s32.totalorder %s28, 0
      %p310 = por %p308, %p309
      %p311 = scmp.ne.s32.totalorder %s303, %s305
      %p312 = scmp.eq.s32.totalorder %s33, 1
      %p313 = por %p311, %p312
      %p314 = scmp.ne.s32.totalorder %s305, %s306
      %p315 = scmp.eq.s32.totalorder %s33, 0
      %p316 = por %p314, %p315
      %p317 = scmp.ne.s32.totalorder %s305, %s306
      %p318 = scmp.eq.s32.totalorder %s34, 1
      %p319 = por %p317, %p318
      %p321 = scmp.ne.s32.totalorder %s306, %s320
      %p322 = scmp.eq.s32.totalorder %s34, 0
      %p323 = por %p321, %p322
      %s325 = sadd.s32 %s324, 1
      %p328 = scmp.eq.s32.totalorder %s28, 1
      %p329 = scmp.ne.s32.totalorder %s324, %s326
      %p330 = scmp.eq.s32.totalorder %s28, 0
      %p331 = por %p329, %p330
      %p332 = scmp.ne.s32.totalorder %s324, %s326
      %p333 = scmp.eq.s32.totalorder %s33, 1
      %p334 = por %p332, %p333
      %p335 = scmp.ne.s32.totalorder %s326, %s327
      %p336 = scmp.eq.s32.totalorder %s33, 0
      %p337 = por %p335, %p336
      %p338 = scmp.ne.s32.totalorder %s326, %s327
      %p339 = scmp.eq.s32.totalorder %s34, 1
      %p340 = por %p338, %p339
      %p342 = scmp.ne.s32.totalorder %s327, %s341
      %p343 = scmp.eq.s32.totalorder %s34, 0
      %p344 = por %p342, %p343
      %s345 = ssub.s32 %s28, %s35
      %p346 = scmp.eq.s32.totalorder %s345, 0
      %s348 = sadd.s32 %s347, 1
      %s349 = scalar_select %p346, %s347, %s348
      %p352 = pneg %p346
      %p353 = scmp.eq.s32.totalorder %s28, 1
      %p354 = por %p352, %p353
      %p355 = scmp.ne.s32.totalorder %s347, %s350
      %p356 = scmp.eq.s32.totalorder %s28, 0
      %p357 = por %p355, %p356
      %p358 = scmp.ne.s32.totalorder %s347, %s350
      %p359 = scmp.eq.s32.totalorder %s33, 1
      %p360 = por %p358, %p359
      %p361 = scmp.ne.s32.totalorder %s350, %s351
      %p362 = scmp.eq.s32.totalorder %s33, 0
      %p363 = por %p361, %p362
      %p364 = scmp.ne.s32.totalorder %s350, %s351
      %p365 = scmp.eq.s32.totalorder %s34, 1
      %p366 = por %p364, %p365
      %p368 = scmp.ne.s32.totalorder %s351, %s367
      %p369 = scmp.eq.s32.totalorder %s34, 0
      %p370 = por %p368, %p369
      %p371 = scmp.le.s32.totalorder 1, %s28
      %p372 = scmp.lt.s32.totalorder %s28, 3
      %p373 = pnand %p371, %p372
      %p374 = pneg %p373
      // Predicated region
      $region9: #{tpu_custom_call.1} parent=5 // pred_check
        _
      $region10: #{tpu_custom_call.1} parent=5 // pred_check_branch
        %376 = sbr.rel (%p373) target = $region12
      $region11: #{tpu_custom_call.1} parent=5 // pred_region
        %s377 = ssub.s32 %s28, 1
        // Predicated region
        $region13: #{tpu_custom_call.1} parent=11 // pred_check
          %p378 = pneg %p127
        $region14: #{tpu_custom_call.1} parent=11 // pred_check_branch
          %380 = sbr.rel (%p378) target = $region16
        $region15: #{tpu_custom_call.1} parent=11 // pred_region
          _
        $region16: #{tpu_custom_call.1} parent=11 // pred_fallthru
          _
        // Predicated region
        $region17: #{tpu_custom_call.1} parent=11 // pred_check
          %p381 = pneg %p148
        $region18: #{tpu_custom_call.1} parent=11 // pred_check_branch
          %383 = sbr.rel (%p381) target = $region20
        $region19: #{tpu_custom_call.1} parent=11 // pred_region
          _
        $region20: #{tpu_custom_call.1} parent=11 // pred_fallthru
          _
        // Predicated region
        $region21: #{tpu_custom_call.1} parent=11 // pred_check
          %p384 = pneg %p169
        $region22: #{tpu_custom_call.1} parent=11 // pred_check_branch
          %386 = sbr.rel (%p384) target = $region24
        $region23: #{tpu_custom_call.1} parent=11 // pred_region
          _
        $region24: #{tpu_custom_call.1} parent=11 // pred_fallthru
          _
        // Predicated region
        $region25: #{tpu_custom_call.1} parent=11 // pred_check
          %p387 = pneg %p190
        $region26: #{tpu_custom_call.1} parent=11 // pred_check_branch
          %389 = sbr.rel (%p387) target = $region28
        $region27: #{tpu_custom_call.1} parent=11 // pred_region
          %s391 = ssub.s32 256, 256
          %392 = vsyncadd [#allocation6], %s391
          %s393 = sshll.u32 [#allocation5], 4
          %s394 = int_to_ptr.vmem [resolvable:$true] %s393
          %399 = dma.hbm_to_vmem [thread:$0]  %s6, 256, %s394, [#allocation6], 64, 64, 4
        $region28: #{tpu_custom_call.1} parent=11 // pred_fallthru
          _
        // Predicated region
        $region29: #{tpu_custom_call.1} parent=11 // pred_check
          %p400 = pneg %p211
        $region30: #{tpu_custom_call.1} parent=11 // pred_check_branch
          %402 = sbr.rel (%p400) target = $region32
        $region31: #{tpu_custom_call.1} parent=11 // pred_region
          %s404 = ssub.s32 256, 256
          %405 = vsyncadd [#allocation6], %s404
          %s406 = sshll.u32 [#allocation7], 4
          %s407 = int_to_ptr.vmem [resolvable:$true] %s406
          %412 = dma.hbm_to_vmem [thread:$0]  %s7, 256, %s407, [#allocation6], 64, 64, 4
        $region32: #{tpu_custom_call.1} parent=11 // pred_fallthru
          _
        // Predicated region
        $region33: #{tpu_custom_call.1} parent=11 // pred_check
          %p413 = pneg %p232
        $region34: #{tpu_custom_call.1} parent=11 // pred_check_branch
          %415 = sbr.rel (%p413) target = $region36
        $region35: #{tpu_custom_call.1} parent=11 // pred_region
          %s417 = ssub.s32 256, 256
          %418 = vsyncadd [#allocation9], %s417
          %s419 = sshll.u32 [#allocation8], 4
          %s420 = int_to_ptr.vmem [resolvable:$true] %s419
          %425 = dma.hbm_to_vmem [thread:$0]  %s8, 256, %s420, [#allocation9], 64, 64, 4
        $region36: #{tpu_custom_call.1} parent=11 // pred_fallthru
          _
        // Predicated region
        $region37: #{tpu_custom_call.1} parent=11 // pred_check
          %p426 = pneg %p253
        $region38: #{tpu_custom_call.1} parent=11 // pred_check_branch
          %428 = sbr.rel (%p426) target = $region40
        $region39: #{tpu_custom_call.1} parent=11 // pred_region
          _
        $region40: #{tpu_custom_call.1} parent=11 // pred_fallthru
          _
        // Predicated region
        $region41: #{tpu_custom_call.1} parent=11 // pred_check
          %p429 = pneg %p274
        $region42: #{tpu_custom_call.1} parent=11 // pred_check_branch
          %431 = sbr.rel (%p429) target = $region44
        $region43: #{tpu_custom_call.1} parent=11 // pred_region
          _
        $region44: #{tpu_custom_call.1} parent=11 // pred_fallthru
          _
        // Predicated region
        $region45: #{tpu_custom_call.1} parent=11 // pred_check
          %p432 = pneg %p295
        $region46: #{tpu_custom_call.1} parent=11 // pred_check_branch
          %434 = sbr.rel (%p432) target = $region48
        $region47: #{tpu_custom_call.1} parent=11 // pred_region
          _
        $region48: #{tpu_custom_call.1} parent=11 // pred_fallthru
          _
        // Predicated region
        $region49: #{tpu_custom_call.1} parent=11 // pred_check
          %p435 = pneg %p316
        $region50: #{tpu_custom_call.1} parent=11 // pred_check_branch
          %437 = sbr.rel (%p435) target = $region52
        $region51: #{tpu_custom_call.1} parent=11 // pred_region
          _
        $region52: #{tpu_custom_call.1} parent=11 // pred_fallthru
          _
        // Predicated region
        $region53: #{tpu_custom_call.1} parent=11 // pred_check
          %p438 = pneg %p337
        $region54: #{tpu_custom_call.1} parent=11 // pred_check_branch
          %440 = sbr.rel (%p438) target = $region56
        $region55: #{tpu_custom_call.1} parent=11 // pred_region
          _
        $region56: #{tpu_custom_call.1} parent=11 // pred_fallthru
          _
      $region12: #{tpu_custom_call.1} parent=5 // pred_fallthru
        _
      %p441 = scmp.lt.s32.totalorder %s28, 2
      // Predicated region
      $region57: #{tpu_custom_call.1} parent=5 // pred_check
        %p442 = pneg %p441
      $region58: #{tpu_custom_call.1} parent=5 // pred_check_branch
        %444 = sbr.rel (%p442) target = $region60
      $region59: #{tpu_custom_call.1} parent=5 // pred_region
        // Predicated region
        $region61: #{tpu_custom_call.1} parent=59 // pred_check
          %p445 = pneg %p48
        $region62: #{tpu_custom_call.1} parent=59 // pred_check_branch
          %447 = sbr.rel (%p445) target = $region64
        $region63: #{tpu_custom_call.1} parent=59 // pred_region
          %p448 = scmp.lt.s32.totalorder %s28, 1
          %s449 = scalar_select %p448, %s28, 1
          %s450 = smul.addr %s449, 8
          %s451 = scalar_lea.vmem %s0, %s450
        $region64: #{tpu_custom_call.1} parent=59 // pred_fallthru
          _
        // Predicated region
        $region65: #{tpu_custom_call.1} parent=59 // pred_check
          %p452 = pneg %p74
        $region66: #{tpu_custom_call.1} parent=59 // pred_check_branch
          %454 = sbr.rel (%p452) target = $region68
        $region67: #{tpu_custom_call.1} parent=59 // pred_region
          %p455 = scmp.lt.s32.totalorder %s28, 1
          %s456 = scalar_select %p455, %s28, 1
          %s457 = smul.addr %s456, 2
          %s458 = smul.addr %s457, 4
          %s459 = scalar_lea.vmem %s1, %s458
        $region68: #{tpu_custom_call.1} parent=59 // pred_fallthru
          _
        // Predicated region
        $region69: #{tpu_custom_call.1} parent=59 // pred_check
          %p460 = pneg %p100
        $region70: #{tpu_custom_call.1} parent=59 // pred_check_branch
          %462 = sbr.rel (%p460) target = $region72
        $region71: #{tpu_custom_call.1} parent=59 // pred_region
          %s463 = sand.u32 %s90, 1
          %s464 = scalar_lea.sflag [#allocation3], %s463
          %s465 = sand.u32 %s90, 1
          %s466 = scalar_lea.vmem [#allocation2], %s465
          %s468 = ssub.s32 16, 16
          %469 = vsyncadd %s464, %s468
          %s470 = smul.addr %s28, 16
          %s471 = scalar_lea.hbm %s2, %s470
          %s473 = sshll.u32 %s466, 4
          %s474 = int_to_ptr.vmem [resolvable:$true] %s473
          %476 = dma.hbm_to_vmem [thread:$0]  %s471, 16, %s474, %s464
        $region72: #{tpu_custom_call.1} parent=59 // pred_fallthru
          _
      $region60: #{tpu_custom_call.1} parent=5 // pred_fallthru
        _
      %p477 = scmp.le.s32.totalorder 1, %s28
      %p478 = scmp.lt.s32.totalorder %s28, 3
      %p479 = pnand %p477, %p478
      %p480 = pneg %p479
      // Predicated region
      $region73: #{tpu_custom_call.1} parent=5 // pred_check
        _
      $region74: #{tpu_custom_call.1} parent=5 // pred_check_branch
        %482 = sbr.rel (%p479) target = $region76
      $region75: #{tpu_custom_call.1} parent=5 // pred_region
        %s483 = ssub.s32 %s28, 1
        %s484 = sand.u32 %s93, 1
        %s485 = scalar_lea.sflag [#allocation3], %s484
        %s486 = sand.u32 %s93, 1
        %s487 = scalar_lea.vmem [#allocation2], %s486
        // Predicated region
        $region77: #{tpu_custom_call.1} parent=75 // pred_check
          %p488 = pneg %p106
        $region78: #{tpu_custom_call.1} parent=75 // pred_check_branch
          %490 = sbr.rel (%p488) target = $region80
        $region79: #{tpu_custom_call.1} parent=75 // pred_region
          %491 = dma.done %s485, 16
        $region80: #{tpu_custom_call.1} parent=75 // pred_fallthru
          _
        // Predicated region
        $region81: #{tpu_custom_call.1} parent=75 // pred_check
          %p492 = pneg %p190
        $region82: #{tpu_custom_call.1} parent=75 // pred_check_branch
          %494 = sbr.rel (%p492) target = $region84
        $region83: #{tpu_custom_call.1} parent=75 // pred_region
          %495 = dma.done [#allocation6], 256
        $region84: #{tpu_custom_call.1} parent=75 // pred_fallthru
          _
        // Predicated region
        $region85: #{tpu_custom_call.1} parent=75 // pred_check
          %p496 = pneg %p211
        $region86: #{tpu_custom_call.1} parent=75 // pred_check_branch
          %498 = sbr.rel (%p496) target = $region88
        $region87: #{tpu_custom_call.1} parent=75 // pred_region
          %499 = dma.done [#allocation6], 256
        $region88: #{tpu_custom_call.1} parent=75 // pred_fallthru
          _
        // Predicated region
        $region89: #{tpu_custom_call.1} parent=75 // pred_check
          %p500 = pneg %p232
        $region90: #{tpu_custom_call.1} parent=75 // pred_check_branch
          %502 = sbr.rel (%p500) target = $region92
        $region91: #{tpu_custom_call.1} parent=75 // pred_region
          %503 = dma.done [#allocation9], 256
        $region92: #{tpu_custom_call.1} parent=75 // pred_fallthru
          _
        %p504 = scmp.lt.s32.totalorder %s33, 1
        %s505 = scalar_select %p504, %s33, 1
        %s506 = smul.addr %s505, 8
        %s507 = scalar_lea.vmem %s0, %s506
        %p508 = pneg %p54
        %p509 = pneg %p51
        %p510 = scmp.lt.s32.totalorder %s33, 1
        %s511 = scalar_select %p510, %s33, 1
        %s512 = smul.addr %s511, 2
        %s513 = smul.addr %s512, 4
        %s514 = scalar_lea.vmem %s1, %s513
        %p515 = pneg %p80
        %p516 = pneg %p77
        %s517 = sand.u32 %s93, 1
        %s518 = scalar_lea.sflag [#allocation3], %s517
        %s519 = sand.u32 %s93, 1
        %s520 = scalar_lea.vmem [#allocation2], %s519
        %p521 = pneg %p106
        %p522 = pneg %p103
        %p523 = pneg %p127
        %p524 = pneg %p124
        %p525 = pneg %p148
        %p526 = pneg %p145
        %p527 = pneg %p169
        %p528 = pneg %p166
        %p529 = pneg %p190
        %p530 = pneg %p187
        %p531 = pneg %p211
        %p532 = pneg %p208
        %p533 = pneg %p232
        %p534 = pneg %p229
        %p535 = pneg %p253
        %p536 = pneg %p250
        %p537 = pneg %p274
        %p538 = pneg %p271
        %p539 = pneg %p295
        %p540 = pneg %p292
        %p541 = pneg %p316
        %p542 = pneg %p313
        %p543 = pneg %p337
        %p544 = pneg %p334
        %p545 = pneg %p363
        %p546 = pneg %p360
        %s547 = sand.u32 %s350, 1
        %s548 = scalar_lea.sflag [#allocation4], %s547
        %s549 = sand.u32 %s350, 1
        %s550 = smul.addr %s549, 8
        %s551 = scalar_lea.vmem [#allocation10], %s550
        %p552 = scmp.lt.s32.totalorder %s33, 1
        %s553 = scalar_select %p552, %s33, 1
        %s554 = smul.addr %s553, 8
        %s555 = scalar_lea.vmem %s0, %s554
        %p556 = scmp.lt.s32.totalorder %s33, 1
        %s557 = scalar_select %p556, %s33, 1
        %s558 = smul.addr %s557, 2
        %s559 = smul.addr %s558, 4
        %s560 = scalar_lea.vmem %s1, %s559
        %v562 = vld [vmem:[%s555] sm:$0xff]
        %v563 = vld [vmem:[%s560] sm:$0xf]
        %v564 = vld [vmem:[%s560 + $0x4] sm:$0x1]
        %v565 = vld [vmem:[%s487] sm:$0x1]
        %v566 = vld [vmem:[%s12] sm:$0x1]
        %v567 = vld [vmem:[%s13] sm:$0x1]
        %vm568 = vcmask 261120
        %v569 = vsel %vm568, %v562, 0.0
        %570 = vadd.xlane.f32.xlu0 %v569
        %v571 = vpop.xlane.xlu0 %570
        %v572 = vrcp.pop 32.0
        %v573 = vmul.f32 %v571, %v572
        %v574 = vsub.f32 %v562, %v573
        %v575 = vmul.f32 %v574, %v574
        %v576 = vsel %vm568, %v575, 0.0
        %577 = vadd.xlane.f32.xlu0 %v576
        %v578 = vpop.xlane.xlu0 %577
        %v579 = vrcp.pop 31.0
        %v580 = vmul.f32 %v578, %v579
        %v581 = vrsqrt.pop %v580
        %v582 = vmul.f32 %v580, %v581
        %vm583 = vcmp.eq.f32.partialorder %v580, inf
        %v584 = vsel %vm583, %v580, %v582
        %vm585 = vcmp.eq.f32.partialorder %v580, 0.0
        %v586 = vand.u32 %v580, 2147483648
        %v587 = vsel %vm585, %v586, %v584
        %v588 = vadd.f32 %v587, 1e-06
        %v589 = vrcp.pop %v588
        %v590 = vlaneseq
        %v591 = vshrl.u32 %v590, 7
        %v592 = vsub.s32 0, %v591
        %v593 = vrot.slane %v566, %v592
        %v594 = vmul.f32 %v593, %v574
        %v595 = vmul.f32 %v594, %v589
        %v596 = vlaneseq
        %v597 = vshrl.u32 %v596, 7
        %v598 = vsub.s32 0, %v597
        %v599 = vrot.slane %v567, %v598
        %v600 = vadd.f32 %v595, %v599
        %v601 = vpack.c.bf16 %v600, %v600
        %v602 = vld [vmem:[%s3] sm:$0xf]
        %v603 = vld [vmem:[%s3 + $0x4] sm:$0xf]
        %v604 = vld [vmem:[%s3 + $0x8] sm:$0xf]
        %v605 = vld [vmem:[%s3 + $0xc] sm:$0xf]
        %v610 = vunpack.c.l.b16 %v602
        %v611 = vunpack.c.l.b16 %v603
        %v612 = vunpack.c.l.b16 %v604
        %v613 = vunpack.c.l.b16 %v605
        %v614 = vpack.c.b16 %v611, %v610
        %v615 = vpack.c.b16 %v613, %v612
        %v619 = vsel %vm568, %v601, 0
        %621 = vmatprep.subr.bf16.mxu0 0
        %622 = vmatpush1.bf16.msra.mxu0 0
        %623 = vmatprep.subr.bf16.mxu0 0
        %624 = vmatpush1.bf16.msra.mxu0 0
        %625 = vmatprep.subr.bf16.mxu0 0
        %626 = vmatpush1.bf16.msra.mxu0 0
        %627 = vmatprep.subr.bf16.mxu0 0
        %628 = vmatpush1.bf16.msra.mxu0 0
        %629 = vmatprep.subr.bf16.mxu0 0
        %630 = vmatpush1.bf16.msra.mxu0 0
        %631 = vmatprep.subr.bf16.mxu0 0
        %632 = vmatpush1.bf16.msra.mxu0 0
        %633 = vmatprep.subr.bf16.mxu0 0
        %634 = vmatpush1.bf16.msra.mxu0 %v615
        %635 = vmatprep.subr.bf16.mxu0 0
        %636 = vmatpush1.bf16.msra.mxu0 %v614
        %637 = vmatprep.subr.bf16.mxu0 0
        %638 = vmatpush2.bf16.msra.mxu0 0
        %639 = vmatprep.subr.bf16.mxu0 0
        %640 = vmatpush2.bf16.msra.mxu0 0
        %641 = vmatprep.subr.bf16.mxu0 0
        %642 = vmatpush2.bf16.msra.mxu0 0
        %643 = vmatprep.subr.bf16.mxu0 0
        %644 = vmatpush2.bf16.msra.mxu0 0
        %645 = vmatprep.subr.bf16.mxu0 0
        %646 = vmatpush2.bf16.msra.mxu0 0
        %647 = vmatprep.subr.bf16.mxu0 0
        %648 = vmatpush2.bf16.msra.mxu0 0
        %649 = vmatprep.subr.bf16.mxu0 0
        %650 = vmatpush2.bf16.msra.mxu0 0
        %651 = vmatprep.subr.bf16.mxu0 0
        %652 = vmatpush2.bf16.msra.mxu0 0
        %653 = vmatprep.mubr.bf16.mxu0 0
        %654 = vmatmul.mubr.bf16.gmra.mxu0 %v619
        %v655 = vpop.f32.mrf.mxu0
        %v656 = vadd.f32 0.0, %v655
        %v657 = vpop.f32.mrf.mxu0
        %v658 = vpop.f32.mrf.mxu0
        %v659 = vpop.f32.mrf.mxu0
        %660 = vdwg.mxu0
        %v661 = vld [vmem:[%s4] sm:$0xf]
        %v662 = vld [vmem:[%s4 + $0x4] sm:$0xf]
        %v663 = vld [vmem:[%s4 + $0x8] sm:$0xf]
        %v664 = vld [vmem:[%s4 + $0xc] sm:$0xf]
        %v665 = vpack.c.bf16 %v656, %v656
        %667 = vrot.lane.b32.xlu0 %v665, 96
        %v668 = vpop.permute.xlu0 %667
        %vm669 = vcmask 64512
        %v671 = vsel %vm669, %v665, 0
        %v674 = vsel %vm669, %v668, 0
        %676 = vmatprep.subr.bf16.mxu0 0
        %677 = vmatpush1.bf16.xpose.msra.mxu0 0
        %678 = vmatprep.subr.bf16.mxu0 0
        %679 = vmatpush1.bf16.xpose.msra.mxu0 0
        %680 = vmatprep.subr.bf16.mxu0 0
        %681 = vmatpush1.bf16.xpose.msra.mxu0 0
        %682 = vmatprep.subr.bf16.mxu0 0
        %683 = vmatpush1.bf16.xpose.msra.mxu0 0
        %684 = vmatprep.subr.bf16.mxu0 0
        %685 = vmatpush1.bf16.xpose.msra.mxu0 0
        %686 = vmatprep.subr.bf16.mxu0 0
        %687 = vmatpush1.bf16.xpose.msra.mxu0 0
        %688 = vmatprep.subr.bf16.mxu0 0
        %689 = vmatpush1.bf16.xpose.msra.mxu0 0
        %690 = vmatprep.subr.bf16.mxu0 0
        %691 = vmatpush1.bf16.xpose.msra.mxu0 %v674
        %692 = vmatprep.subr.bf16.mxu0 0
        %693 = vmatpush2.bf16.xpose.msra.mxu0 0
        %694 = vmatprep.subr.bf16.mxu0 0
        %695 = vmatpush2.bf16.xpose.msra.mxu0 0
        %696 = vmatprep.subr.bf16.mxu0 0
        %697 = vmatpush2.bf16.xpose.msra.mxu0 0
        %698 = vmatprep.subr.bf16.mxu0 0
        %699 = vmatpush2.bf16.xpose.msra.mxu0 0
        %700 = vmatprep.subr.bf16.mxu0 0
        %701 = vmatpush2.bf16.xpose.msra.mxu0 0
        %702 = vmatprep.subr.bf16.mxu0 0
        %703 = vmatpush2.bf16.xpose.msra.mxu0 0
        %704 = vmatprep.subr.bf16.mxu0 0
        %705 = vmatpush2.bf16.xpose.msra.mxu0 0
        %706 = vmatprep.subr.bf16.mxu0 0
        %707 = vmatpush2.bf16.xpose.msra.mxu0 0
        %708 = vmatprep.mubr.bf16.mxu0 0
        %709 = vmatmul.mubr.bf16.gmra.mxu0 %v671
        %v710 = vpop.f32.mrf.mxu0
        %v711 = vadd.f32 0.0, %v710
        %v712 = vpop.f32.mrf.mxu0
        %v713 = vpop.f32.mrf.mxu0
        %v714 = vpop.f32.mrf.mxu0
        %715 = vdwg.mxu0
        %v716 = vlaneseq
        %v717 = vshrl.u32 %v716, 7
        %v718 = vlaneseq
        %v719 = vand.u32 %v718, 127
        %vm720 = vcmp.ge.s32.totalorder %v717, %v719
        %v721 = vsel %vm720, %v711, -1e+09
        %v722 = vsel %vm669, %v721, -inf
        %723 = vmax.xlane.f32.xlu0 %v722
        %v724 = vpop.xlane.xlu0 %723
        %v725 = vsub.f32 %v721, %v724
        %v726 = vmul.f32 %v725, 1.442695
        %v727 = vpow.pop %v726
        %v728 = vsel %vm669, %v727, 0.0
        %729 = vadd.xlane.f32.xlu0 %v728
        %v730 = vpop.xlane.xlu0 %729
        %v731 = vrcp.pop %v730
        %v732 = vmul.f32 %v727, %v731
        %v733 = vpack.c.bf16 %v732, %v732
        %734 = vrot.lane.b32.xlu0 %v665, 64
        %v735 = vpop.permute.xlu0 %734
        %v737 = vsel %vm669, %v733, 0
        %vm739 = vcmask 1043456
        %v741 = vsel %vm739, %v735, 0
        %743 = vmatprep.subr.bf16.mxu0 0
        %744 = vmatpush1.bf16.msra.mxu0 0
        %745 = vmatprep.subr.bf16.mxu0 0
        %746 = vmatpush1.bf16.msra.mxu0 0
        %747 = vmatprep.subr.bf16.mxu0 0
        %748 = vmatpush1.bf16.msra.mxu0 0
        %749 = vmatprep.subr.bf16.mxu0 0
        %750 = vmatpush1.bf16.msra.mxu0 0
        %751 = vmatprep.subr.bf16.mxu0 0
        %752 = vmatpush1.bf16.msra.mxu0 0
        %753 = vmatprep.subr.bf16.mxu0 0
        %754 = vmatpush1.bf16.msra.mxu0 0
        %755 = vmatprep.subr.bf16.mxu0 0
        %756 = vmatpush1.bf16.msra.mxu0 0
        %757 = vmatprep.subr.bf16.mxu0 0
        %758 = vmatpush1.bf16.msra.mxu0 %v741
        %759 = vmatprep.subr.bf16.mxu0 0
        %760 = vmatpush2.bf16.msra.mxu0 0
        %761 = vmatprep.subr.bf16.mxu0 0
        %762 = vmatpush2.bf16.msra.mxu0 0
        %763 = vmatprep.subr.bf16.mxu0 0
        %764 = vmatpush2.bf16.msra.mxu0 0
        %765 = vmatprep.subr.bf16.mxu0 0
        %766 = vmatpush2.bf16.msra.mxu0 0
        %767 = vmatprep.subr.bf16.mxu0 0
        %768 = vmatpush2.bf16.msra.mxu0 0
        %769 = vmatprep.subr.bf16.mxu0 0
        %770 = vmatpush2.bf16.msra.mxu0 0
        %771 = vmatprep.subr.bf16.mxu0 0
        %772 = vmatpush2.bf16.msra.mxu0 0
        %773 = vmatprep.subr.bf16.mxu0 0
        %774 = vmatpush2.bf16.msra.mxu0 0
        %775 = vmatprep.mubr.bf16.mxu0 0
        %776 = vmatmul.mubr.bf16.gmra.mxu0 %v737
        %v777 = vpop.f32.mrf.mxu0
        %v778 = vadd.f32 0.0, %v777
        %v779 = vpop.f32.mrf.mxu0
        %v780 = vpop.f32.mrf.mxu0
        %v781 = vpop.f32.mrf.mxu0
        %782 = vdwg.mxu0
        %v783 = vpack.c.bf16 %v778, %v778
        %784 = vrot.lane.b32.xlu0 %v665, 120
        %v785 = vpop.permute.xlu0 %784
        %786 = vrot.lane.b32.xlu0 %v665, 88
        %v787 = vpop.permute.xlu0 %786
        %v789 = vsel %vm669, %v785, 0
        %v792 = vsel %vm669, %v787, 0
        %794 = vmatprep.subr.bf16.mxu0 0
        %795 = vmatpush1.bf16.xpose.msra.mxu0 0
        %796 = vmatprep.subr.bf16.mxu0 0
        %797 = vmatpush1.bf16.xpose.msra.mxu0 0
        %798 = vmatprep.subr.bf16.mxu0 0
        %799 = vmatpush1.bf16.xpose.msra.mxu0 0
        %800 = vmatprep.subr.bf16.mxu0 0
        %801 = vmatpush1.bf16.xpose.msra.mxu0 0
        %802 = vmatprep.subr.bf16.mxu0 0
        %803 = vmatpush1.bf16.xpose.msra.mxu0 0
        %804 = vmatprep.subr.bf16.mxu0 0
        %805 = vmatpush1.bf16.xpose.msra.mxu0 0
        %806 = vmatprep.subr.bf16.mxu0 0
        %807 = vmatpush1.bf16.xpose.msra.mxu0 0
        %808 = vmatprep.subr.bf16.mxu0 0
        %809 = vmatpush1.bf16.xpose.msra.mxu0 %v792
        %810 = vmatprep.subr.bf16.mxu0 0
        %811 = vmatpush2.bf16.xpose.msra.mxu0 0
        %812 = vmatprep.subr.bf16.mxu0 0
        %813 = vmatpush2.bf16.xpose.msra.mxu0 0
        %814 = vmatprep.subr.bf16.mxu0 0
        %815 = vmatpush2.bf16.xpose.msra.mxu0 0
        %816 = vmatprep.subr.bf16.mxu0 0
        %817 = vmatpush2.bf16.xpose.msra.mxu0 0
        %818 = vmatprep.subr.bf16.mxu0 0
        %819 = vmatpush2.bf16.xpose.msra.mxu0 0
        %820 = vmatprep.subr.bf16.mxu0 0
        %821 = vmatpush2.bf16.xpose.msra.mxu0 0
        %822 = vmatprep.subr.bf16.mxu0 0
        %823 = vmatpush2.bf16.xpose.msra.mxu0 0
        %824 = vmatprep.subr.bf16.mxu0 0
        %825 = vmatpush2.bf16.xpose.msra.mxu0 0
        %826 = vmatprep.mubr.bf16.mxu0 0
        %827 = vmatmul.mubr.bf16.gmra.mxu0 %v789
        %v828 = vpop.f32.mrf.mxu0
        %v829 = vadd.f32 0.0, %v828
        %v830 = vpop.f32.mrf.mxu0
        %v831 = vpop.f32.mrf.mxu0
        %v832 = vpop.f32.mrf.mxu0
        %833 = vdwg.mxu0
        %v834 = vsel %vm720, %v829, -1e+09
        %v835 = vsel %vm669, %v834, -inf
        %836 = vmax.xlane.f32.xlu0 %v835
        %v837 = vpop.xlane.xlu0 %836
        %v838 = vsub.f32 %v834, %v837
        %v839 = vmul.f32 %v838, 1.442695
        %v840 = vpow.pop %v839
        %v841 = vsel %vm669, %v840, 0.0
        %842 = vadd.xlane.f32.xlu0 %v841
        %v843 = vpop.xlane.xlu0 %842
        %v844 = vrcp.pop %v843
        %v845 = vmul.f32 %v840, %v844
        %v846 = vpack.c.bf16 %v845, %v845
        %847 = vrot.lane.b32.xlu0 %v665, 56
        %v848 = vpop.permute.xlu0 %847
        %v850 = vsel %vm669, %v846, 0
        %v853 = vsel %vm739, %v848, 0
        %855 = vmatprep.subr.bf16.mxu0 0
        %856 = vmatpush1.bf16.msra.mxu0 0
        %857 = vmatprep.subr.bf16.mxu0 0
        %858 = vmatpush1.bf16.msra.mxu0 0
        %859 = vmatprep.subr.bf16.mxu0 0
        %860 = vmatpush1.bf16.msra.mxu0 0
        %861 = vmatprep.subr.bf16.mxu0 0
        %862 = vmatpush1.bf16.msra.mxu0 0
        %863 = vmatprep.subr.bf16.mxu0 0
        %864 = vmatpush1.bf16.msra.mxu0 0
        %865 = vmatprep.subr.bf16.mxu0 0
        %866 = vmatpush1.bf16.msra.mxu0 0
        %867 = vmatprep.subr.bf16.mxu0 0
        %868 = vmatpush1.bf16.msra.mxu0 0
        %869 = vmatprep.subr.bf16.mxu0 0
        %870 = vmatpush1.bf16.msra.mxu0 %v853
        %871 = vmatprep.subr.bf16.mxu0 0
        %872 = vmatpush2.bf16.msra.mxu0 0
        %873 = vmatprep.subr.bf16.mxu0 0
        %874 = vmatpush2.bf16.msra.mxu0 0
        %875 = vmatprep.subr.bf16.mxu0 0
        %876 = vmatpush2.bf16.msra.mxu0 0
        %877 = vmatprep.subr.bf16.mxu0 0
        %878 = vmatpush2.bf16.msra.mxu0 0
        %879 = vmatprep.subr.bf16.mxu0 0
        %880 = vmatpush2.bf16.msra.mxu0 0
        %881 = vmatprep.subr.bf16.mxu0 0
        %882 = vmatpush2.bf16.msra.mxu0 0
        %883 = vmatprep.subr.bf16.mxu0 0
        %884 = vmatpush2.bf16.msra.mxu0 0
        %885 = vmatprep.subr.bf16.mxu0 0
        %886 = vmatpush2.bf16.msra.mxu0 0
        %887 = vmatprep.mubr.bf16.mxu0 0
        %888 = vmatmul.mubr.bf16.gmra.mxu0 %v850
        %v889 = vpop.f32.mrf.mxu0
        %v890 = vadd.f32 0.0, %v889
        %v891 = vpop.f32.mrf.mxu0
        %v892 = vpop.f32.mrf.mxu0
        %v893 = vpop.f32.mrf.mxu0
        %894 = vdwg.mxu0
        %v895 = vpack.c.bf16 %v890, %v890
        %v897 = vsel %vm669, %v895, 0
        %v900 = vsel %vm739, %v662, 0
        %902 = vmatprep.subr.bf16.mxu0 0
        %903 = vmatpush1.bf16.msra.mxu0 0
        %904 = vmatprep.subr.bf16.mxu0 0
        %905 = vmatpush1.bf16.msra.mxu0 0
        %906 = vmatprep.subr.bf16.mxu0 0
        %907 = vmatpush1.bf16.msra.mxu0 0
        %908 = vmatprep.subr.bf16.mxu0 0
        %909 = vmatpush1.bf16.msra.mxu0 0
        %910 = vmatprep.subr.bf16.mxu0 0
        %911 = vmatpush1.bf16.msra.mxu0 0
        %912 = vmatprep.subr.bf16.mxu0 0
        %913 = vmatpush1.bf16.msra.mxu0 0
        %914 = vmatprep.subr.bf16.mxu0 0
        %915 = vmatpush1.bf16.msra.mxu0 0
        %916 = vmatprep.subr.bf16.mxu0 0
        %917 = vmatpush1.bf16.msra.mxu0 %v900
        %918 = vmatprep.subr.bf16.mxu0 0
        %919 = vmatpush2.bf16.msra.mxu0 0
        %920 = vmatprep.subr.bf16.mxu0 0
        %921 = vmatpush2.bf16.msra.mxu0 0
        %922 = vmatprep.subr.bf16.mxu0 0
        %923 = vmatpush2.bf16.msra.mxu0 0
        %924 = vmatprep.subr.bf16.mxu0 0
        %925 = vmatpush2.bf16.msra.mxu0 0
        %926 = vmatprep.subr.bf16.mxu0 0
        %927 = vmatpush2.bf16.msra.mxu0 0
        %928 = vmatprep.subr.bf16.mxu0 0
        %929 = vmatpush2.bf16.msra.mxu0 0
        %930 = vmatprep.subr.bf16.mxu0 0
        %931 = vmatpush2.bf16.msra.mxu0 0
        %932 = vmatprep.subr.bf16.mxu0 0
        %933 = vmatpush2.bf16.msra.mxu0 0
        %934 = vmatprep.mubr.bf16.mxu0 0
        %935 = vmatmul.mubr.bf16.gmra.mxu0 %v897
        %v936 = vpop.f32.mrf.mxu0
        %v937 = vadd.f32 0.0, %v936
        %v938 = vpop.f32.mrf.mxu0
        %v939 = vpop.f32.mrf.mxu0
        %v940 = vpop.f32.mrf.mxu0
        %941 = vdwg.mxu0
        %v943 = vsel %vm669, %v783, 0
        %v946 = vsel %vm739, %v661, 0
        %948 = vmatprep.subr.bf16.mxu0 0
        %949 = vmatpush1.bf16.msra.mxu0 0
        %950 = vmatprep.subr.bf16.mxu0 0
        %951 = vmatpush1.bf16.msra.mxu0 0
        %952 = vmatprep.subr.bf16.mxu0 0
        %953 = vmatpush1.bf16.msra.mxu0 0
        %954 = vmatprep.subr.bf16.mxu0 0
        %955 = vmatpush1.bf16.msra.mxu0 0
        %956 = vmatprep.subr.bf16.mxu0 0
        %957 = vmatpush1.bf16.msra.mxu0 0
        %958 = vmatprep.subr.bf16.mxu0 0
        %959 = vmatpush1.bf16.msra.mxu0 0
        %960 = vmatprep.subr.bf16.mxu0 0
        %961 = vmatpush1.bf16.msra.mxu0 0
        %962 = vmatprep.subr.bf16.mxu0 0
        %963 = vmatpush1.bf16.msra.mxu0 %v946
        %964 = vmatprep.subr.bf16.mxu0 0
        %965 = vmatpush2.bf16.msra.mxu0 0
        %966 = vmatprep.subr.bf16.mxu0 0
        %967 = vmatpush2.bf16.msra.mxu0 0
        %968 = vmatprep.subr.bf16.mxu0 0
        %969 = vmatpush2.bf16.msra.mxu0 0
        %970 = vmatprep.subr.bf16.mxu0 0
        %971 = vmatpush2.bf16.msra.mxu0 0
        %972 = vmatprep.subr.bf16.mxu0 0
        %973 = vmatpush2.bf16.msra.mxu0 0
        %974 = vmatprep.subr.bf16.mxu0 0
        %975 = vmatpush2.bf16.msra.mxu0 0
        %976 = vmatprep.subr.bf16.mxu0 0
        %977 = vmatpush2.bf16.msra.mxu0 0
        %978 = vmatprep.subr.bf16.mxu0 0
        %979 = vmatpush2.bf16.msra.mxu0 0
        %980 = vmatprep.mubr.bf16.mxu0 0
        %981 = vmatmul.mubr.bf16.gmra.mxu0 %v943
        %v982 = vpop.f32.mrf.mxu0
        %v983 = vadd.f32 %v937, %v982
        %v984 = vpop.f32.mrf.mxu0
        %v985 = vpop.f32.mrf.mxu0
        %v986 = vpop.f32.mrf.mxu0
        %987 = vdwg.mxu0
        %988 = vrot.lane.b32.xlu0 %v665, 112
        %v989 = vpop.permute.xlu0 %988
        %990 = vrot.lane.b32.xlu0 %v665, 80
        %v991 = vpop.permute.xlu0 %990
        %v993 = vsel %vm669, %v989, 0
        %v996 = vsel %vm669, %v991, 0
        %998 = vmatprep.subr.bf16.mxu0 0
        %999 = vmatpush1.bf16.xpose.msra.mxu0 0
        %1000 = vmatprep.subr.bf16.mxu0 0
        %1001 = vmatpush1.bf16.xpose.msra.mxu0 0
        %1002 = vmatprep.subr.bf16.mxu0 0
        %1003 = vmatpush1.bf16.xpose.msra.mxu0 0
        %1004 = vmatprep.subr.bf16.mxu0 0
        %1005 = vmatpush1.bf16.xpose.msra.mxu0 0
        %1006 = vmatprep.subr.bf16.mxu0 0
        %1007 = vmatpush1.bf16.xpose.msra.mxu0 0
        %1008 = vmatprep.subr.bf16.mxu0 0
        %1009 = vmatpush1.bf16.xpose.msra.mxu0 0
        %1010 = vmatprep.subr.bf16.mxu0 0
        %1011 = vmatpush1.bf16.xpose.msra.mxu0 0
        %1012 = vmatprep.subr.bf16.mxu0 0
        %1013 = vmatpush1.bf16.xpose.msra.mxu0 %v996
        %1014 = vmatprep.subr.bf16.mxu0 0
        %1015 = vmatpush2.bf16.xpose.msra.mxu0 0
        %1016 = vmatprep.subr.bf16.mxu0 0
        %1017 = vmatpush2.bf16.xpose.msra.mxu0 0
        %1018 = vmatprep.subr.bf16.mxu0 0
        %1019 = vmatpush2.bf16.xpose.msra.mxu0 0
        %1020 = vmatprep.subr.bf16.mxu0 0
        %1021 = vmatpush2.bf16.xpose.msra.mxu0 0
        %1022 = vmatprep.subr.bf16.mxu0 0
        %1023 = vmatpush2.bf16.xpose.msra.mxu0 0
        %1024 = vmatprep.subr.bf16.mxu0 0
        %1025 = vmatpush2.bf16.xpose.msra.mxu0 0
        %1026 = vmatprep.subr.bf16.mxu0 0
        %1027 = vmatpush2.bf16.xpose.msra.mxu0 0
        %1028 = vmatprep.subr.bf16.mxu0 0
        %1029 = vmatpush2.bf16.xpose.msra.mxu0 0
        %1030 = vmatprep.mubr.bf16.mxu0 0
        %1031 = vmatmul.mubr.bf16.gmra.mxu0 %v993
        %v1032 = vpop.f32.mrf.mxu0
        %v1033 = vadd.f32 0.0, %v1032
        %v1034 = vpop.f32.mrf.mxu0
        %v1035 = vpop.f32.mrf.mxu0
        %v1036 = vpop.f32.mrf.mxu0
        %1037 = vdwg.mxu0
        %v1038 = vsel %vm720, %v1033, -1e+09
        %v1039 = vsel %vm669, %v1038, -inf
        %1040 = vmax.xlane.f32.xlu0 %v1039
        %v1041 = vpop.xlane.xlu0 %1040
        %v1042 = vsub.f32 %v1038, %v1041
        %v1043 = vmul.f32 %v1042, 1.442695
        %v1044 = vpow.pop %v1043
        %v1045 = vsel %vm669, %v1044, 0.0
        %1046 = vadd.xlane.f32.xlu0 %v1045
        %v1047 = vpop.xlane.xlu0 %1046
        %v1048 = vrcp.pop %v1047
        %v1049 = vmul.f32 %v1044, %v1048
        %v1050 = vpack.c.bf16 %v1049, %v1049
        %1051 = vrot.lane.b32.xlu0 %v665, 48
        %v1052 = vpop.permute.xlu0 %1051
        %v1054 = vsel %vm669, %v1050, 0
        %v1057 = vsel %vm739, %v1052, 0
        %1059 = vmatprep.subr.bf16.mxu0 0
        %1060 = vmatpush1.bf16.msra.mxu0 0
        %1061 = vmatprep.subr.bf16.mxu0 0
        %1062 = vmatpush1.bf16.msra.mxu0 0
        %1063 = vmatprep.subr.bf16.mxu0 0
        %1064 = vmatpush1.bf16.msra.mxu0 0
        %1065 = vmatprep.subr.bf16.mxu0 0
        %1066 = vmatpush1.bf16.msra.mxu0 0
        %1067 = vmatprep.subr.bf16.mxu0 0
        %1068 = vmatpush1.bf16.msra.mxu0 0
        %1069 = vmatprep.subr.bf16.mxu0 0
        %1070 = vmatpush1.bf16.msra.mxu0 0
        %1071 = vmatprep.subr.bf16.mxu0 0
        %1072 = vmatpush1.bf16.msra.mxu0 0
        %1073 = vmatprep.subr.bf16.mxu0 0
        %1074 = vmatpush1.bf16.msra.mxu0 %v1057
        %1075 = vmatprep.subr.bf16.mxu0 0
        %1076 = vmatpush2.bf16.msra.mxu0 0
        %1077 = vmatprep.subr.bf16.mxu0 0
        %1078 = vmatpush2.bf16.msra.mxu0 0
        %1079 = vmatprep.subr.bf16.mxu0 0
        %1080 = vmatpush2.bf16.msra.mxu0 0
        %1081 = vmatprep.subr.bf16.mxu0 0
        %1082 = vmatpush2.bf16.msra.mxu0 0
        %1083 = vmatprep.subr.bf16.mxu0 0
        %1084 = vmatpush2.bf16.msra.mxu0 0
        %1085 = vmatprep.subr.bf16.mxu0 0
        %1086 = vmatpush2.bf16.msra.mxu0 0
        %1087 = vmatprep.subr.bf16.mxu0 0
        %1088 = vmatpush2.bf16.msra.mxu0 0
        %1089 = vmatprep.subr.bf16.mxu0 0
        %1090 = vmatpush2.bf16.msra.mxu0 0
        %1091 = vmatprep.mubr.bf16.mxu0 0
        %1092 = vmatmul.mubr.bf16.gmra.mxu0 %v1054
        %v1093 = vpop.f32.mrf.mxu0
        %v1094 = vadd.f32 0.0, %v1093
        %v1095 = vpop.f32.mrf.mxu0
        %v1096 = vpop.f32.mrf.mxu0
        %v1097 = vpop.f32.mrf.mxu0
        %1098 = vdwg.mxu0
        %v1099 = vpack.c.bf16 %v1094, %v1094
        %v1101 = vsel %vm669, %v1099, 0
        %v1104 = vsel %vm739, %v663, 0
        %1106 = vmatprep.subr.bf16.mxu0 0
        %1107 = vmatpush1.bf16.msra.mxu0 0
        %1108 = vmatprep.subr.bf16.mxu0 0
        %1109 = vmatpush1.bf16.msra.mxu0 0
        %1110 = vmatprep.subr.bf16.mxu0 0
        %1111 = vmatpush1.bf16.msra.mxu0 0
        %1112 = vmatprep.subr.bf16.mxu0 0
        %1113 = vmatpush1.bf16.msra.mxu0 0
        %1114 = vmatprep.subr.bf16.mxu0 0
        %1115 = vmatpush1.bf16.msra.mxu0 0
        %1116 = vmatprep.subr.bf16.mxu0 0
        %1117 = vmatpush1.bf16.msra.mxu0 0
        %1118 = vmatprep.subr.bf16.mxu0 0
        %1119 = vmatpush1.bf16.msra.mxu0 0
        %1120 = vmatprep.subr.bf16.mxu0 0
        %1121 = vmatpush1.bf16.msra.mxu0 %v1104
        %1122 = vmatprep.subr.bf16.mxu0 0
        %1123 = vmatpush2.bf16.msra.mxu0 0
        %1124 = vmatprep.subr.bf16.mxu0 0
        %1125 = vmatpush2.bf16.msra.mxu0 0
        %1126 = vmatprep.subr.bf16.mxu0 0
        %1127 = vmatpush2.bf16.msra.mxu0 0
        %1128 = vmatprep.subr.bf16.mxu0 0
        %1129 = vmatpush2.bf16.msra.mxu0 0
        %1130 = vmatprep.subr.bf16.mxu0 0
        %1131 = vmatpush2.bf16.msra.mxu0 0
        %1132 = vmatprep.subr.bf16.mxu0 0
        %1133 = vmatpush2.bf16.msra.mxu0 0
        %1134 = vmatprep.subr.bf16.mxu0 0
        %1135 = vmatpush2.bf16.msra.mxu0 0
        %1136 = vmatprep.subr.bf16.mxu0 0
        %1137 = vmatpush2.bf16.msra.mxu0 0
        %1138 = vmatprep.mubr.bf16.mxu0 0
        %1139 = vmatmul.mubr.bf16.gmra.mxu0 %v1101
        %v1140 = vpop.f32.mrf.mxu0
        %v1141 = vadd.f32 0.0, %v1140
        %v1142 = vpop.f32.mrf.mxu0
        %v1143 = vpop.f32.mrf.mxu0
        %v1144 = vpop.f32.mrf.mxu0
        %1145 = vdwg.mxu0
        %v1146 = vadd.f32 %v983, %v1141
        %1147 = vrot.lane.b32.xlu0 %v665, 104
        %v1148 = vpop.permute.xlu0 %1147
        %1149 = vrot.lane.b32.xlu0 %v665, 72
        %v1150 = vpop.permute.xlu0 %1149
        %v1152 = vsel %vm669, %v1148, 0
        %v1155 = vsel %vm669, %v1150, 0
        %1157 = vmatprep.subr.bf16.mxu0 0
        %1158 = vmatpush1.bf16.xpose.msra.mxu0 0
        %1159 = vmatprep.subr.bf16.mxu0 0
        %1160 = vmatpush1.bf16.xpose.msra.mxu0 0
        %1161 = vmatprep.subr.bf16.mxu0 0
        %1162 = vmatpush1.bf16.xpose.msra.mxu0 0
        %1163 = vmatprep.subr.bf16.mxu0 0
        %1164 = vmatpush1.bf16.xpose.msra.mxu0 0
        %1165 = vmatprep.subr.bf16.mxu0 0
        %1166 = vmatpush1.bf16.xpose.msra.mxu0 0
        %1167 = vmatprep.subr.bf16.mxu0 0
        %1168 = vmatpush1.bf16.xpose.msra.mxu0 0
        %1169 = vmatprep.subr.bf16.mxu0 0
        %1170 = vmatpush1.bf16.xpose.msra.mxu0 0
        %1171 = vmatprep.subr.bf16.mxu0 0
        %1172 = vmatpush1.bf16.xpose.msra.mxu0 %v1155
        %1173 = vmatprep.subr.bf16.mxu0 0
        %1174 = vmatpush2.bf16.xpose.msra.mxu0 0
        %1175 = vmatprep.subr.bf16.mxu0 0
        %1176 = vmatpush2.bf16.xpose.msra.mxu0 0
        %1177 = vmatprep.subr.bf16.mxu0 0
        %1178 = vmatpush2.bf16.xpose.msra.mxu0 0
        %1179 = vmatprep.subr.bf16.mxu0 0
        %1180 = vmatpush2.bf16.xpose.msra.mxu0 0
        %1181 = vmatprep.subr.bf16.mxu0 0
        %1182 = vmatpush2.bf16.xpose.msra.mxu0 0
        %1183 = vmatprep.subr.bf16.mxu0 0
        %1184 = vmatpush2.bf16.xpose.msra.mxu0 0
        %1185 = vmatprep.subr.bf16.mxu0 0
        %1186 = vmatpush2.bf16.xpose.msra.mxu0 0
        %1187 = vmatprep.subr.bf16.mxu0 0
        %1188 = vmatpush2.bf16.xpose.msra.mxu0 0
        %1189 = vmatprep.mubr.bf16.mxu0 0
        %1190 = vmatmul.mubr.bf16.gmra.mxu0 %v1152
        %v1191 = vpop.f32.mrf.mxu0
        %v1192 = vadd.f32 0.0, %v1191
        %v1193 = vpop.f32.mrf.mxu0
        %v1194 = vpop.f32.mrf.mxu0
        %v1195 = vpop.f32.mrf.mxu0
        %1196 = vdwg.mxu0
        %v1197 = vsel %vm720, %v1192, -1e+09
        %v1198 = vsel %vm669, %v1197, -inf
        %1199 = vmax.xlane.f32.xlu0 %v1198
        %v1200 = vpop.xlane.xlu0 %1199
        %v1201 = vsub.f32 %v1197, %v1200
        %v1202 = vmul.f32 %v1201, 1.442695
        %v1203 = vpow.pop %v1202
        %v1204 = vsel %vm669, %v1203, 0.0
        %1205 = vadd.xlane.f32.xlu0 %v1204
        %v1206 = vpop.xlane.xlu0 %1205
        %v1207 = vrcp.pop %v1206
        %v1208 = vmul.f32 %v1203, %v1207
        %v1209 = vpack.c.bf16 %v1208, %v1208
        %1210 = vrot.lane.b32.xlu0 %v665, 40
        %v1211 = vpop.permute.xlu0 %1210
        %v1213 = vsel %vm669, %v1209, 0
        %v1216 = vsel %vm739, %v1211, 0
        %1218 = vmatprep.subr.bf16.mxu0 0
        %1219 = vmatpush1.bf16.msra.mxu0 0
        %1220 = vmatprep.subr.bf16.mxu0 0
        %1221 = vmatpush1.bf16.msra.mxu0 0
        %1222 = vmatprep.subr.bf16.mxu0 0
        %1223 = vmatpush1.bf16.msra.mxu0 0
        %1224 = vmatprep.subr.bf16.mxu0 0
        %1225 = vmatpush1.bf16.msra.mxu0 0
        %1226 = vmatprep.subr.bf16.mxu0 0
        %1227 = vmatpush1.bf16.msra.mxu0 0
        %1228 = vmatprep.subr.bf16.mxu0 0
        %1229 = vmatpush1.bf16.msra.mxu0 0
        %1230 = vmatprep.subr.bf16.mxu0 0
        %1231 = vmatpush1.bf16.msra.mxu0 0
        %1232 = vmatprep.subr.bf16.mxu0 0
        %1233 = vmatpush1.bf16.msra.mxu0 %v1216
        %1234 = vmatprep.subr.bf16.mxu0 0
        %1235 = vmatpush2.bf16.msra.mxu0 0
        %1236 = vmatprep.subr.bf16.mxu0 0
        %1237 = vmatpush2.bf16.msra.mxu0 0
        %1238 = vmatprep.subr.bf16.mxu0 0
        %1239 = vmatpush2.bf16.msra.mxu0 0
        %1240 = vmatprep.subr.bf16.mxu0 0
        %1241 = vmatpush2.bf16.msra.mxu0 0
        %1242 = vmatprep.subr.bf16.mxu0 0
        %1243 = vmatpush2.bf16.msra.mxu0 0
        %1244 = vmatprep.subr.bf16.mxu0 0
        %1245 = vmatpush2.bf16.msra.mxu0 0
        %1246 = vmatprep.subr.bf16.mxu0 0
        %1247 = vmatpush2.bf16.msra.mxu0 0
        %1248 = vmatprep.subr.bf16.mxu0 0
        %1249 = vmatpush2.bf16.msra.mxu0 0
        %1250 = vmatprep.mubr.bf16.mxu0 0
        %1251 = vmatmul.mubr.bf16.gmra.mxu0 %v1213
        %v1252 = vpop.f32.mrf.mxu0
        %v1253 = vadd.f32 0.0, %v1252
        %v1254 = vpop.f32.mrf.mxu0
        %v1255 = vpop.f32.mrf.mxu0
        %v1256 = vpop.f32.mrf.mxu0
        %1257 = vdwg.mxu0
        %v1258 = vpack.c.bf16 %v1253, %v1253
        %v1260 = vsel %vm669, %v1258, 0
        %v1263 = vsel %vm739, %v664, 0
        %1265 = vmatprep.subr.bf16.mxu0 0
        %1266 = vmatpush1.bf16.msra.mxu0 0
        %1267 = vmatprep.subr.bf16.mxu0 0
        %1268 = vmatpush1.bf16.msra.mxu0 0
        %1269 = vmatprep.subr.bf16.mxu0 0
        %1270 = vmatpush1.bf16.msra.mxu0 0
        %1271 = vmatprep.subr.bf16.mxu0 0
        %1272 = vmatpush1.bf16.msra.mxu0 0
        %1273 = vmatprep.subr.bf16.mxu0 0
        %1274 = vmatpush1.bf16.msra.mxu0 0
        %1275 = vmatprep.subr.bf16.mxu0 0
        %1276 = vmatpush1.bf16.msra.mxu0 0
        %1277 = vmatprep.subr.bf16.mxu0 0
        %1278 = vmatpush1.bf16.msra.mxu0 0
        %1279 = vmatprep.subr.bf16.mxu0 0
        %1280 = vmatpush1.bf16.msra.mxu0 %v1263
        %1281 = vmatprep.subr.bf16.mxu0 0
        %1282 = vmatpush2.bf16.msra.mxu0 0
        %1283 = vmatprep.subr.bf16.mxu0 0
        %1284 = vmatpush2.bf16.msra.mxu0 0
        %1285 = vmatprep.subr.bf16.mxu0 0
        %1286 = vmatpush2.bf16.msra.mxu0 0
        %1287 = vmatprep.subr.bf16.mxu0 0
        %1288 = vmatpush2.bf16.msra.mxu0 0
        %1289 = vmatprep.subr.bf16.mxu0 0
        %1290 = vmatpush2.bf16.msra.mxu0 0
        %1291 = vmatprep.subr.bf16.mxu0 0
        %1292 = vmatpush2.bf16.msra.mxu0 0
        %1293 = vmatprep.subr.bf16.mxu0 0
        %1294 = vmatpush2.bf16.msra.mxu0 0
        %1295 = vmatprep.subr.bf16.mxu0 0
        %1296 = vmatpush2.bf16.msra.mxu0 0
        %1297 = vmatprep.mubr.bf16.mxu0 0
        %1298 = vmatmul.mubr.bf16.gmra.mxu0 %v1260
        %v1299 = vpop.f32.mrf.mxu0
        %v1300 = vadd.f32 0.0, %v1299
        %v1301 = vpop.f32.mrf.mxu0
        %v1302 = vpop.f32.mrf.mxu0
        %v1303 = vpop.f32.mrf.mxu0
        %1304 = vdwg.mxu0
        %v1305 = vadd.f32 %v1146, %v1300
        %v1306 = vadd.f32 %v562, %v1305
        %v1307 = vld [vmem:[%s12 + $0x1] sm:$0x1]
        %v1308 = vld [vmem:[%s13 + $0x1] sm:$0x1]
        %v1309 = vsel %vm568, %v1306, 0.0
        %1310 = vadd.xlane.f32.xlu0 %v1309
        %v1311 = vpop.xlane.xlu0 %1310
        %v1312 = vmul.f32 %v1311, %v572
        %v1313 = vsub.f32 %v1306, %v1312
        %v1314 = vmul.f32 %v1313, %v1313
        %v1315 = vsel %vm568, %v1314, 0.0
        %1316 = vadd.xlane.f32.xlu0 %v1315
        %v1317 = vpop.xlane.xlu0 %1316
        %v1318 = vmul.f32 %v1317, %v579
        %v1319 = vrsqrt.pop %v1318
        %v1320 = vmul.f32 %v1318, %v1319
        %vm1321 = vcmp.eq.f32.partialorder %v1318, inf
        %v1322 = vsel %vm1321, %v1318, %v1320
        %vm1323 = vcmp.eq.f32.partialorder %v1318, 0.0
        %v1324 = vand.u32 %v1318, 2147483648
        %v1325 = vsel %vm1323, %v1324, %v1322
        %v1326 = vadd.f32 %v1325, 1e-06
        %v1327 = vrcp.pop %v1326
        %v1328 = vlaneseq
        %v1329 = vshrl.u32 %v1328, 7
        %v1330 = vsub.s32 0, %v1329
        %v1331 = vrot.slane %v1307, %v1330
        %v1332 = vmul.f32 %v1331, %v1313
        %v1333 = vmul.f32 %v1332, %v1327
        %v1334 = vlaneseq
        %v1335 = vshrl.u32 %v1334, 7
        %v1336 = vsub.s32 0, %v1335
        %v1337 = vrot.slane %v1308, %v1336
        %v1338 = vadd.f32 %v1333, %v1337
        %v1339 = vpack.c.bf16 %v1338, %v1338
        %v1340 = vld [vmem:[%s5] sm:$0xf]
        %v1341 = vld [vmem:[%s5 + $0x4] sm:$0xf]
        %v1342 = vld [vmem:[%s5 + $0x8] sm:$0xf]
        %v1343 = vld [vmem:[%s5 + $0xc] sm:$0xf]
        %v1348 = vunpack.c.l.b16 %v1340
        %v1349 = vunpack.c.l.b16 %v1341
        %v1350 = vunpack.c.l.b16 %v1342
        %v1351 = vunpack.c.l.b16 %v1343
        %v1352 = vpack.c.b16 %v1349, %v1348
        %v1353 = vpack.c.b16 %v1351, %v1350
        %v1357 = vsel %vm568, %v1339, 0
        %1359 = vmatprep.subr.bf16.mxu0 0
        %1360 = vmatpush1.bf16.msra.mxu0 0
        %1361 = vmatprep.subr.bf16.mxu0 0
        %1362 = vmatpush1.bf16.msra.mxu0 0
        %1363 = vmatprep.subr.bf16.mxu0 0
        %1364 = vmatpush1.bf16.msra.mxu0 0
        %1365 = vmatprep.subr.bf16.mxu0 0
        %1366 = vmatpush1.bf16.msra.mxu0 0
        %1367 = vmatprep.subr.bf16.mxu0 0
        %1368 = vmatpush1.bf16.msra.mxu0 0
        %1369 = vmatprep.subr.bf16.mxu0 0
        %1370 = vmatpush1.bf16.msra.mxu0 0
        %1371 = vmatprep.subr.bf16.mxu0 0
        %1372 = vmatpush1.bf16.msra.mxu0 %v1353
        %1373 = vmatprep.subr.bf16.mxu0 0
        %1374 = vmatpush1.bf16.msra.mxu0 %v1352
        %1375 = vmatprep.subr.bf16.mxu0 0
        %1376 = vmatpush2.bf16.msra.mxu0 0
        %1377 = vmatprep.subr.bf16.mxu0 0
        %1378 = vmatpush2.bf16.msra.mxu0 0
        %1379 = vmatprep.subr.bf16.mxu0 0
        %1380 = vmatpush2.bf16.msra.mxu0 0
        %1381 = vmatprep.subr.bf16.mxu0 0
        %1382 = vmatpush2.bf16.msra.mxu0 0
        %1383 = vmatprep.subr.bf16.mxu0 0
        %1384 = vmatpush2.bf16.msra.mxu0 0
        %1385 = vmatprep.subr.bf16.mxu0 0
        %1386 = vmatpush2.bf16.msra.mxu0 0
        %1387 = vmatprep.subr.bf16.mxu0 0
        %1388 = vmatpush2.bf16.msra.mxu0 0
        %1389 = vmatprep.subr.bf16.mxu0 0
        %1390 = vmatpush2.bf16.msra.mxu0 0
        %1391 = vmatprep.mubr.bf16.mxu0 0
        %1392 = vmatmul.mubr.bf16.gmra.mxu0 %v1357
        %v1393 = vpop.f32.mrf.mxu0
        %v1394 = vadd.f32 0.0, %v1393
        %v1395 = vpop.f32.mrf.mxu0
        %v1396 = vpop.f32.mrf.mxu0
        %v1397 = vpop.f32.mrf.mxu0
        %1398 = vdwg.mxu0
        %v1399 = vld [vmem:[#allocation5] sm:$0xf]
        %v1400 = vld [vmem:[#allocation5 + $0x4] sm:$0xf]
        %v1401 = vld [vmem:[#allocation5 + $0x8] sm:$0xf]
        %v1402 = vld [vmem:[#allocation5 + $0xc] sm:$0xf]
        %v1405 = vunpack.c.l.b16 %v563
        %v1406 = vunpack.c.l.b16 %v564
        %v1407 = vpack.c.b16 %v1406, %v1405
        %v1412 = vunpack.c.l.b16 %v1399
        %v1413 = vunpack.c.l.b16 %v1400
        %v1414 = vunpack.c.l.b16 %v1401
        %v1415 = vunpack.c.l.b16 %v1402
        %v1416 = vpack.c.b16 %v1413, %v1412
        %v1417 = vpack.c.b16 %v1415, %v1414
        %v1421 = vsel %vm568, %v1407, 0
        %1423 = vmatprep.subr.bf16.mxu0 0
        %1424 = vmatpush1.bf16.msra.mxu0 0
        %1425 = vmatprep.subr.bf16.mxu0 0
        %1426 = vmatpush1.bf16.msra.mxu0 0
        %1427 = vmatprep.subr.bf16.mxu0 0
        %1428 = vmatpush1.bf16.msra.mxu0 0
        %1429 = vmatprep.subr.bf16.mxu0 0
        %1430 = vmatpush1.bf16.msra.mxu0 0
        %1431 = vmatprep.subr.bf16.mxu0 0
        %1432 = vmatpush1.bf16.msra.mxu0 0
        %1433 = vmatprep.subr.bf16.mxu0 0
        %1434 = vmatpush1.bf16.msra.mxu0 0
        %1435 = vmatprep.subr.bf16.mxu0 0
        %1436 = vmatpush1.bf16.msra.mxu0 %v1417
        %1437 = vmatprep.subr.bf16.mxu0 0
        %1438 = vmatpush1.bf16.msra.mxu0 %v1416
        %1439 = vmatprep.subr.bf16.mxu0 0
        %1440 = vmatpush2.bf16.msra.mxu0 0
        %1441 = vmatprep.subr.bf16.mxu0 0
        %1442 = vmatpush2.bf16.msra.mxu0 0
        %1443 = vmatprep.subr.bf16.mxu0 0
        %1444 = vmatpush2.bf16.msra.mxu0 0
        %1445 = vmatprep.subr.bf16.mxu0 0
        %1446 = vmatpush2.bf16.msra.mxu0 0
        %1447 = vmatprep.subr.bf16.mxu0 0
        %1448 = vmatpush2.bf16.msra.mxu0 0
        %1449 = vmatprep.subr.bf16.mxu0 0
        %1450 = vmatpush2.bf16.msra.mxu0 0
        %1451 = vmatprep.subr.bf16.mxu0 0
        %1452 = vmatpush2.bf16.msra.mxu0 0
        %1453 = vmatprep.subr.bf16.mxu0 0
        %1454 = vmatpush2.bf16.msra.mxu0 0
        %1455 = vmatprep.mubr.bf16.mxu0 0
        %1456 = vmatmul.mubr.bf16.gmra.mxu0 %v1421
        %v1457 = vpop.f32.mrf.mxu0
        %v1458 = vadd.f32 0.0, %v1457
        %v1459 = vpop.f32.mrf.mxu0
        %v1460 = vpop.f32.mrf.mxu0
        %v1461 = vadd.f32 0.0, %v1460
        %v1462 = vpop.f32.mrf.mxu0
        %1463 = vdwg.mxu0
        %v1464 = vld [vmem:[#allocation7] sm:$0xf]
        %v1465 = vld [vmem:[#allocation7 + $0x4] sm:$0xf]
        %v1466 = vld [vmem:[#allocation7 + $0x8] sm:$0xf]
        %v1467 = vld [vmem:[#allocation7 + $0xc] sm:$0xf]
        %v1468 = vpack.c.bf16 %v1394, %v1394
        %v1469 = vpack.c.bf16 %v1461, %v1458
        %v1471 = vlaneseq
        %v1472 = vshrl.u32 %v1471, 7
        %v1473 = vsub.s32 0, %v1472
        %v1474 = vrot.slane %v565, %v1473
        %v1477 = vsel %vm669, %v1468, 0
        %v1480 = vsel %vm669, %v1469, 0
        %1482 = vmatprep.subr.bf16.mxu0 0
        %1483 = vmatpush1.bf16.xpose.msra.mxu0 0
        %1484 = vmatprep.subr.bf16.mxu0 0
        %1485 = vmatpush1.bf16.xpose.msra.mxu0 0
        %1486 = vmatprep.subr.bf16.mxu0 0
        %1487 = vmatpush1.bf16.xpose.msra.mxu0 0
        %1488 = vmatprep.subr.bf16.mxu0 0
        %1489 = vmatpush1.bf16.xpose.msra.mxu0 0
        %1490 = vmatprep.subr.bf16.mxu0 0
        %1491 = vmatpush1.bf16.xpose.msra.mxu0 0
        %1492 = vmatprep.subr.bf16.mxu0 0
        %1493 = vmatpush1.bf16.xpose.msra.mxu0 0
        %1494 = vmatprep.subr.bf16.mxu0 0
        %1495 = vmatpush1.bf16.xpose.msra.mxu0 0
        %1496 = vmatprep.subr.bf16.mxu0 0
        %1497 = vmatpush1.bf16.xpose.msra.mxu0 %v1480
        %1498 = vmatprep.subr.bf16.mxu0 0
        %1499 = vmatpush2.bf16.xpose.msra.mxu0 0
        %1500 = vmatprep.subr.bf16.mxu0 0
        %1501 = vmatpush2.bf16.xpose.msra.mxu0 0
        %1502 = vmatprep.subr.bf16.mxu0 0
        %1503 = vmatpush2.bf16.xpose.msra.mxu0 0
        %1504 = vmatprep.subr.bf16.mxu0 0
        %1505 = vmatpush2.bf16.xpose.msra.mxu0 0
        %1506 = vmatprep.subr.bf16.mxu0 0
        %1507 = vmatpush2.bf16.xpose.msra.mxu0 0
        %1508 = vmatprep.subr.bf16.mxu0 0
        %1509 = vmatpush2.bf16.xpose.msra.mxu0 0
        %1510 = vmatprep.subr.bf16.mxu0 0
        %1511 = vmatpush2.bf16.xpose.msra.mxu0 0
        %1512 = vmatprep.subr.bf16.mxu0 0
        %1513 = vmatpush2.bf16.xpose.msra.mxu0 0
        %1514 = vmatprep.mubr.bf16.mxu0 0
        %1515 = vmatmul.mubr.bf16.gmra.mxu0 %v1477
        %v1516 = vpop.f32.mrf.mxu0
        %v1517 = vadd.f32 %v1474, %v1516
        %v1518 = vpop.f32.mrf.mxu0
        %v1519 = vpop.f32.mrf.mxu0
        %v1520 = vpop.f32.mrf.mxu0
        %1521 = vdwg.mxu0
        %vm1522 = vcmask 80896
        %v1523 = vsel %vm1522, %v1517, -inf
        %1524 = vmax.xlane.f32.xlu0 %v1523
        %v1525 = vpop.xlane.xlu0 %1524
        %v1526 = vsub.f32 %v1517, %v1525
        %v1527 = vmul.f32 %v1526, 1.442695
        %v1528 = vpow.pop %v1527
        %v1529 = vsel %vm1522, %v1528, 0.0
        %1530 = vadd.xlane.f32.xlu0 %v1529
        %v1531 = vpop.xlane.xlu0 %1530
        %v1532 = vrcp.pop %v1531
        %v1533 = vmul.f32 %v1528, %v1532
        %v1534 = vpack.c.bf16 %v1533, %v1533
        %1536 = vrot.lane.b32.xlu0 %v1469, 96
        %v1537 = vpop.permute.xlu0 %1536
        %v1539 = vsel %vm1522, %v1534, 0
        %vm1541 = vcmask 1044480
        %v1543 = vsel %vm1541, %v1537, 0
        %1545 = vmatprep.subr.bf16.mxu0 0
        %1546 = vmatpush1.bf16.msra.mxu0 0
        %1547 = vmatprep.subr.bf16.mxu0 0
        %1548 = vmatpush1.bf16.msra.mxu0 0
        %1549 = vmatprep.subr.bf16.mxu0 0
        %1550 = vmatpush1.bf16.msra.mxu0 0
        %1551 = vmatprep.subr.bf16.mxu0 0
        %1552 = vmatpush1.bf16.msra.mxu0 0
        %1553 = vmatprep.subr.bf16.mxu0 0
        %1554 = vmatpush1.bf16.msra.mxu0 0
        %1555 = vmatprep.subr.bf16.mxu0 0
        %1556 = vmatpush1.bf16.msra.mxu0 0
        %1557 = vmatprep.subr.bf16.mxu0 0
        %1558 = vmatpush1.bf16.msra.mxu0 0
        %1559 = vmatprep.subr.bf16.mxu0 0
        %1560 = vmatpush1.bf16.msra.mxu0 %v1543
        %1561 = vmatprep.subr.bf16.mxu0 0
        %1562 = vmatpush2.bf16.msra.mxu0 0
        %1563 = vmatprep.subr.bf16.mxu0 0
        %1564 = vmatpush2.bf16.msra.mxu0 0
        %1565 = vmatprep.subr.bf16.mxu0 0
        %1566 = vmatpush2.bf16.msra.mxu0 0
        %1567 = vmatprep.subr.bf16.mxu0 0
        %1568 = vmatpush2.bf16.msra.mxu0 0
        %1569 = vmatprep.subr.bf16.mxu0 0
        %1570 = vmatpush2.bf16.msra.mxu0 0
        %1571 = vmatprep.subr.bf16.mxu0 0
        %1572 = vmatpush2.bf16.msra.mxu0 0
        %1573 = vmatprep.subr.bf16.mxu0 0
        %1574 = vmatpush2.bf16.msra.mxu0 0
        %1575 = vmatprep.subr.bf16.mxu0 0
        %1576 = vmatpush2.bf16.msra.mxu0 0
        %1577 = vmatprep.mubr.bf16.mxu0 0
        %1578 = vmatmul.mubr.bf16.gmra.mxu0 %v1539
        %v1579 = vpop.f32.mrf.mxu0
        %v1580 = vadd.f32 0.0, %v1579
        %v1581 = vpop.f32.mrf.mxu0
        %v1582 = vpop.f32.mrf.mxu0
        %v1583 = vpop.f32.mrf.mxu0
        %1584 = vdwg.mxu0
        %v1585 = vpack.c.bf16 %v1580, %v1580
        %1587 = vrot.lane.b32.xlu0 %v1468, 120
        %v1588 = vpop.permute.xlu0 %1587
        %1589 = vrot.lane.b32.xlu0 %v1469, 120
        %v1590 = vpop.permute.xlu0 %1589
        %v1592 = vsel %vm669, %v1588, 0
        %v1595 = vsel %vm669, %v1590, 0
        %1597 = vmatprep.subr.bf16.mxu0 0
        %1598 = vmatpush1.bf16.xpose.msra.mxu0 0
        %1599 = vmatprep.subr.bf16.mxu0 0
        %1600 = vmatpush1.bf16.xpose.msra.mxu0 0
        %1601 = vmatprep.subr.bf16.mxu0 0
        %1602 = vmatpush1.bf16.xpose.msra.mxu0 0
        %1603 = vmatprep.subr.bf16.mxu0 0
        %1604 = vmatpush1.bf16.xpose.msra.mxu0 0
        %1605 = vmatprep.subr.bf16.mxu0 0
        %1606 = vmatpush1.bf16.xpose.msra.mxu0 0
        %1607 = vmatprep.subr.bf16.mxu0 0
        %1608 = vmatpush1.bf16.xpose.msra.mxu0 0
        %1609 = vmatprep.subr.bf16.mxu0 0
        %1610 = vmatpush1.bf16.xpose.msra.mxu0 0
        %1611 = vmatprep.subr.bf16.mxu0 0
        %1612 = vmatpush1.bf16.xpose.msra.mxu0 %v1595
        %1613 = vmatprep.subr.bf16.mxu0 0
        %1614 = vmatpush2.bf16.xpose.msra.mxu0 0
        %1615 = vmatprep.subr.bf16.mxu0 0
        %1616 = vmatpush2.bf16.xpose.msra.mxu0 0
        %1617 = vmatprep.subr.bf16.mxu0 0
        %1618 = vmatpush2.bf16.xpose.msra.mxu0 0
        %1619 = vmatprep.subr.bf16.mxu0 0
        %1620 = vmatpush2.bf16.xpose.msra.mxu0 0
        %1621 = vmatprep.subr.bf16.mxu0 0
        %1622 = vmatpush2.bf16.xpose.msra.mxu0 0
        %1623 = vmatprep.subr.bf16.mxu0 0
        %1624 = vmatpush2.bf16.xpose.msra.mxu0 0
        %1625 = vmatprep.subr.bf16.mxu0 0
        %1626 = vmatpush2.bf16.xpose.msra.mxu0 0
        %1627 = vmatprep.subr.bf16.mxu0 0
        %1628 = vmatpush2.bf16.xpose.msra.mxu0 0
        %1629 = vmatprep.mubr.bf16.mxu0 0
        %1630 = vmatmul.mubr.bf16.gmra.mxu0 %v1592
        %v1631 = vpop.f32.mrf.mxu0
        %v1632 = vadd.f32 %v1474, %v1631
        %v1633 = vpop.f32.mrf.mxu0
        %v1634 = vpop.f32.mrf.mxu0
        %v1635 = vpop.f32.mrf.mxu0
        %1636 = vdwg.mxu0
        %v1637 = vsel %vm1522, %v1632, -inf
        %1638 = vmax.xlane.f32.xlu0 %v1637
        %v1639 = vpop.xlane.xlu0 %1638
        %v1640 = vsub.f32 %v1632, %v1639
        %v1641 = vmul.f32 %v1640, 1.442695
        %v1642 = vpow.pop %v1641
        %v1643 = vsel %vm1522, %v1642, 0.0
        %1644 = vadd.xlane.f32.xlu0 %v1643
        %v1645 = vpop.xlane.xlu0 %1644
        %v1646 = vrcp.pop %v1645
        %v1647 = vmul.f32 %v1642, %v1646
        %v1648 = vpack.c.bf16 %v1647, %v1647
        %1649 = vrot.lane.b32.xlu0 %v1469, 88
        %v1650 = vpop.permute.xlu0 %1649
        %v1652 = vsel %vm1522, %v1648, 0
        %v1655 = vsel %vm1541, %v1650, 0
        %1657 = vmatprep.subr.bf16.mxu0 0
        %1658 = vmatpush1.bf16.msra.mxu0 0
        %1659 = vmatprep.subr.bf16.mxu0 0
        %1660 = vmatpush1.bf16.msra.mxu0 0
        %1661 = vmatprep.subr.bf16.mxu0 0
        %1662 = vmatpush1.bf16.msra.mxu0 0
        %1663 = vmatprep.subr.bf16.mxu0 0
        %1664 = vmatpush1.bf16.msra.mxu0 0
        %1665 = vmatprep.subr.bf16.mxu0 0
        %1666 = vmatpush1.bf16.msra.mxu0 0
        %1667 = vmatprep.subr.bf16.mxu0 0
        %1668 = vmatpush1.bf16.msra.mxu0 0
        %1669 = vmatprep.subr.bf16.mxu0 0
        %1670 = vmatpush1.bf16.msra.mxu0 0
        %1671 = vmatprep.subr.bf16.mxu0 0
        %1672 = vmatpush1.bf16.msra.mxu0 %v1655
        %1673 = vmatprep.subr.bf16.mxu0 0
        %1674 = vmatpush2.bf16.msra.mxu0 0
        %1675 = vmatprep.subr.bf16.mxu0 0
        %1676 = vmatpush2.bf16.msra.mxu0 0
        %1677 = vmatprep.subr.bf16.mxu0 0
        %1678 = vmatpush2.bf16.msra.mxu0 0
        %1679 = vmatprep.subr.bf16.mxu0 0
        %1680 = vmatpush2.bf16.msra.mxu0 0
        %1681 = vmatprep.subr.bf16.mxu0 0
        %1682 = vmatpush2.bf16.msra.mxu0 0
        %1683 = vmatprep.subr.bf16.mxu0 0
        %1684 = vmatpush2.bf16.msra.mxu0 0
        %1685 = vmatprep.subr.bf16.mxu0 0
        %1686 = vmatpush2.bf16.msra.mxu0 0
        %1687 = vmatprep.subr.bf16.mxu0 0
        %1688 = vmatpush2.bf16.msra.mxu0 0
        %1689 = vmatprep.mubr.bf16.mxu0 0
        %1690 = vmatmul.mubr.bf16.gmra.mxu0 %v1652
        %v1691 = vpop.f32.mrf.mxu0
        %v1692 = vadd.f32 0.0, %v1691
        %v1693 = vpop.f32.mrf.mxu0
        %v1694 = vpop.f32.mrf.mxu0
        %v1695 = vpop.f32.mrf.mxu0
        %1696 = vdwg.mxu0
        %v1697 = vpack.c.bf16 %v1692, %v1692
        %v1699 = vsel %vm669, %v1697, 0
        %v1702 = vsel %vm739, %v1465, 0
        %1704 = vmatprep.subr.bf16.mxu0 0
        %1705 = vmatpush1.bf16.msra.mxu0 0
        %1706 = vmatprep.subr.bf16.mxu0 0
        %1707 = vmatpush1.bf16.msra.mxu0 0
        %1708 = vmatprep.subr.bf16.mxu0 0
        %1709 = vmatpush1.bf16.msra.mxu0 0
        %1710 = vmatprep.subr.bf16.mxu0 0
        %1711 = vmatpush1.bf16.msra.mxu0 0
        %1712 = vmatprep.subr.bf16.mxu0 0
        %1713 = vmatpush1.bf16.msra.mxu0 0
        %1714 = vmatprep.subr.bf16.mxu0 0
        %1715 = vmatpush1.bf16.msra.mxu0 0
        %1716 = vmatprep.subr.bf16.mxu0 0
        %1717 = vmatpush1.bf16.msra.mxu0 0
        %1718 = vmatprep.subr.bf16.mxu0 0
        %1719 = vmatpush1.bf16.msra.mxu0 %v1702
        %1720 = vmatprep.subr.bf16.mxu0 0
        %1721 = vmatpush2.bf16.msra.mxu0 0
        %1722 = vmatprep.subr.bf16.mxu0 0
        %1723 = vmatpush2.bf16.msra.mxu0 0
        %1724 = vmatprep.subr.bf16.mxu0 0
        %1725 = vmatpush2.bf16.msra.mxu0 0
        %1726 = vmatprep.subr.bf16.mxu0 0
        %1727 = vmatpush2.bf16.msra.mxu0 0
        %1728 = vmatprep.subr.bf16.mxu0 0
        %1729 = vmatpush2.bf16.msra.mxu0 0
        %1730 = vmatprep.subr.bf16.mxu0 0
        %1731 = vmatpush2.bf16.msra.mxu0 0
        %1732 = vmatprep.subr.bf16.mxu0 0
        %1733 = vmatpush2.bf16.msra.mxu0 0
        %1734 = vmatprep.subr.bf16.mxu0 0
        %1735 = vmatpush2.bf16.msra.mxu0 0
        %1736 = vmatprep.mubr.bf16.mxu0 0
        %1737 = vmatmul.mubr.bf16.gmra.mxu0 %v1699
        %v1738 = vpop.f32.mrf.mxu0
        %v1739 = vadd.f32 0.0, %v1738
        %v1740 = vpop.f32.mrf.mxu0
        %v1741 = vpop.f32.mrf.mxu0
        %v1742 = vpop.f32.mrf.mxu0
        %1743 = vdwg.mxu0
        %v1745 = vsel %vm669, %v1585, 0
        %v1748 = vsel %vm739, %v1464, 0
        %1750 = vmatprep.subr.bf16.mxu0 0
        %1751 = vmatpush1.bf16.msra.mxu0 0
        %1752 = vmatprep.subr.bf16.mxu0 0
        %1753 = vmatpush1.bf16.msra.mxu0 0
        %1754 = vmatprep.subr.bf16.mxu0 0
        %1755 = vmatpush1.bf16.msra.mxu0 0
        %1756 = vmatprep.subr.bf16.mxu0 0
        %1757 = vmatpush1.bf16.msra.mxu0 0
        %1758 = vmatprep.subr.bf16.mxu0 0
        %1759 = vmatpush1.bf16.msra.mxu0 0
        %1760 = vmatprep.subr.bf16.mxu0 0
        %1761 = vmatpush1.bf16.msra.mxu0 0
        %1762 = vmatprep.subr.bf16.mxu0 0
        %1763 = vmatpush1.bf16.msra.mxu0 0
        %1764 = vmatprep.subr.bf16.mxu0 0
        %1765 = vmatpush1.bf16.msra.mxu0 %v1748
        %1766 = vmatprep.subr.bf16.mxu0 0
        %1767 = vmatpush2.bf16.msra.mxu0 0
        %1768 = vmatprep.subr.bf16.mxu0 0
        %1769 = vmatpush2.bf16.msra.mxu0 0
        %1770 = vmatprep.subr.bf16.mxu0 0
        %1771 = vmatpush2.bf16.msra.mxu0 0
        %1772 = vmatprep.subr.bf16.mxu0 0
        %1773 = vmatpush2.bf16.msra.mxu0 0
        %1774 = vmatprep.subr.bf16.mxu0 0
        %1775 = vmatpush2.bf16.msra.mxu0 0
        %1776 = vmatprep.subr.bf16.mxu0 0
        %1777 = vmatpush2.bf16.msra.mxu0 0
        %1778 = vmatprep.subr.bf16.mxu0 0
        %1779 = vmatpush2.bf16.msra.mxu0 0
        %1780 = vmatprep.subr.bf16.mxu0 0
        %1781 = vmatpush2.bf16.msra.mxu0 0
        %1782 = vmatprep.mubr.bf16.mxu0 0
        %1783 = vmatmul.mubr.bf16.gmra.mxu0 %v1745
        %v1784 = vpop.f32.mrf.mxu0
        %v1785 = vadd.f32 %v1739, %v1784
        %v1786 = vpop.f32.mrf.mxu0
        %v1787 = vpop.f32.mrf.mxu0
        %v1788 = vpop.f32.mrf.mxu0
        %1789 = vdwg.mxu0
        %1790 = vrot.lane.b32.xlu0 %v1468, 112
        %v1791 = vpop.permute.xlu0 %1790
        %1792 = vrot.lane.b32.xlu0 %v1469, 112
        %v1793 = vpop.permute.xlu0 %1792
        %v1795 = vsel %vm669, %v1791, 0
        %v1798 = vsel %vm669, %v1793, 0
        %1800 = vmatprep.subr.bf16.mxu0 0
        %1801 = vmatpush1.bf16.xpose.msra.mxu0 0
        %1802 = vmatprep.subr.bf16.mxu0 0
        %1803 = vmatpush1.bf16.xpose.msra.mxu0 0
        %1804 = vmatprep.subr.bf16.mxu0 0
        %1805 = vmatpush1.bf16.xpose.msra.mxu0 0
        %1806 = vmatprep.subr.bf16.mxu0 0
        %1807 = vmatpush1.bf16.xpose.msra.mxu0 0
        %1808 = vmatprep.subr.bf16.mxu0 0
        %1809 = vmatpush1.bf16.xpose.msra.mxu0 0
        %1810 = vmatprep.subr.bf16.mxu0 0
        %1811 = vmatpush1.bf16.xpose.msra.mxu0 0
        %1812 = vmatprep.subr.bf16.mxu0 0
        %1813 = vmatpush1.bf16.xpose.msra.mxu0 0
        %1814 = vmatprep.subr.bf16.mxu0 0
        %1815 = vmatpush1.bf16.xpose.msra.mxu0 %v1798
        %1816 = vmatprep.subr.bf16.mxu0 0
        %1817 = vmatpush2.bf16.xpose.msra.mxu0 0
        %1818 = vmatprep.subr.bf16.mxu0 0
        %1819 = vmatpush2.bf16.xpose.msra.mxu0 0
        %1820 = vmatprep.subr.bf16.mxu0 0
        %1821 = vmatpush2.bf16.xpose.msra.mxu0 0
        %1822 = vmatprep.subr.bf16.mxu0 0
        %1823 = vmatpush2.bf16.xpose.msra.mxu0 0
        %1824 = vmatprep.subr.bf16.mxu0 0
        %1825 = vmatpush2.bf16.xpose.msra.mxu0 0
        %1826 = vmatprep.subr.bf16.mxu0 0
        %1827 = vmatpush2.bf16.xpose.msra.mxu0 0
        %1828 = vmatprep.subr.bf16.mxu0 0
        %1829 = vmatpush2.bf16.xpose.msra.mxu0 0
        %1830 = vmatprep.subr.bf16.mxu0 0
        %1831 = vmatpush2.bf16.xpose.msra.mxu0 0
        %1832 = vmatprep.mubr.bf16.mxu0 0
        %1833 = vmatmul.mubr.bf16.gmra.mxu0 %v1795
        %v1834 = vpop.f32.mrf.mxu0
        %v1835 = vadd.f32 %v1474, %v1834
        %v1836 = vpop.f32.mrf.mxu0
        %v1837 = vpop.f32.mrf.mxu0
        %v1838 = vpop.f32.mrf.mxu0
        %1839 = vdwg.mxu0
        %v1840 = vsel %vm1522, %v1835, -inf
        %1841 = vmax.xlane.f32.xlu0 %v1840
        %v1842 = vpop.xlane.xlu0 %1841
        %v1843 = vsub.f32 %v1835, %v1842
        %v1844 = vmul.f32 %v1843, 1.442695
        %v1845 = vpow.pop %v1844
        %v1846 = vsel %vm1522, %v1845, 0.0
        %1847 = vadd.xlane.f32.xlu0 %v1846
        %v1848 = vpop.xlane.xlu0 %1847
        %v1849 = vrcp.pop %v1848
        %v1850 = vmul.f32 %v1845, %v1849
        %v1851 = vpack.c.bf16 %v1850, %v1850
        %1852 = vrot.lane.b32.xlu0 %v1469, 80
        %v1853 = vpop.permute.xlu0 %1852
        %v1855 = vsel %vm1522, %v1851, 0
        %v1858 = vsel %vm1541, %v1853, 0
        %1860 = vmatprep.subr.bf16.mxu0 0
        %1861 = vmatpush1.bf16.msra.mxu0 0
        %1862 = vmatprep.subr.bf16.mxu0 0
        %1863 = vmatpush1.bf16.msra.mxu0 0
        %1864 = vmatprep.subr.bf16.mxu0 0
        %1865 = vmatpush1.bf16.msra.mxu0 0
        %1866 = vmatprep.subr.bf16.mxu0 0
        %1867 = vmatpush1.bf16.msra.mxu0 0
        %1868 = vmatprep.subr.bf16.mxu0 0
        %1869 = vmatpush1.bf16.msra.mxu0 0
        %1870 = vmatprep.subr.bf16.mxu0 0
        %1871 = vmatpush1.bf16.msra.mxu0 0
        %1872 = vmatprep.subr.bf16.mxu0 0
        %1873 = vmatpush1.bf16.msra.mxu0 0
        %1874 = vmatprep.subr.bf16.mxu0 0
        %1875 = vmatpush1.bf16.msra.mxu0 %v1858
        %1876 = vmatprep.subr.bf16.mxu0 0
        %1877 = vmatpush2.bf16.msra.mxu0 0
        %1878 = vmatprep.subr.bf16.mxu0 0
        %1879 = vmatpush2.bf16.msra.mxu0 0
        %1880 = vmatprep.subr.bf16.mxu0 0
        %1881 = vmatpush2.bf16.msra.mxu0 0
        %1882 = vmatprep.subr.bf16.mxu0 0
        %1883 = vmatpush2.bf16.msra.mxu0 0
        %1884 = vmatprep.subr.bf16.mxu0 0
        %1885 = vmatpush2.bf16.msra.mxu0 0
        %1886 = vmatprep.subr.bf16.mxu0 0
        %1887 = vmatpush2.bf16.msra.mxu0 0
        %1888 = vmatprep.subr.bf16.mxu0 0
        %1889 = vmatpush2.bf16.msra.mxu0 0
        %1890 = vmatprep.subr.bf16.mxu0 0
        %1891 = vmatpush2.bf16.msra.mxu0 0
        %1892 = vmatprep.mubr.bf16.mxu0 0
        %1893 = vmatmul.mubr.bf16.gmra.mxu0 %v1855
        %v1894 = vpop.f32.mrf.mxu0
        %v1895 = vadd.f32 0.0, %v1894
        %v1896 = vpop.f32.mrf.mxu0
        %v1897 = vpop.f32.mrf.mxu0
        %v1898 = vpop.f32.mrf.mxu0
        %1899 = vdwg.mxu0
        %v1900 = vpack.c.bf16 %v1895, %v1895
        %v1902 = vsel %vm669, %v1900, 0
        %v1905 = vsel %vm739, %v1466, 0
        %1907 = vmatprep.subr.bf16.mxu0 0
        %1908 = vmatpush1.bf16.msra.mxu0 0
        %1909 = vmatprep.subr.bf16.mxu0 0
        %1910 = vmatpush1.bf16.msra.mxu0 0
        %1911 = vmatprep.subr.bf16.mxu0 0
        %1912 = vmatpush1.bf16.msra.mxu0 0
        %1913 = vmatprep.subr.bf16.mxu0 0
        %1914 = vmatpush1.bf16.msra.mxu0 0
        %1915 = vmatprep.subr.bf16.mxu0 0
        %1916 = vmatpush1.bf16.msra.mxu0 0
        %1917 = vmatprep.subr.bf16.mxu0 0
        %1918 = vmatpush1.bf16.msra.mxu0 0
        %1919 = vmatprep.subr.bf16.mxu0 0
        %1920 = vmatpush1.bf16.msra.mxu0 0
        %1921 = vmatprep.subr.bf16.mxu0 0
        %1922 = vmatpush1.bf16.msra.mxu0 %v1905
        %1923 = vmatprep.subr.bf16.mxu0 0
        %1924 = vmatpush2.bf16.msra.mxu0 0
        %1925 = vmatprep.subr.bf16.mxu0 0
        %1926 = vmatpush2.bf16.msra.mxu0 0
        %1927 = vmatprep.subr.bf16.mxu0 0
        %1928 = vmatpush2.bf16.msra.mxu0 0
        %1929 = vmatprep.subr.bf16.mxu0 0
        %1930 = vmatpush2.bf16.msra.mxu0 0
        %1931 = vmatprep.subr.bf16.mxu0 0
        %1932 = vmatpush2.bf16.msra.mxu0 0
        %1933 = vmatprep.subr.bf16.mxu0 0
        %1934 = vmatpush2.bf16.msra.mxu0 0
        %1935 = vmatprep.subr.bf16.mxu0 0
        %1936 = vmatpush2.bf16.msra.mxu0 0
        %1937 = vmatprep.subr.bf16.mxu0 0
        %1938 = vmatpush2.bf16.msra.mxu0 0
        %1939 = vmatprep.mubr.bf16.mxu0 0
        %1940 = vmatmul.mubr.bf16.gmra.mxu0 %v1902
        %v1941 = vpop.f32.mrf.mxu0
        %v1942 = vadd.f32 0.0, %v1941
        %v1943 = vpop.f32.mrf.mxu0
        %v1944 = vpop.f32.mrf.mxu0
        %v1945 = vpop.f32.mrf.mxu0
        %1946 = vdwg.mxu0
        %v1947 = vadd.f32 %v1785, %v1942
        %1948 = vrot.lane.b32.xlu0 %v1468, 104
        %v1949 = vpop.permute.xlu0 %1948
        %1950 = vrot.lane.b32.xlu0 %v1469, 104
        %v1951 = vpop.permute.xlu0 %1950
        %v1953 = vsel %vm669, %v1949, 0
        %v1956 = vsel %vm669, %v1951, 0
        %1958 = vmatprep.subr.bf16.mxu0 0
        %1959 = vmatpush1.bf16.xpose.msra.mxu0 0
        %1960 = vmatprep.subr.bf16.mxu0 0
        %1961 = vmatpush1.bf16.xpose.msra.mxu0 0
        %1962 = vmatprep.subr.bf16.mxu0 0
        %1963 = vmatpush1.bf16.xpose.msra.mxu0 0
        %1964 = vmatprep.subr.bf16.mxu0 0
        %1965 = vmatpush1.bf16.xpose.msra.mxu0 0
        %1966 = vmatprep.subr.bf16.mxu0 0
        %1967 = vmatpush1.bf16.xpose.msra.mxu0 0
        %1968 = vmatprep.subr.bf16.mxu0 0
        %1969 = vmatpush1.bf16.xpose.msra.mxu0 0
        %1970 = vmatprep.subr.bf16.mxu0 0
        %1971 = vmatpush1.bf16.xpose.msra.mxu0 0
        %1972 = vmatprep.subr.bf16.mxu0 0
        %1973 = vmatpush1.bf16.xpose.msra.mxu0 %v1956
        %1974 = vmatprep.subr.bf16.mxu0 0
        %1975 = vmatpush2.bf16.xpose.msra.mxu0 0
        %1976 = vmatprep.subr.bf16.mxu0 0
        %1977 = vmatpush2.bf16.xpose.msra.mxu0 0
        %1978 = vmatprep.subr.bf16.mxu0 0
        %1979 = vmatpush2.bf16.xpose.msra.mxu0 0
        %1980 = vmatprep.subr.bf16.mxu0 0
        %1981 = vmatpush2.bf16.xpose.msra.mxu0 0
        %1982 = vmatprep.subr.bf16.mxu0 0
        %1983 = vmatpush2.bf16.xpose.msra.mxu0 0
        %1984 = vmatprep.subr.bf16.mxu0 0
        %1985 = vmatpush2.bf16.xpose.msra.mxu0 0
        %1986 = vmatprep.subr.bf16.mxu0 0
        %1987 = vmatpush2.bf16.xpose.msra.mxu0 0
        %1988 = vmatprep.subr.bf16.mxu0 0
        %1989 = vmatpush2.bf16.xpose.msra.mxu0 0
        %1990 = vmatprep.mubr.bf16.mxu0 0
        %1991 = vmatmul.mubr.bf16.gmra.mxu0 %v1953
        %v1992 = vpop.f32.mrf.mxu0
        %v1993 = vadd.f32 %v1474, %v1992
        %v1994 = vpop.f32.mrf.mxu0
        %v1995 = vpop.f32.mrf.mxu0
        %v1996 = vpop.f32.mrf.mxu0
        %1997 = vdwg.mxu0
        %v1998 = vsel %vm1522, %v1993, -inf
        %1999 = vmax.xlane.f32.xlu0 %v1998
        %v2000 = vpop.xlane.xlu0 %1999
        %v2001 = vsub.f32 %v1993, %v2000
        %v2002 = vmul.f32 %v2001, 1.442695
        %v2003 = vpow.pop %v2002
        %v2004 = vsel %vm1522, %v2003, 0.0
        %2005 = vadd.xlane.f32.xlu0 %v2004
        %v2006 = vpop.xlane.xlu0 %2005
        %v2007 = vrcp.pop %v2006
        %v2008 = vmul.f32 %v2003, %v2007
        %v2009 = vpack.c.bf16 %v2008, %v2008
        %2010 = vrot.lane.b32.xlu0 %v1469, 72
        %v2011 = vpop.permute.xlu0 %2010
        %v2013 = vsel %vm1522, %v2009, 0
        %v2016 = vsel %vm1541, %v2011, 0
        %2018 = vmatprep.subr.bf16.mxu0 0
        %2019 = vmatpush1.bf16.msra.mxu0 0
        %2020 = vmatprep.subr.bf16.mxu0 0
        %2021 = vmatpush1.bf16.msra.mxu0 0
        %2022 = vmatprep.subr.bf16.mxu0 0
        %2023 = vmatpush1.bf16.msra.mxu0 0
        %2024 = vmatprep.subr.bf16.mxu0 0
        %2025 = vmatpush1.bf16.msra.mxu0 0
        %2026 = vmatprep.subr.bf16.mxu0 0
        %2027 = vmatpush1.bf16.msra.mxu0 0
        %2028 = vmatprep.subr.bf16.mxu0 0
        %2029 = vmatpush1.bf16.msra.mxu0 0
        %2030 = vmatprep.subr.bf16.mxu0 0
        %2031 = vmatpush1.bf16.msra.mxu0 0
        %2032 = vmatprep.subr.bf16.mxu0 0
        %2033 = vmatpush1.bf16.msra.mxu0 %v2016
        %2034 = vmatprep.subr.bf16.mxu0 0
        %2035 = vmatpush2.bf16.msra.mxu0 0
        %2036 = vmatprep.subr.bf16.mxu0 0
        %2037 = vmatpush2.bf16.msra.mxu0 0
        %2038 = vmatprep.subr.bf16.mxu0 0
        %2039 = vmatpush2.bf16.msra.mxu0 0
        %2040 = vmatprep.subr.bf16.mxu0 0
        %2041 = vmatpush2.bf16.msra.mxu0 0
        %2042 = vmatprep.subr.bf16.mxu0 0
        %2043 = vmatpush2.bf16.msra.mxu0 0
        %2044 = vmatprep.subr.bf16.mxu0 0
        %2045 = vmatpush2.bf16.msra.mxu0 0
        %2046 = vmatprep.subr.bf16.mxu0 0
        %2047 = vmatpush2.bf16.msra.mxu0 0
        %2048 = vmatprep.subr.bf16.mxu0 0
        %2049 = vmatpush2.bf16.msra.mxu0 0
        %2050 = vmatprep.mubr.bf16.mxu0 0
        %2051 = vmatmul.mubr.bf16.gmra.mxu0 %v2013
        %v2052 = vpop.f32.mrf.mxu0
        %v2053 = vadd.f32 0.0, %v2052
        %v2054 = vpop.f32.mrf.mxu0
        %v2055 = vpop.f32.mrf.mxu0
        %v2056 = vpop.f32.mrf.mxu0
        %2057 = vdwg.mxu0
        %v2058 = vpack.c.bf16 %v2053, %v2053
        %v2060 = vsel %vm669, %v2058, 0
        %v2063 = vsel %vm739, %v1467, 0
        %2065 = vmatprep.subr.bf16.mxu0 0
        %2066 = vmatpush1.bf16.msra.mxu0 0
        %2067 = vmatprep.subr.bf16.mxu0 0
        %2068 = vmatpush1.bf16.msra.mxu0 0
        %2069 = vmatprep.subr.bf16.mxu0 0
        %2070 = vmatpush1.bf16.msra.mxu0 0
        %2071 = vmatprep.subr.bf16.mxu0 0
        %2072 = vmatpush1.bf16.msra.mxu0 0
        %2073 = vmatprep.subr.bf16.mxu0 0
        %2074 = vmatpush1.bf16.msra.mxu0 0
        %2075 = vmatprep.subr.bf16.mxu0 0
        %2076 = vmatpush1.bf16.msra.mxu0 0
        %2077 = vmatprep.subr.bf16.mxu0 0
        %2078 = vmatpush1.bf16.msra.mxu0 0
        %2079 = vmatprep.subr.bf16.mxu0 0
        %2080 = vmatpush1.bf16.msra.mxu0 %v2063
        %2081 = vmatprep.subr.bf16.mxu0 0
        %2082 = vmatpush2.bf16.msra.mxu0 0
        %2083 = vmatprep.subr.bf16.mxu0 0
        %2084 = vmatpush2.bf16.msra.mxu0 0
        %2085 = vmatprep.subr.bf16.mxu0 0
        %2086 = vmatpush2.bf16.msra.mxu0 0
        %2087 = vmatprep.subr.bf16.mxu0 0
        %2088 = vmatpush2.bf16.msra.mxu0 0
        %2089 = vmatprep.subr.bf16.mxu0 0
        %2090 = vmatpush2.bf16.msra.mxu0 0
        %2091 = vmatprep.subr.bf16.mxu0 0
        %2092 = vmatpush2.bf16.msra.mxu0 0
        %2093 = vmatprep.subr.bf16.mxu0 0
        %2094 = vmatpush2.bf16.msra.mxu0 0
        %2095 = vmatprep.subr.bf16.mxu0 0
        %2096 = vmatpush2.bf16.msra.mxu0 0
        %2097 = vmatprep.mubr.bf16.mxu0 0
        %2098 = vmatmul.mubr.bf16.gmra.mxu0 %v2060
        %v2099 = vpop.f32.mrf.mxu0
        %v2100 = vadd.f32 0.0, %v2099
        %v2101 = vpop.f32.mrf.mxu0
        %v2102 = vpop.f32.mrf.mxu0
        %v2103 = vpop.f32.mrf.mxu0
        %2104 = vdwg.mxu0
        %v2105 = vadd.f32 %v1947, %v2100
        %v2106 = vadd.f32 %v1306, %v2105
        %v2107 = vld [vmem:[%s12 + $0x2] sm:$0x1]
        %v2108 = vld [vmem:[%s13 + $0x2] sm:$0x1]
        %v2109 = vsel %vm568, %v2106, 0.0
        %2110 = vadd.xlane.f32.xlu0 %v2109
        %v2111 = vpop.xlane.xlu0 %2110
        %v2112 = vmul.f32 %v2111, %v572
        %v2113 = vsub.f32 %v2106, %v2112
        %v2114 = vmul.f32 %v2113, %v2113
        %v2115 = vsel %vm568, %v2114, 0.0
        %2116 = vadd.xlane.f32.xlu0 %v2115
        %v2117 = vpop.xlane.xlu0 %2116
        %v2118 = vmul.f32 %v2117, %v579
        %v2119 = vrsqrt.pop %v2118
        %v2120 = vmul.f32 %v2118, %v2119
        %vm2121 = vcmp.eq.f32.partialorder %v2118, inf
        %v2122 = vsel %vm2121, %v2118, %v2120
        %vm2123 = vcmp.eq.f32.partialorder %v2118, 0.0
        %v2124 = vand.u32 %v2118, 2147483648
        %v2125 = vsel %vm2123, %v2124, %v2122
        %v2126 = vadd.f32 %v2125, 1e-06
        %v2127 = vrcp.pop %v2126
        %v2128 = vlaneseq
        %v2129 = vshrl.u32 %v2128, 7
        %v2130 = vsub.s32 0, %v2129
        %v2131 = vrot.slane %v2107, %v2130
        %v2132 = vmul.f32 %v2131, %v2113
        %v2133 = vmul.f32 %v2132, %v2127
        %v2134 = vlaneseq
        %v2135 = vshrl.u32 %v2134, 7
        %v2136 = vsub.s32 0, %v2135
        %v2137 = vrot.slane %v2108, %v2136
        %v2138 = vadd.f32 %v2133, %v2137
        %v2139 = vpack.c.bf16 %v2138, %v2138
        %v2140 = vld [vmem:[#allocation8] sm:$0xf]
        %v2141 = vld [vmem:[#allocation8 + $0x4] sm:$0xf]
        %v2142 = vld [vmem:[#allocation8 + $0x8] sm:$0xf]
        %v2143 = vld [vmem:[#allocation8 + $0xc] sm:$0xf]
        %v2144 = vld [vmem:[%s9] sm:$0x1]
        %v2146 = vlaneseq
        %v2147 = vshrl.u32 %v2146, 7
        %v2148 = vsub.s32 0, %v2147
        %v2149 = vrot.slane %v2144, %v2148
        %v2155 = vunpack.c.l.b16 %v2140
        %v2156 = vunpack.c.l.b16 %v2141
        %v2157 = vunpack.c.l.b16 %v2142
        %v2158 = vunpack.c.l.b16 %v2143
        %v2159 = vpack.c.b16 %v2156, %v2155
        %v2160 = vpack.c.b16 %v2158, %v2157
        %v2164 = vsel %vm568, %v2139, 0
        %2166 = vmatprep.subr.bf16.mxu0 0
        %2167 = vmatpush1.bf16.msra.mxu0 0
        %2168 = vmatprep.subr.bf16.mxu0 0
        %2169 = vmatpush1.bf16.msra.mxu0 0
        %2170 = vmatprep.subr.bf16.mxu0 0
        %2171 = vmatpush1.bf16.msra.mxu0 0
        %2172 = vmatprep.subr.bf16.mxu0 0
        %2173 = vmatpush1.bf16.msra.mxu0 0
        %2174 = vmatprep.subr.bf16.mxu0 0
        %2175 = vmatpush1.bf16.msra.mxu0 0
        %2176 = vmatprep.subr.bf16.mxu0 0
        %2177 = vmatpush1.bf16.msra.mxu0 0
        %2178 = vmatprep.subr.bf16.mxu0 0
        %2179 = vmatpush1.bf16.msra.mxu0 %v2160
        %2180 = vmatprep.subr.bf16.mxu0 0
        %2181 = vmatpush1.bf16.msra.mxu0 %v2159
        %2182 = vmatprep.subr.bf16.mxu0 0
        %2183 = vmatpush2.bf16.msra.mxu0 0
        %2184 = vmatprep.subr.bf16.mxu0 0
        %2185 = vmatpush2.bf16.msra.mxu0 0
        %2186 = vmatprep.subr.bf16.mxu0 0
        %2187 = vmatpush2.bf16.msra.mxu0 0
        %2188 = vmatprep.subr.bf16.mxu0 0
        %2189 = vmatpush2.bf16.msra.mxu0 0
        %2190 = vmatprep.subr.bf16.mxu0 0
        %2191 = vmatpush2.bf16.msra.mxu0 0
        %2192 = vmatprep.subr.bf16.mxu0 0
        %2193 = vmatpush2.bf16.msra.mxu0 0
        %2194 = vmatprep.subr.bf16.mxu0 0
        %2195 = vmatpush2.bf16.msra.mxu0 0
        %2196 = vmatprep.subr.bf16.mxu0 0
        %2197 = vmatpush2.bf16.msra.mxu0 0
        %2198 = vmatprep.mubr.bf16.mxu0 0
        %2199 = vmatmul.mubr.bf16.gmra.mxu0 %v2164
        %v2200 = vpop.f32.mrf.mxu0
        %v2201 = vadd.f32 %v2149, %v2200
        %v2202 = vpop.f32.mrf.mxu0
        %v2203 = vpop.f32.mrf.mxu0
        %v2204 = vpop.f32.mrf.mxu0
        %2205 = vdwg.mxu0
        %v2206 = vmax.f32 %v2201, 0.0
        %v2207 = vpack.c.bf16 %v2206, %v2206
        %v2208 = vld [vmem:[%s10] sm:$0xf]
        %v2209 = vld [vmem:[%s10 + $0x4] sm:$0xf]
        %v2210 = vld [vmem:[%s10 + $0x8] sm:$0xf]
        %v2211 = vld [vmem:[%s10 + $0xc] sm:$0xf]
        %v2212 = vld [vmem:[%s10 + $0x10] sm:$0xf]
        %v2213 = vld [vmem:[%s10 + $0x14] sm:$0xf]
        %v2214 = vld [vmem:[%s10 + $0x18] sm:$0xf]
        %v2215 = vld [vmem:[%s10 + $0x1c] sm:$0xf]
        %v2216 = vld [vmem:[%s11] sm:$0x1]
        %v2218 = vlaneseq
        %v2219 = vshrl.u32 %v2218, 7
        %v2220 = vsub.s32 0, %v2219
        %v2221 = vrot.slane %v2216, %v2220
        %v2231 = vunpack.c.l.b16 %v2208
        %v2232 = vunpack.c.l.b16 %v2209
        %v2233 = vunpack.c.l.b16 %v2210
        %v2234 = vunpack.c.l.b16 %v2211
        %v2235 = vunpack.c.l.b16 %v2212
        %v2236 = vunpack.c.l.b16 %v2213
        %v2237 = vunpack.c.l.b16 %v2214
        %v2238 = vunpack.c.l.b16 %v2215
        %v2239 = vpack.c.b16 %v2232, %v2231
        %v2240 = vpack.c.b16 %v2234, %v2233
        %v2241 = vpack.c.b16 %v2236, %v2235
        %v2242 = vpack.c.b16 %v2238, %v2237
        %vm2247 = vcmask 523264
        %v2249 = vsel %vm2247, %v2207, 0
        %2251 = vmatprep.subr.bf16.mxu0 0
        %2252 = vmatpush1.bf16.msra.mxu0 0
        %2253 = vmatprep.subr.bf16.mxu0 0
        %2254 = vmatpush1.bf16.msra.mxu0 0
        %2255 = vmatprep.subr.bf16.mxu0 0
        %2256 = vmatpush1.bf16.msra.mxu0 0
        %2257 = vmatprep.subr.bf16.mxu0 0
        %2258 = vmatpush1.bf16.msra.mxu0 0
        %2259 = vmatprep.subr.bf16.mxu0 0
        %2260 = vmatpush1.bf16.msra.mxu0 %v2242
        %2261 = vmatprep.subr.bf16.mxu0 0
        %2262 = vmatpush1.bf16.msra.mxu0 %v2241
        %2263 = vmatprep.subr.bf16.mxu0 0
        %2264 = vmatpush1.bf16.msra.mxu0 %v2240
        %2265 = vmatprep.subr.bf16.mxu0 0
        %2266 = vmatpush1.bf16.msra.mxu0 %v2239
        %2267 = vmatprep.subr.bf16.mxu0 0
        %2268 = vmatpush2.bf16.msra.mxu0 0
        %2269 = vmatprep.subr.bf16.mxu0 0
        %2270 = vmatpush2.bf16.msra.mxu0 0
        %2271 = vmatprep.subr.bf16.mxu0 0
        %2272 = vmatpush2.bf16.msra.mxu0 0
        %2273 = vmatprep.subr.bf16.mxu0 0
        %2274 = vmatpush2.bf16.msra.mxu0 0
        %2275 = vmatprep.subr.bf16.mxu0 0
        %2276 = vmatpush2.bf16.msra.mxu0 0
        %2277 = vmatprep.subr.bf16.mxu0 0
        %2278 = vmatpush2.bf16.msra.mxu0 0
        %2279 = vmatprep.subr.bf16.mxu0 0
        %2280 = vmatpush2.bf16.msra.mxu0 0
        %2281 = vmatprep.subr.bf16.mxu0 0
        %2282 = vmatpush2.bf16.msra.mxu0 0
        %2283 = vmatprep.mubr.bf16.mxu0 0
        %2284 = vmatmul.mubr.bf16.gmra.mxu0 %v2249
        %v2285 = vpop.f32.mrf.mxu0
        %v2286 = vadd.f32 %v2221, %v2285
        %v2287 = vpop.f32.mrf.mxu0
        %v2288 = vpop.f32.mrf.mxu0
        %v2289 = vpop.f32.mrf.mxu0
        %2290 = vdwg.mxu0
        %v2291 = vadd.f32 %v2106, %v2286
        %2292 = vst.msk [vmem:[%s551] sm:$0xff] %vm568, %v2291
        %s2293 = sand.u32 %s350, 1
        %s2294 = scalar_lea.sflag [#allocation4], %s2293
        %s2295 = sand.u32 %s350, 1
        %s2296 = smul.addr %s2295, 8
        %s2297 = scalar_lea.vmem [#allocation10], %s2296
        // Predicated region
        $region93: #{tpu_custom_call.1} parent=75 // pred_check
          %p2298 = pneg %p360
        $region94: #{tpu_custom_call.1} parent=75 // pred_check_branch
          %2300 = sbr.rel (%p2298) target = $region96
        $region95: #{tpu_custom_call.1} parent=75 // pred_region
          %s2302 = ssub.s32 128, 128
          %2303 = vsyncadd %s2294, %s2302
          %s2304 = smul.addr %s33, 128
          %s2305 = scalar_lea.hbm %s14, %s2304
          %s2307 = sshll.u32 %s2297, 4
          %s2308 = int_to_ptr.vmem [resolvable:$true] %s2307
          %2310 = dma.vmem_to_hbm [thread:$0]  %s2308, 128, %s2305, %s2294
        $region96: #{tpu_custom_call.1} parent=75 // pred_fallthru
          _
      $region76: #{tpu_custom_call.1} parent=5 // pred_fallthru
        _
      %p2311 = scmp.le.s32.totalorder 2, %s28
      // Predicated region
      $region97: #{tpu_custom_call.1} parent=5 // pred_check
        %p2312 = pneg %p2311
      $region98: #{tpu_custom_call.1} parent=5 // pred_check_branch
        %2314 = sbr.rel (%p2312) target = $region100
      $region99: #{tpu_custom_call.1} parent=5 // pred_region
        %s2315 = ssub.s32 %s28, 2
        // Predicated region
        $region101: #{tpu_custom_call.1} parent=99 // pred_check
          %p2316 = pneg %p366
        $region102: #{tpu_custom_call.1} parent=99 // pred_check_branch
          %2318 = sbr.rel (%p2316) target = $region104
        $region103: #{tpu_custom_call.1} parent=99 // pred_region
          %s2319 = sand.u32 %s351, 1
          %s2320 = scalar_lea.sflag [#allocation4], %s2319
          %s2321 = sand.u32 %s351, 1
          %s2322 = smul.addr %s2321, 8
          %s2323 = scalar_lea.vmem [#allocation10], %s2322
          %2324 = dma.done %s2320, 128
        $region104: #{tpu_custom_call.1} parent=99 // pred_fallthru
          _
      $region100: #{tpu_custom_call.1} parent=5 // pred_fallthru
        _
    $region6: #{tpu_custom_call.1} parent=1 // loop_footer
      %s32 = sadd.s32 1, %s28
    $region7: #{tpu_custom_call.1} parent=1 // loop_footer_branch
      %27 = sbr.rel target = $region3
    $region8: #{tpu_custom_call.1} parent=1 // loop_exit
      _
    %2325 = vsyncpa [#allocation3], 1
    %s2326 = scalar_lea.sflag [#allocation3], 1
    %2327 = vsyncpa %s2326, 1
    %2328 = vsyncpa [#allocation6], 1
    %2329 = vsyncpa [#allocation9], 1
    %2330 = vsyncpa [#allocation4], 1
    %s2331 = scalar_lea.sflag [#allocation4], 1
    %2332 = vsyncpa %s2331, 1

// kernel: tpu_custom_call.1
$region0: #{tpu_custom_call.1}
  #allocation0 [shape = 'u32[]', space=smem, size = 0x4, offset = 0x4, fixed_abs, tag = 'smem constant byte address 0x4 - core index']
  #allocation1 [shape = 'u32[144,128]{1,0:T(1,128)}', space=vmem, size = 0x12000, scoped, tag = 'internal scratch']
  %s0 = inlined_call_operand.vmem [shape: f32[2,8,32], index: 0, kind: input, shape index: {}]
  %s1 = inlined_call_operand.vmem [shape: bf16[2,10,32], index: 1, kind: input, shape index: {}]
  %s2 = inlined_call_operand.hbm [shape: f32[2,1,10], index: 2, kind: input, shape index: {}]
  %s3 = inlined_call_operand.vmem [shape: bf16[32,96], index: 3, kind: input, shape index: {}]
  %s4 = inlined_call_operand.vmem [shape: bf16[32,32], index: 4, kind: input, shape index: {}]
  %s5 = inlined_call_operand.vmem [shape: bf16[32,32], index: 5, kind: input, shape index: {}]
  %s6 = inlined_call_operand.hbm [shape: bf16[32,64], index: 6, kind: input, shape index: {}]
  %s7 = inlined_call_operand.hbm [shape: bf16[32,32], index: 7, kind: input, shape index: {}]
  %s8 = inlined_call_operand.hbm [shape: bf16[32,64], index: 8, kind: input, shape index: {}]
  %s9 = inlined_call_operand.vmem [shape: f32[1,64], index: 9, kind: input, shape index: {}]
  %s10 = inlined_call_operand.vmem [shape: bf16[64,32], index: 10, kind: input, shape index: {}]
  %s11 = inlined_call_operand.vmem [shape: f32[1,32], index: 11, kind: input, shape index: {}]
  %s12 = inlined_call_operand.vmem [shape: f32[3,32], index: 12, kind: input, shape index: {}]
  %s13 = inlined_call_operand.vmem [shape: f32[3,32], index: 13, kind: input, shape index: {}]
  %s14 = inlined_call_operand.hbm [shape: f32[2,8,32], index: 14, kind: output, shape index: {}]
  %s15 = sld [smem:[#allocation0]]
  $region105: #{tpu_custom_call.1} parent=0
    _
  %s17 = ssub.s32 1, %s15
  %s18 = scalar_select 0, %s17, %s15
  $region1: #{tpu_custom_call.1} parent=0
    #allocation2 [shape = 'u8[1024]{0}', space=vmem, size = 0x400, scoped, tag = 'input window, operand 2']
    #allocation3 [shape = 's32[2]{0}', space=sflag, size = 0x8, scoped, tag = 'scoped memory for tpu_custom_call.1']
    #allocation4 [shape = 's32[2]{0}', space=sflag, size = 0x8, scoped, tag = 'scoped memory for tpu_custom_call.1']
    #allocation5 [shape = 'u8[8192]{0}', space=vmem, size = 0x2000, scoped, tag = 'input window, operand 6, single buffered']
    #allocation6 [shape = 's32[1]{0}', space=sflag, size = 0x4, scoped, tag = 'scoped memory for tpu_custom_call.1']
    #allocation7 [shape = 'u8[8192]{0}', space=vmem, size = 0x2000, scoped, tag = 'input window, operand 7, single buffered']
    #allocation8 [shape = 'u8[8192]{0}', space=vmem, size = 0x2000, scoped, tag = 'input window, operand 8, single buffered']
    #allocation9 [shape = 's32[1]{0}', space=sflag, size = 0x4, scoped, tag = 'scoped memory for tpu_custom_call.1']
    #allocation10 [shape = 'u8[8192]{0}', space=vmem, size = 0x2000, scoped, tag = 'output window, operand 0']
    %19 = vsyncpa [#allocation3], 0
    %s20 = scalar_lea.sflag [#allocation3], 1
    %21 = vsyncpa %s20, 0
    %22 = vsyncpa [#allocation6], 0
    %23 = vsyncpa [#allocation9], 0
    %24 = vsyncpa [#allocation4], 0
    %s25 = scalar_lea.sflag [#allocation4], 1
    %26 = vsyncpa %s25, 0
    loop: start=0, step=1, limit=4
    $region2: #{tpu_custom_call.1} parent=1 // loop_pre_header
      _
    $region3: #{tpu_custom_call.1} parent=1 // loop_header
      %s28 = sphi 0, %s32
      %p29 = scmp.ge.s32.totalorder %s28, 4
      %s38 = sphi 0, %s40
      %s41 = sphi 0, %s38
      %s42 = sphi 0, %s41
      %s58 = sphi 0, %s42
      %s64 = sphi 0, %s66
      %s67 = sphi 0, %s64
      %s68 = sphi 0, %s67
      %s84 = sphi 0, %s68
      %s90 = sphi 0, %s92
      %s93 = sphi 0, %s90
      %s94 = sphi 0, %s93
      %s110 = sphi 0, %s94
      %s114 = sphi 0, %s114
      %s116 = sphi 0, %s114
      %s117 = sphi 0, %s116
      %s131 = sphi 0, %s117
      %s135 = sphi 0, %s135
      %s137 = sphi 0, %s135
      %s138 = sphi 0, %s137
      %s152 = sphi 0, %s138
      %s156 = sphi 0, %s156
      %s158 = sphi 0, %s156
      %s159 = sphi 0, %s158
      %s173 = sphi 0, %s159
      %s177 = sphi 0, %s177
      %s179 = sphi 0, %s177
      %s180 = sphi 0, %s179
      %s194 = sphi 0, %s180
      %s198 = sphi 0, %s198
      %s200 = sphi 0, %s198
      %s201 = sphi 0, %s200
      %s215 = sphi 0, %s201
      %s219 = sphi 0, %s219
      %s221 = sphi 0, %s219
      %s222 = sphi 0, %s221
      %s236 = sphi 0, %s222
      %s240 = sphi 0, %s240
      %s242 = sphi 0, %s240
      %s243 = sphi 0, %s242
      %s257 = sphi 0, %s243
      %s261 = sphi 0, %s261
      %s263 = sphi 0, %s261
      %s264 = sphi 0, %s263
      %s278 = sphi 0, %s264
      %s282 = sphi 0, %s282
      %s284 = sphi 0, %s282
      %s285 = sphi 0, %s284
      %s299 = sphi 0, %s285
      %s303 = sphi 0, %s303
      %s305 = sphi 0, %s303
      %s306 = sphi 0, %s305
      %s320 = sphi 0, %s306
      %s324 = sphi 0, %s324
      %s326 = sphi 0, %s324
      %s327 = sphi 0, %s326
      %s341 = sphi 0, %s327
      %s347 = sphi 0, %s349
      %s350 = sphi 0, %s347
      %s351 = sphi 0, %s350
      %s367 = sphi 0, %s351
    $region4: #{tpu_custom_call.1} parent=1 // loop_header_branch
      %31 = sbr.rel (%p29) target = $region8
    $region5: #{tpu_custom_call.1} parent=1 // loop_body
      %s33 = ssub.s32 %s28, 1
      %s34 = ssub.s32 %s28, 2
      %s35 = sadd.s32 %s28, 1
      %s36 = ssub.s32 %s28, %s35
      %p37 = scmp.eq.s32.totalorder %s36, 0
      %s39 = sadd.s32 %s38, 1
      %s40 = scalar_select %p37, %s38, %s39
      %p43 = pneg %p37
      %p44 = scmp.eq.s32.totalorder %s28, 1
      %p45 = por %p43, %p44
      %p46 = scmp.ne.s32.totalorder %s38, %s41
      %p47 = scmp.eq.s32.totalorder %s28, 0
      %p48 = por %p46, %p47
      %p49 = scmp.ne.s32.totalorder %s38, %s41
      %p50 = scmp.eq.s32.totalorder %s33, 1
      %p51 = por %p49, %p50
      %p52 = scmp.ne.s32.totalorder %s41, %s42
      %p53 = scmp.eq.s32.totalorder %s33, 0
      %p54 = por %p52, %p53
      %p55 = scmp.ne.s32.totalorder %s41, %s42
      %p56 = scmp.eq.s32.totalorder %s34, 1
      %p57 = por %p55, %p56
      %p59 = scmp.ne.s32.totalorder %s42, %s58
      %p60 = scmp.eq.s32.totalorder %s34, 0
      %p61 = por %p59, %p60
      %s62 = ssub.s32 %s28, %s35
      %p63 = scmp.eq.s32.totalorder %s62, 0
      %s65 = sadd.s32 %s64, 1
      %s66 = scalar_select %p63, %s64, %s65
      %p69 = pneg %p63
      %p70 = scmp.eq.s32.totalorder %s28, 1
      %p71 = por %p69, %p70
      %p72 = scmp.ne.s32.totalorder %s64, %s67
      %p73 = scmp.eq.s32.totalorder %s28, 0
      %p74 = por %p72, %p73
      %p75 = scmp.ne.s32.totalorder %s64, %s67
      %p76 = scmp.eq.s32.totalorder %s33, 1
      %p77 = por %p75, %p76
      %p78 = scmp.ne.s32.totalorder %s67, %s68
      %p79 = scmp.eq.s32.totalorder %s33, 0
      %p80 = por %p78, %p79
      %p81 = scmp.ne.s32.totalorder %s67, %s68
      %p82 = scmp.eq.s32.totalorder %s34, 1
      %p83 = por %p81, %p82
      %p85 = scmp.ne.s32.totalorder %s68, %s84
      %p86 = scmp.eq.s32.totalorder %s34, 0
      %p87 = por %p85, %p86
      %s88 = ssub.s32 %s28, %s35
      %p89 = scmp.eq.s32.totalorder %s88, 0
      %s91 = sadd.s32 %s90, 1
      %s92 = scalar_select %p89, %s90, %s91
      %p95 = pneg %p89
      %p96 = scmp.eq.s32.totalorder %s28, 1
      %p97 = por %p95, %p96
      %p98 = scmp.ne.s32.totalorder %s90, %s93
      %p99 = scmp.eq.s32.totalorder %s28, 0
      %p100 = por %p98, %p99
      %p101 = scmp.ne.s32.totalorder %s90, %s93
      %p102 = scmp.eq.s32.totalorder %s33, 1
      %p103 = por %p101, %p102
      %p104 = scmp.ne.s32.totalorder %s93, %s94
      %p105 = scmp.eq.s32.totalorder %s33, 0
      %p106 = por %p104, %p105
      %p107 = scmp.ne.s32.totalorder %s93, %s94
      %p108 = scmp.eq.s32.totalorder %s34, 1
      %p109 = por %p107, %p108
      %p111 = scmp.ne.s32.totalorder %s94, %s110
      %p112 = scmp.eq.s32.totalorder %s34, 0
      %p113 = por %p111, %p112
      %s115 = sadd.s32 %s114, 1
      %p118 = scmp.eq.s32.totalorder %s28, 1
      %p119 = scmp.ne.s32.totalorder %s114, %s116
      %p120 = scmp.eq.s32.totalorder %s28, 0
      %p121 = por %p119, %p120
      %p122 = scmp.ne.s32.totalorder %s114, %s116
      %p123 = scmp.eq.s32.totalorder %s33, 1
      %p124 = por %p122, %p123
      %p125 = scmp.ne.s32.totalorder %s116, %s117
      %p126 = scmp.eq.s32.totalorder %s33, 0
      %p127 = por %p125, %p126
      %p128 = scmp.ne.s32.totalorder %s116, %s117
      %p129 = scmp.eq.s32.totalorder %s34, 1
      %p130 = por %p128, %p129
      %p132 = scmp.ne.s32.totalorder %s117, %s131
      %p133 = scmp.eq.s32.totalorder %s34, 0
      %p134 = por %p132, %p133
      %s136 = sadd.s32 %s135, 1
      %p139 = scmp.eq.s32.totalorder %s28, 1
      %p140 = scmp.ne.s32.totalorder %s135, %s137
      %p141 = scmp.eq.s32.totalorder %s28, 0
      %p142 = por %p140, %p141
      %p143 = scmp.ne.s32.totalorder %s135, %s137
      %p144 = scmp.eq.s32.totalorder %s33, 1
      %p145 = por %p143, %p144
      %p146 = scmp.ne.s32.totalorder %s137, %s138
      %p147 = scmp.eq.s32.totalorder %s33, 0
      %p148 = por %p146, %p147
      %p149 = scmp.ne.s32.totalorder %s137, %s138
      %p150 = scmp.eq.s32.totalorder %s34, 1
      %p151 = por %p149, %p150
      %p153 = scmp.ne.s32.totalorder %s138, %s152
      %p154 = scmp.eq.s32.totalorder %s34, 0
      %p155 = por %p153, %p154
      %s157 = sadd.s32 %s156, 1
      %p160 = scmp.eq.s32.totalorder %s28, 1
      %p161 = scmp.ne.s32.totalorder %s156, %s158
      %p162 = scmp.eq.s32.totalorder %s28, 0
      %p163 = por %p161, %p162
      %p164 = scmp.ne.s32.totalorder %s156, %s158
      %p165 = scmp.eq.s32.totalorder %s33, 1
      %p166 = por %p164, %p165
      %p167 = scmp.ne.s32.totalorder %s158, %s159
      %p168 = scmp.eq.s32.totalorder %s33, 0
      %p169 = por %p167, %p168
      %p170 = scmp.ne.s32.totalorder %s158, %s159
      %p171 = scmp.eq.s32.totalorder %s34, 1
      %p172 = por %p170, %p171
      %p174 = scmp.ne.s32.totalorder %s159, %s173
      %p175 = scmp.eq.s32.totalorder %s34, 0
      %p176 = por %p174, %p175
      %s178 = sadd.s32 %s177, 1
      %p181 = scmp.eq.s32.totalorder %s28, 1
      %p182 = scmp.ne.s32.totalorder %s177, %s179
      %p183 = scmp.eq.s32.totalorder %s28, 0
      %p184 = por %p182, %p183
      %p185 = scmp.ne.s32.totalorder %s177, %s179
      %p186 = scmp.eq.s32.totalorder %s33, 1
      %p187 = por %p185, %p186
      %p188 = scmp.ne.s32.totalorder %s179, %s180
      %p189 = scmp.eq.s32.totalorder %s33, 0
      %p190 = por %p188, %p189
      %p191 = scmp.ne.s32.totalorder %s179, %s180
      %p192 = scmp.eq.s32.totalorder %s34, 1
      %p193 = por %p191, %p192
      %p195 = scmp.ne.s32.totalorder %s180, %s194
      %p196 = scmp.eq.s32.totalorder %s34, 0
      %p197 = por %p195, %p196
      %s199 = sadd.s32 %s198, 1
      %p202 = scmp.eq.s32.totalorder %s28, 1
      %p203 = scmp.ne.s32.totalorder %s198, %s200
      %p204 = scmp.eq.s32.totalorder %s28, 0
      %p205 = por %p203, %p204
      %p206 = scmp.ne.s32.totalorder %s198, %s200
      %p207 = scmp.eq.s32.totalorder %s33, 1
      %p208 = por %p206, %p207
      %p209 = scmp.ne.s32.totalorder %s200, %s201
      %p210 = scmp.eq.s32.totalorder %s33, 0
      %p211 = por %p209, %p210
      %p212 = scmp.ne.s32.totalorder %s200, %s201
      %p213 = scmp.eq.s32.totalorder %s34, 1
      %p214 = por %p212, %p213
      %p216 = scmp.ne.s32.totalorder %s201, %s215
      %p217 = scmp.eq.s32.totalorder %s34, 0
      %p218 = por %p216, %p217
      %s220 = sadd.s32 %s219, 1
      %p223 = scmp.eq.s32.totalorder %s28, 1
      %p224 = scmp.ne.s32.totalorder %s219, %s221
      %p225 = scmp.eq.s32.totalorder %s28, 0
      %p226 = por %p224, %p225
      %p227 = scmp.ne.s32.totalorder %s219, %s221
      %p228 = scmp.eq.s32.totalorder %s33, 1
      %p229 = por %p227, %p228
      %p230 = scmp.ne.s32.totalorder %s221, %s222
      %p231 = scmp.eq.s32.totalorder %s33, 0
      %p232 = por %p230, %p231
      %p233 = scmp.ne.s32.totalorder %s221, %s222
      %p234 = scmp.eq.s32.totalorder %s34, 1
      %p235 = por %p233, %p234
      %p237 = scmp.ne.s32.totalorder %s222, %s236
      %p238 = scmp.eq.s32.totalorder %s34, 0
      %p239 = por %p237, %p238
      %s241 = sadd.s32 %s240, 1
      %p244 = scmp.eq.s32.totalorder %s28, 1
      %p245 = scmp.ne.s32.totalorder %s240, %s242
      %p246 = scmp.eq.s32.totalorder %s28, 0
      %p247 = por %p245, %p246
      %p248 = scmp.ne.s32.totalorder %s240, %s242
      %p249 = scmp.eq.s32.totalorder %s33, 1
      %p250 = por %p248, %p249
      %p251 = scmp.ne.s32.totalorder %s242, %s243
      %p252 = scmp.eq.s32.totalorder %s33, 0
      %p253 = por %p251, %p252
      %p254 = scmp.ne.s32.totalorder %s242, %s243
      %p255 = scmp.eq.s32.totalorder %s34, 1
      %p256 = por %p254, %p255
      %p258 = scmp.ne.s32.totalorder %s243, %s257
      %p259 = scmp.eq.s32.totalorder %s34, 0
      %p260 = por %p258, %p259
      %s262 = sadd.s32 %s261, 1
      %p265 = scmp.eq.s32.totalorder %s28, 1
      %p266 = scmp.ne.s32.totalorder %s261, %s263
      %p267 = scmp.eq.s32.totalorder %s28, 0
      %p268 = por %p266, %p267
      %p269 = scmp.ne.s32.totalorder %s261, %s263
      %p270 = scmp.eq.s32.totalorder %s33, 1
      %p271 = por %p269, %p270
      %p272 = scmp.ne.s32.totalorder %s263, %s264
      %p273 = scmp.eq.s32.totalorder %s33, 0
      %p274 = por %p272, %p273
      %p275 = scmp.ne.s32.totalorder %s263, %s264
      %p276 = scmp.eq.s32.totalorder %s34, 1
      %p277 = por %p275, %p276
      %p279 = scmp.ne.s32.totalorder %s264, %s278
      %p280 = scmp.eq.s32.totalorder %s34, 0
      %p281 = por %p279, %p280
      %s283 = sadd.s32 %s282, 1
      %p286 = scmp.eq.s32.totalorder %s28, 1
      %p287 = scmp.ne.s32.totalorder %s282, %s284
      %p288 = scmp.eq.s32.totalorder %s28, 0
      %p289 = por %p287, %p288
      %p290 = scmp.ne.s32.totalorder %s282, %s284
      %p291 = scmp.eq.s32.totalorder %s33, 1
      %p292 = por %p290, %p291
      %p293 = scmp.ne.s32.totalorder %s284, %s285
      %p294 = scmp.eq.s32.totalorder %s33, 0
      %p295 = por %p293, %p294
      %p296 = scmp.ne.s32.totalorder %s284, %s285
      %p297 = scmp.eq.s32.totalorder %s34, 1
      %p298 = por %p296, %p297
      %p300 = scmp.ne.s32.totalorder %s285, %s299
      %p301 = scmp.eq.s32.totalorder %s34, 0
      %p302 = por %p300, %p301
      %s304 = sadd.s32 %s303, 1
      %p307 = scmp.eq.s32.totalorder %s28, 1
      %p308 = scmp.ne.s32.totalorder %s303, %s305
      %p309 = scmp.eq.s32.totalorder %s28, 0
      %p310 = por %p308, %p309
      %p311 = scmp.ne.s32.totalorder %s303, %s305
      %p312 = scmp.eq.s32.totalorder %s33, 1
      %p313 = por %p311, %p312
      %p314 = scmp.ne.s32.totalorder %s305, %s306
      %p315 = scmp.eq.s32.totalorder %s33, 0
      %p316 = por %p314, %p315
      %p317 = scmp.ne.s32.totalorder %s305, %s306
      %p318 = scmp.eq.s32.totalorder %s34, 1
      %p319 = por %p317, %p318
      %p321 = scmp.ne.s32.totalorder %s306, %s320
      %p322 = scmp.eq.s32.totalorder %s34, 0
      %p323 = por %p321, %p322
      %s325 = sadd.s32 %s324, 1
      %p328 = scmp.eq.s32.totalorder %s28, 1
      %p329 = scmp.ne.s32.totalorder %s324, %s326
      %p330 = scmp.eq.s32.totalorder %s28, 0
      %p331 = por %p329, %p330
      %p332 = scmp.ne.s32.totalorder %s324, %s326
      %p333 = scmp.eq.s32.totalorder %s33, 1
      %p334 = por %p332, %p333
      %p335 = scmp.ne.s32.totalorder %s326, %s327
      %p336 = scmp.eq.s32.totalorder %s33, 0
      %p337 = por %p335, %p336
      %p338 = scmp.ne.s32.totalorder %s326, %s327
      %p339 = scmp.eq.s32.totalorder %s34, 1
      %p340 = por %p338, %p339
      %p342 = scmp.ne.s32.totalorder %s327, %s341
      %p343 = scmp.eq.s32.totalorder %s34, 0
      %p344 = por %p342, %p343
      %s345 = ssub.s32 %s28, %s35
      %p346 = scmp.eq.s32.totalorder %s345, 0
      %s348 = sadd.s32 %s347, 1
      %s349 = scalar_select %p346, %s347, %s348
      %p352 = pneg %p346
      %p353 = scmp.eq.s32.totalorder %s28, 1
      %p354 = por %p352, %p353
      %p355 = scmp.ne.s32.totalorder %s347, %s350
      %p356 = scmp.eq.s32.totalorder %s28, 0
      %p357 = por %p355, %p356
      %p358 = scmp.ne.s32.totalorder %s347, %s350
      %p359 = scmp.eq.s32.totalorder %s33, 1
      %p360 = por %p358, %p359
      %p361 = scmp.ne.s32.totalorder %s350, %s351
      %p362 = scmp.eq.s32.totalorder %s33, 0
      %p363 = por %p361, %p362
      %p364 = scmp.ne.s32.totalorder %s350, %s351
      %p365 = scmp.eq.s32.totalorder %s34, 1
      %p366 = por %p364, %p365
      %p368 = scmp.ne.s32.totalorder %s351, %s367
      %p369 = scmp.eq.s32.totalorder %s34, 0
      %p370 = por %p368, %p369
      %p371 = scmp.le.s32.totalorder 1, %s28
      %p372 = scmp.lt.s32.totalorder %s28, 3
      %p373 = pnand %p371, %p372
      %p374 = pneg %p373
      // Predicated region
      $region9: #{tpu_custom_call.1} parent=5 // pred_check
        _
      $region10: #{tpu_custom_call.1} parent=5 // pred_check_branch
        %376 = sbr.rel (%p373) target = $region12
      $region11: #{tpu_custom_call.1} parent=5 // pred_region
        %s377 = ssub.s32 %s28, 1
        // Predicated region
        $region13: #{tpu_custom_call.1} parent=11 // pred_check
          %p378 = pneg %p127
        $region14: #{tpu_custom_call.1} parent=11 // pred_check_branch
          %380 = sbr.rel (%p378) target = $region16
        $region15: #{tpu_custom_call.1} parent=11 // pred_region
          _
        $region16: #{tpu_custom_call.1} parent=11 // pred_fallthru
          _
        // Predicated region
        $region17: #{tpu_custom_call.1} parent=11 // pred_check
          %p381 = pneg %p148
        $region18: #{tpu_custom_call.1} parent=11 // pred_check_branch
          %383 = sbr.rel (%p381) target = $region20
        $region19: #{tpu_custom_call.1} parent=11 // pred_region
          _
        $region20: #{tpu_custom_call.1} parent=11 // pred_fallthru
          _
        // Predicated region
        $region21: #{tpu_custom_call.1} parent=11 // pred_check
          %p384 = pneg %p169
        $region22: #{tpu_custom_call.1} parent=11 // pred_check_branch
          %386 = sbr.rel (%p384) target = $region24
        $region23: #{tpu_custom_call.1} parent=11 // pred_region
          _
        $region24: #{tpu_custom_call.1} parent=11 // pred_fallthru
          _
        // Predicated region
        $region25: #{tpu_custom_call.1} parent=11 // pred_check
          %p387 = pneg %p190
        $region26: #{tpu_custom_call.1} parent=11 // pred_check_branch
          %389 = sbr.rel (%p387) target = $region28
        $region27: #{tpu_custom_call.1} parent=11 // pred_region
          %s391 = ssub.s32 256, 256
          %392 = vsyncadd [#allocation6], %s391
          %s393 = sshll.u32 [#allocation5], 4
          %s394 = int_to_ptr.vmem [resolvable:$true] %s393
          %399 = dma.hbm_to_vmem [thread:$0]  %s6, 256, %s394, [#allocation6], 64, 64, 4
        $region28: #{tpu_custom_call.1} parent=11 // pred_fallthru
          _
        // Predicated region
        $region29: #{tpu_custom_call.1} parent=11 // pred_check
          %p400 = pneg %p211
        $region30: #{tpu_custom_call.1} parent=11 // pred_check_branch
          %402 = sbr.rel (%p400) target = $region32
        $region31: #{tpu_custom_call.1} parent=11 // pred_region
          %s404 = ssub.s32 256, 256
          %405 = vsyncadd [#allocation6], %s404
          %s406 = sshll.u32 [#allocation7], 4
          %s407 = int_to_ptr.vmem [resolvable:$true] %s406
          %412 = dma.hbm_to_vmem [thread:$0]  %s7, 256, %s407, [#allocation6], 64, 64, 4
        $region32: #{tpu_custom_call.1} parent=11 // pred_fallthru
          _
        // Predicated region
        $region33: #{tpu_custom_call.1} parent=11 // pred_check
          %p413 = pneg %p232
        $region34: #{tpu_custom_call.1} parent=11 // pred_check_branch
          %415 = sbr.rel (%p413) target = $region36
        $region35: #{tpu_custom_call.1} parent=11 // pred_region
          %s417 = ssub.s32 256, 256
          %418 = vsyncadd [#allocation9], %s417
          %s419 = sshll.u32 [#allocation8], 4
          %s420 = int_to_ptr.vmem [resolvable:$true] %s419
          %425 = dma.hbm_to_vmem [thread:$0]  %s8, 256, %s420, [#allocation9], 64, 64, 4
        $region36: #{tpu_custom_call.1} parent=11 // pred_fallthru
          _
        // Predicated region
        $region37: #{tpu_custom_call.1} parent=11 // pred_check
          %p426 = pneg %p253
        $region38: #{tpu_custom_call.1} parent=11 // pred_check_branch
          %428 = sbr.rel (%p426) target = $region40
        $region39: #{tpu_custom_call.1} parent=11 // pred_region
          _
        $region40: #{tpu_custom_call.1} parent=11 // pred_fallthru
          _
        // Predicated region
        $region41: #{tpu_custom_call.1} parent=11 // pred_check
          %p429 = pneg %p274
        $region42: #{tpu_custom_call.1} parent=11 // pred_check_branch
          %431 = sbr.rel (%p429) target = $region44
        $region43: #{tpu_custom_call.1} parent=11 // pred_region
          _
        $region44: #{tpu_custom_call.1} parent=11 // pred_fallthru
          _
        // Predicated region
        $region45: #{tpu_custom_call.1} parent=11 // pred_check
          %p432 = pneg %p295
        $region46: #{tpu_custom_call.1} parent=11 // pred_check_branch
          %434 = sbr.rel (%p432) target = $region48
        $region47: #{tpu_custom_call.1} parent=11 // pred_region
          _
        $region48: #{tpu_custom_call.1} parent=11 // pred_fallthru
          _
        // Predicated region
        $region49: #{tpu_custom_call.1} parent=11 // pred_check
          %p435 = pneg %p316
        $region50: #{tpu_custom_call.1} parent=11 // pred_check_branch
          %437 = sbr.rel (%p435) target = $region52
        $region51: #{tpu_custom_call.1} parent=11 // pred_region
          _
        $region52: #{tpu_custom_call.1} parent=11 // pred_fallthru
          _
        // Predicated region
        $region53: #{tpu_custom_call.1} parent=11 // pred_check
          %p438 = pneg %p337
        $region54: #{tpu_custom_call.1} parent=11 // pred_check_branch
          %440 = sbr.rel (%p438) target = $region56
        $region55: #{tpu_custom_call.1} parent=11 // pred_region
          _
        $region56: #{tpu_custom_call.1} parent=11 // pred_fallthru
          _
      $region12: #{tpu_custom_call.1} parent=5 // pred_fallthru
        _
      %p441 = scmp.lt.s32.totalorder %s28, 2
      // Predicated region
      $region57: #{tpu_custom_call.1} parent=5 // pred_check
        %p442 = pneg %p441
      $region58: #{tpu_custom_call.1} parent=5 // pred_check_branch
        %444 = sbr.rel (%p442) target = $region60
      $region59: #{tpu_custom_call.1} parent=5 // pred_region
        // Predicated region
        $region61: #{tpu_custom_call.1} parent=59 // pred_check
          %p445 = pneg %p48
        $region62: #{tpu_custom_call.1} parent=59 // pred_check_branch
          %447 = sbr.rel (%p445) target = $region64
        $region63: #{tpu_custom_call.1} parent=59 // pred_region
          %p448 = scmp.lt.s32.totalorder %s28, 1
          %s449 = scalar_select %p448, %s28, 1
          %s450 = smul.addr %s449, 8
          %s451 = scalar_lea.vmem %s0, %s450
        $region64: #{tpu_custom_call.1} parent=59 // pred_fallthru
          _
        // Predicated region
        $region65: #{tpu_custom_call.1} parent=59 // pred_check
          %p452 = pneg %p74
        $region66: #{tpu_custom_call.1} parent=59 // pred_check_branch
          %454 = sbr.rel (%p452) target = $region68
        $region67: #{tpu_custom_call.1} parent=59 // pred_region
          %p455 = scmp.lt.s32.totalorder %s28, 1
          %s456 = scalar_select %p455, %s28, 1
          %s457 = smul.addr %s456, 2
          %s458 = smul.addr %s457, 4
          %s459 = scalar_lea.vmem %s1, %s458
        $region68: #{tpu_custom_call.1} parent=59 // pred_fallthru
          _
        // Predicated region
        $region69: #{tpu_custom_call.1} parent=59 // pred_check
          %p460 = pneg %p100
        $region70: #{tpu_custom_call.1} parent=59 // pred_check_branch
          %462 = sbr.rel (%p460) target = $region72
        $region71: #{tpu_custom_call.1} parent=59 // pred_region
          %s463 = sand.u32 %s90, 1
          %s464 = scalar_lea.sflag [#allocation3], %s463
          %s465 = sand.u32 %s90, 1
          %s466 = scalar_lea.vmem [#allocation2], %s465
          %s468 = ssub.s32 16, 16
          %469 = vsyncadd %s464, %s468
          %s470 = smul.addr %s28, 16
          %s471 = scalar_lea.hbm %s2, %s470
          %s473 = sshll.u32 %s466, 4
          %s474 = int_to_ptr.vmem [resolvable:$true] %s473
          %476 = dma.hbm_to_vmem [thread:$0]  %s471, 16, %s474, %s464
        $region72: #{tpu_custom_call.1} parent=59 // pred_fallthru
          _
      $region60: #{tpu_custom_call.1} parent=5 // pred_fallthru
        _
      %p477 = scmp.le.s32.totalorder 1, %s28
      %p478 = scmp.lt.s32.totalorder %s28, 3
      %p479 = pnand %p477, %p478
      %p480 = pneg %p479
      // Predicated region
      $region73: #{tpu_custom_call.1} parent=5 // pred_check
        _
      $region74: #{tpu_custom_call.1} parent=5 // pred_check_branch
        %482 = sbr.rel (%p479) target = $region76
      $region75: #{tpu_custom_call.1} parent=5 // pred_region
        %s483 = ssub.s32 %s28, 1
        %s484 = sand.u32 %s93, 1
        %s485 = scalar_lea.sflag [#allocation3], %s484
        %s486 = sand.u32 %s93, 1
        %s487 = scalar_lea.vmem [#allocation2], %s486
        // Predicated region
        $region77: #{tpu_custom_call.1} parent=75 // pred_check
          %p488 = pneg %p106
        $region78: #{tpu_custom_call.1} parent=75 // pred_check_branch
          %490 = sbr.rel (%p488) target = $region80
        $region79: #{tpu_custom_call.1} parent=75 // pred_region
          %491 = dma.done %s485, 16
        $region80: #{tpu_custom_call.1} parent=75 // pred_fallthru
          _
        // Predicated region
        $region81: #{tpu_custom_call.1} parent=75 // pred_check
          %p492 = pneg %p190
        $region82: #{tpu_custom_call.1} parent=75 // pred_check_branch
          %494 = sbr.rel (%p492) target = $region84
        $region83: #{tpu_custom_call.1} parent=75 // pred_region
          %495 = dma.done [#allocation6], 256
        $region84: #{tpu_custom_call.1} parent=75 // pred_fallthru
          _
        // Predicated region
        $region85: #{tpu_custom_call.1} parent=75 // pred_check
          %p496 = pneg %p211
        $region86: #{tpu_custom_call.1} parent=75 // pred_check_branch
          %498 = sbr.rel (%p496) target = $region88
        $region87: #{tpu_custom_call.1} parent=75 // pred_region
          %499 = dma.done [#allocation6], 256
        $region88: #{tpu_custom_call.1} parent=75 // pred_fallthru
          _
        // Predicated region
        $region89: #{tpu_custom_call.1} parent=75 // pred_check
          %p500 = pneg %p232
        $region90: #{tpu_custom_call.1} parent=75 // pred_check_branch
          %502 = sbr.rel (%p500) target = $region92
        $region91: #{tpu_custom_call.1} parent=75 // pred_region
          %503 = dma.done [#allocation9], 256
        $region92: #{tpu_custom_call.1} parent=75 // pred_fallthru
          _
        %p504 = scmp.lt.s32.totalorder %s33, 1
        %s505 = scalar_select %p504, %s33, 1
        %s506 = smul.addr %s505, 8
        %s507 = scalar_lea.vmem %s0, %s506
        %p508 = pneg %p54
        %p509 = pneg %p51
        %p510 = scmp.lt.s32.totalorder %s33, 1
        %s511 = scalar_select %p510, %s33, 1
        %s512 = smul.addr %s511, 2
        %s513 = smul.addr %s512, 4
        %s514 = scalar_lea.vmem %s1, %s513
        %p515 = pneg %p80
        %p516 = pneg %p77
        %s517 = sand.u32 %s93, 1
        %s518 = scalar_lea.sflag [#allocation3], %s517
        %s519 = sand.u32 %s93, 1
        %s520 = scalar_lea.vmem [#allocation2], %s519
        %p521 = pneg %p106
        %p522 = pneg %p103
        %p523 = pneg %p127
        %p524 = pneg %p124
        %p525 = pneg %p148
        %p526 = pneg %p145
        %p527 = pneg %p169
        %p528 = pneg %p166
        %p529 = pneg %p190
        %p530 = pneg %p187
        %p531 = pneg %p211
        %p532 = pneg %p208
        %p533 = pneg %p232
        %p534 = pneg %p229
        %p535 = pneg %p253
        %p536 = pneg %p250
        %p537 = pneg %p274
        %p538 = pneg %p271
        %p539 = pneg %p295
        %p540 = pneg %p292
        %p541 = pneg %p316
        %p542 = pneg %p313
        %p543 = pneg %p337
        %p544 = pneg %p334
        %p545 = pneg %p363
        %p546 = pneg %p360
        %s547 = sand.u32 %s350, 1
        %s548 = scalar_lea.sflag [#allocation4], %s547
        %s549 = sand.u32 %s350, 1
        %s550 = smul.addr %s549, 8
        %s551 = scalar_lea.vmem [#allocation10], %s550
        %p552 = scmp.lt.s32.totalorder %s33, 1
        %s553 = scalar_select %p552, %s33, 1
        %s554 = smul.addr %s553, 8
        %s555 = scalar_lea.vmem %s0, %s554
        %p556 = scmp.lt.s32.totalorder %s33, 1
        %s557 = scalar_select %p556, %s33, 1
        %s558 = smul.addr %s557, 2
        %s559 = smul.addr %s558, 4
        %s560 = scalar_lea.vmem %s1, %s559
        %v562 = vld [vmem:[%s555] sm:$0xff]
        %v563 = vld [vmem:[%s560] sm:$0xf]
        %v564 = vld [vmem:[%s560 + $0x4] sm:$0x1]
        %v565 = vld [vmem:[%s487] sm:$0x1]
        %v566 = vld [vmem:[%s12] sm:$0x1]
        %v567 = vld [vmem:[%s13] sm:$0x1]
        %vm568 = vcmask 261120
        %v569 = vsel %vm568, %v562, 0.0
        %570 = vadd.xlane.f32.xlu0 %v569
        %v571 = vpop.xlane.xlu0 %570
        %v572 = vrcp.pop 32.0
        %v573 = vmul.f32 %v571, %v572
        %v574 = vsub.f32 %v562, %v573
        %v575 = vmul.f32 %v574, %v574
        %v576 = vsel %vm568, %v575, 0.0
        %577 = vadd.xlane.f32.xlu0 %v576
        %v578 = vpop.xlane.xlu0 %577
        %v579 = vrcp.pop 31.0
        %v580 = vmul.f32 %v578, %v579
        %v581 = vrsqrt.pop %v580
        %v582 = vmul.f32 %v580, %v581
        %vm583 = vcmp.eq.f32.partialorder %v580, inf
        %v584 = vsel %vm583, %v580, %v582
        %vm585 = vcmp.eq.f32.partialorder %v580, 0.0
        %v586 = vand.u32 %v580, 2147483648
        %v587 = vsel %vm585, %v586, %v584
        %v588 = vadd.f32 %v587, 1e-06
        %v589 = vrcp.pop %v588
        %v590 = vlaneseq
        %v591 = vshrl.u32 %v590, 7
        %v592 = vsub.s32 0, %v591
        %v593 = vrot.slane %v566, %v592
        %v594 = vmul.f32 %v593, %v574
        %v595 = vmul.f32 %v594, %v589
        %v596 = vlaneseq
        %v597 = vshrl.u32 %v596, 7
        %v598 = vsub.s32 0, %v597
        %v599 = vrot.slane %v567, %v598
        %v600 = vadd.f32 %v595, %v599
        %v601 = vpack.c.bf16 %v600, %v600
        %v602 = vld [vmem:[%s3] sm:$0xf]
        %v603 = vld [vmem:[%s3 + $0x4] sm:$0xf]
        %v604 = vld [vmem:[%s3 + $0x8] sm:$0xf]
        %v605 = vld [vmem:[%s3 + $0xc] sm:$0xf]
        %v610 = vunpack.c.l.b16 %v602
        %v611 = vunpack.c.l.b16 %v603
        %v612 = vunpack.c.l.b16 %v604
        %v613 = vunpack.c.l.b16 %v605
        %v614 = vpack.c.b16 %v611, %v610
        %v615 = vpack.c.b16 %v613, %v612
        %v619 = vsel %vm568, %v601, 0
        %621 = vmatprep.subr.bf16.mxu0 0
        %622 = vmatpush1.bf16.msra.mxu0 0
        %623 = vmatprep.subr.bf16.mxu0 0
        %624 = vmatpush1.bf16.msra.mxu0 0
        %625 = vmatprep.subr.bf16.mxu0 0
        %626 = vmatpush1.bf16.msra.mxu0 0
        %627 = vmatprep.subr.bf16.mxu0 0
        %628 = vmatpush1.bf16.msra.mxu0 0
        %629 = vmatprep.subr.bf16.mxu0 0
        %630 = vmatpush1.bf16.msra.mxu0 0
        %631 = vmatprep.subr.bf16.mxu0 0
        %632 = vmatpush1.bf16.msra.mxu0 0
        %633 = vmatprep.subr.bf16.mxu0 0
        %634 = vmatpush1.bf16.msra.mxu0 %v615
        %635 = vmatprep.subr.bf16.mxu0 0
        %636 = vmatpush1.bf16.msra.mxu0 %v614
        %637 = vmatprep.subr.bf16.mxu0 0
        %638 = vmatpush2.bf16.msra.mxu0 0
        %639 = vmatprep.subr.bf16.mxu0 0
        %640 = vmatpush2.bf16.msra.mxu0 0
        %641 = vmatprep.subr.bf16.mxu0 0
        %642 = vmatpush2.bf16.msra.mxu0 0
        %643 = vmatprep.subr.bf16.mxu0 0
        %644 = vmatpush2.bf16.msra.mxu0 0
        %645 = vmatprep.subr.bf16.mxu0 0
        %646 = vmatpush2.bf16.msra.mxu0 0
        %647 = vmatprep.subr.bf16.mxu0 0
        %648 = vmatpush2.bf16.msra.mxu0 0
        %649 = vmatprep.subr.bf16.mxu0 0
        %650 = vmatpush2.bf16.msra.mxu0 0
        %651 = vmatprep.subr.bf16.mxu0 0
        %652 = vmatpush2.bf16.msra.mxu0 0
        %653 = vmatprep.mubr.bf16.mxu0 0
        %654 = vmatmul.mubr.bf16.gmra.mxu0 %v619
        %v655 = vpop.f32.mrf.mxu0
        %v656 = vadd.f32 0.0, %v655
        %v657 = vpop.f32.mrf.mxu0
        %v658 = vpop.f32.mrf.mxu0
        %v659 = vpop.f32.mrf.mxu0
        %660 = vdwg.mxu0
        %v661 = vld [vmem:[%s4] sm:$0xf]
        %v662 = vld [vmem:[%s4 + $0x4] sm:$0xf]
        %v663 = vld [vmem:[%s4 + $0x8] sm:$0xf]
        %v664 = vld [vmem:[%s4 + $0xc] sm:$0xf]
        %v665 = vpack.c.bf16 %v656, %v656
        %667 = vrot.lane.b32.xlu0 %v665, 96
        %v668 = vpop.permute.xlu0 %667
        %vm669 = vcmask 64512
        %v671 = vsel %vm669, %v665, 0
        %v674 = vsel %vm669, %v668, 0
        %676 = vmatprep.subr.bf16.mxu0 0
        %677 = vmatpush1.bf16.xpose.msra.mxu0 0
        %678 = vmatprep.subr.bf16.mxu0 0
        %679 = vmatpush1.bf16.xpose.msra.mxu0 0
        %680 = vmatprep.subr.bf16.mxu0 0
        %681 = vmatpush1.bf16.xpose.msra.mxu0 0
        %682 = vmatprep.subr.bf16.mxu0 0
        %683 = vmatpush1.bf16.xpose.msra.mxu0 0
        %684 = vmatprep.subr.bf16.mxu0 0
        %685 = vmatpush1.bf16.xpose.msra.mxu0 0
        %686 = vmatprep.subr.bf16.mxu0 0
        %687 = vmatpush1.bf16.xpose.msra.mxu0 0
        %688 = vmatprep.subr.bf16.mxu0 0
        %689 = vmatpush1.bf16.xpose.msra.mxu0 0
        %690 = vmatprep.subr.bf16.mxu0 0
        %691 = vmatpush1.bf16.xpose.msra.mxu0 %v674
        %692 = vmatprep.subr.bf16.mxu0 0
        %693 = vmatpush2.bf16.xpose.msra.mxu0 0
        %694 = vmatprep.subr.bf16.mxu0 0
        %695 = vmatpush2.bf16.xpose.msra.mxu0 0
        %696 = vmatprep.subr.bf16.mxu0 0
        %697 = vmatpush2.bf16.xpose.msra.mxu0 0
        %698 = vmatprep.subr.bf16.mxu0 0
        %699 = vmatpush2.bf16.xpose.msra.mxu0 0
        %700 = vmatprep.subr.bf16.mxu0 0
        %701 = vmatpush2.bf16.xpose.msra.mxu0 0
        %702 = vmatprep.subr.bf16.mxu0 0
        %703 = vmatpush2.bf16.xpose.msra.mxu0 0
        %704 = vmatprep.subr.bf16.mxu0 0
        %705 = vmatpush2.bf16.xpose.msra.mxu0 0
        %706 = vmatprep.subr.bf16.mxu0 0
        %707 = vmatpush2.bf16.xpose.msra.mxu0 0
        %708 = vmatprep.mubr.bf16.mxu0 0
        %709 = vmatmul.mubr.bf16.gmra.mxu0 %v671
        %v710 = vpop.f32.mrf.mxu0
        %v711 = vadd.f32 0.0, %v710
        %v712 = vpop.f32.mrf.mxu0
        %v713 = vpop.f32.mrf.mxu0
        %v714 = vpop.f32.mrf.mxu0
        %715 = vdwg.mxu0
        %v716 = vlaneseq
        %v717 = vshrl.u32 %v716, 7
        %v718 = vlaneseq
        %v719 = vand.u32 %v718, 127
        %vm720 = vcmp.ge.s32.totalorder %v717, %v719
        %v721 = vsel %vm720, %v711, -1e+09
        %v722 = vsel %vm669, %v721, -inf
        %723 = vmax.xlane.f32.xlu0 %v722
        %v724 = vpop.xlane.xlu0 %723
        %v725 = vsub.f32 %v721, %v724
        %v726 = vmul.f32 %v725, 1.442695
        %v727 = vpow.pop %v726
        %v728 = vsel %vm669, %v727, 0.0
        %729 = vadd.xlane.f32.xlu0 %v728
        %v730 = vpop.xlane.xlu0 %729
        %v731 = vrcp.pop %v730
        %v732 = vmul.f32 %v727, %v731
        %v733 = vpack.c.bf16 %v732, %v732
        %734 = vrot.lane.b32.xlu0 %v665, 64
        %v735 = vpop.permute.xlu0 %734
        %v737 = vsel %vm669, %v733, 0
        %vm739 = vcmask 1043456
        %v741 = vsel %vm739, %v735, 0
        %743 = vmatprep.subr.bf16.mxu0 0
        %744 = vmatpush1.bf16.msra.mxu0 0
        %745 = vmatprep.subr.bf16.mxu0 0
        %746 = vmatpush1.bf16.msra.mxu0 0
        %747 = vmatprep.subr.bf16.mxu0 0
        %748 = vmatpush1.bf16.msra.mxu0 0
        %749 = vmatprep.subr.bf16.mxu0 0
        %750 = vmatpush1.bf16.msra.mxu0 0
        %751 = vmatprep.subr.bf16.mxu0 0
        %752 = vmatpush1.bf16.msra.mxu0 0
        %753 = vmatprep.subr.bf16.mxu0 0
        %754 = vmatpush1.bf16.msra.mxu0 0
        %755 = vmatprep.subr.bf16.mxu0 0
        %756 = vmatpush1.bf16.msra.mxu0 0
        %757 = vmatprep.subr.bf16.mxu0 0
        %758 = vmatpush1.bf16.msra.mxu0 %v741
        %759 = vmatprep.subr.bf16.mxu0 0
        %760 = vmatpush2.bf16.msra.mxu0 0
        %761 = vmatprep.subr.bf16.mxu0 0
        %762 = vmatpush2.bf16.msra.mxu0 0
        %763 = vmatprep.subr.bf16.mxu0 0
        %764 = vmatpush2.bf16.msra.mxu0 0
        %765 = vmatprep.subr.bf16.mxu0 0
        %766 = vmatpush2.bf16.msra.mxu0 0
        %767 = vmatprep.subr.bf16.mxu0 0
        %768 = vmatpush2.bf16.msra.mxu0 0
        %769 = vmatprep.subr.bf16.mxu0 0
        %770 = vmatpush2.bf16.msra.mxu0 0
        %771 = vmatprep.subr.bf16.mxu0 0
        %772 = vmatpush2.bf16.msra.mxu0 0
        %773 = vmatprep.subr.bf16.mxu0 0
        %774 = vmatpush2.bf16.msra.mxu0 0
        %775 = vmatprep.mubr.bf16.mxu0 0
        %776 = vmatmul.mubr.bf16.gmra.mxu0 %v737
        %v777 = vpop.f32.mrf.mxu0
        %v778 = vadd.f32 0.0, %v777
        %v779 = vpop.f32.mrf.mxu0
        %v780 = vpop.f32.mrf.mxu0
        %v781 = vpop.f32.mrf.mxu0
        %782 = vdwg.mxu0
        %v783 = vpack.c.bf16 %v778, %v778
        %784 = vrot.lane.b32.xlu0 %v665, 120
        %v785 = vpop.permute.xlu0 %784
        %786 = vrot.lane.b32.xlu0 %v665, 88
        %v787 = vpop.permute.xlu0 %786
        %v789 = vsel %vm669, %v785, 0
        %v792 = vsel %vm669, %v787, 0
        %794 = vmatprep.subr.bf16.mxu0 0
        %795 = vmatpush1.bf16.xpose.msra.mxu0 0
        %796 = vmatprep.subr.bf16.mxu0 0
        %797 = vmatpush1.bf16.xpose.msra.mxu0 0
        %798 = vmatprep.subr.bf16.mxu0 0
        %799 = vmatpush1.bf16.xpose.msra.mxu0 0
        %800 = vmatprep.subr.bf16.mxu0 0
        %801 = vmatpush1.bf16.xpose.msra.mxu0 0
        %802 = vmatprep.subr.bf16.mxu0 0
        %803 = vmatpush1.bf16.xpose.msra.mxu0 0
        %804 = vmatprep.subr.bf16.mxu0 0
        %805 = vmatpush1.bf16.xpose.msra.mxu0 0
        %806 = vmatprep.subr.bf16.mxu0 0
        %807 = vmatpush1.bf16.xpose.msra.mxu0 0
        %808 = vmatprep.subr.bf16.mxu0 0
        %809 = vmatpush1.bf16.xpose.msra.mxu0 %v792
        %810 = vmatprep.subr.bf16.mxu0 0
        %811 = vmatpush2.bf16.xpose.msra.mxu0 0
        %812 = vmatprep.subr.bf16.mxu0 0
        %813 = vmatpush2.bf16.xpose.msra.mxu0 0
        %814 = vmatprep.subr.bf16.mxu0 0
        %815 = vmatpush2.bf16.xpose.msra.mxu0 0
        %816 = vmatprep.subr.bf16.mxu0 0
        %817 = vmatpush2.bf16.xpose.msra.mxu0 0
        %818 = vmatprep.subr.bf16.mxu0 0
        %819 = vmatpush2.bf16.xpose.msra.mxu0 0
        %820 = vmatprep.subr.bf16.mxu0 0
        %821 = vmatpush2.bf16.xpose.msra.mxu0 0
        %822 = vmatprep.subr.bf16.mxu0 0
        %823 = vmatpush2.bf16.xpose.msra.mxu0 0
        %824 = vmatprep.subr.bf16.mxu0 0
        %825 = vmatpush2.bf16.xpose.msra.mxu0 0
        %826 = vmatprep.mubr.bf16.mxu0 0
        %827 = vmatmul.mubr.bf16.gmra.mxu0 %v789
        %v828 = vpop.f32.mrf.mxu0
        %v829 = vadd.f32 0.0, %v828
        %v830 = vpop.f32.mrf.mxu0
        %v831 = vpop.f32.mrf.mxu0
        %v832 = vpop.f32.mrf.mxu0
        %833 = vdwg.mxu0
        %v834 = vsel %vm720, %v829, -1e+09
        %v835 = vsel %vm669, %v834, -inf
        %836 = vmax.xlane.f32.xlu0 %v835
        %v837 = vpop.xlane.xlu0 %836
        %v838 = vsub.f32 %v834, %v837
        %v839 = vmul.f32 %v838, 1.442695
        %v840 = vpow.pop %v839
        %v841 = vsel %vm669, %v840, 0.0
        %842 = vadd.xlane.f32.xlu0 %v841
        %v843 = vpop.xlane.xlu0 %842
        %v844 = vrcp.pop %v843
        %v845 = vmul.f32 %v840, %v844
        %v846 = vpack.c.bf16 %v845, %v845
        %847 = vrot.lane.b32.xlu0 %v665, 56
        %v848 = vpop.permute.xlu0 %847
        %v850 = vsel %vm669, %v846, 0
        %v853 = vsel %vm739, %v848, 0
        %855 = vmatprep.subr.bf16.mxu0 0
        %856 = vmatpush1.bf16.msra.mxu0 0
        %857 = vmatprep.subr.bf16.mxu0 0
        %858 = vmatpush1.bf16.msra.mxu0 0
        %859 = vmatprep.subr.bf16.mxu0 0
        %860 = vmatpush1.bf16.msra.mxu0 0
        %861 = vmatprep.subr.bf16.mxu0 0
        %862 = vmatpush1.bf16.msra.mxu0 0
        %863 = vmatprep.subr.bf16.mxu0 0
        %864 = vmatpush1.bf16.msra.mxu0 0
        %865 = vmatprep.subr.bf16.mxu0 0
        %866 = vmatpush1.bf16.msra.mxu0 0
        %867 = vmatprep.subr.bf16.mxu0 0
        %868 = vmatpush1.bf16.msra.mxu0 0
        %869 = vmatprep.subr.bf16.mxu0 0
        %870 = vmatpush1.bf16.msra.mxu0 %v853
        %871 = vmatprep.subr.bf16.mxu0 0
        %872 = vmatpush2.bf16.msra.mxu0 0
        %873 = vmatprep.subr.bf16.mxu0 0
        %874 = vmatpush2.bf16.msra.mxu0 0
        %875 = vmatprep.subr.bf16.mxu0 0
        %876 = vmatpush2.bf16.msra.mxu0 0
        %877 = vmatprep.subr.bf16.mxu0 0
        %878 = vmatpush2.bf16.msra.mxu0 0
        %879 = vmatprep.subr.bf16.mxu0 0
        %880 = vmatpush2.bf16.msra.mxu0 0
        %881 = vmatprep.subr.bf16.mxu0 0
        %882 = vmatpush2.bf16.msra.mxu0 0
        %883 = vmatprep.subr.bf16.mxu0 0
        %884 = vmatpush2.bf16.msra.mxu0 0
        %885 = vmatprep.subr.bf16.mxu0 0
        %886 = vmatpush2.bf16.msra.mxu0 0
        %887 = vmatprep.mubr.bf16.mxu0 0
        %888 = vmatmul.mubr.bf16.gmra.mxu0 %v850
        %v889 = vpop.f32.mrf.mxu0
        %v890 = vadd.f32 0.0, %v889
        %v891 = vpop.f32.mrf.mxu0
        %v892 = vpop.f32.mrf.mxu0
        %v893 = vpop.f32.mrf.mxu0
        %894 = vdwg.mxu0
        %v895 = vpack.c.bf16 %v890, %v890
        %v897 = vsel %vm669, %v895, 0
        %v900 = vsel %vm739, %v662, 0
        %902 = vmatprep.subr.bf16.mxu0 0
        %903 = vmatpush1.bf16.msra.mxu0 0
        %904 = vmatprep.subr.bf16.mxu0 0
        %905 = vmatpush1.bf16.msra.mxu0 0
        %906 = vmatprep.subr.bf16.mxu0 0
        %907 = vmatpush1.bf16.msra.mxu0 0
        %908 = vmatprep.subr.bf16.mxu0 0
        %909 = vmatpush1.bf16.msra.mxu0 0
        %910 = vmatprep.subr.bf16.mxu0 0
        %911 = vmatpush1.bf16.msra.mxu0 0
        %912 = vmatprep.subr.bf16.mxu0 0
        %913 = vmatpush1.bf16.msra.mxu0 0
        %914 = vmatprep.subr.bf16.mxu0 0
        %915 = vmatpush1.bf16.msra.mxu0 0
        %916 = vmatprep.subr.bf16.mxu0 0
        %917 = vmatpush1.bf16.msra.mxu0 %v900
        %918 = vmatprep.subr.bf16.mxu0 0
        %919 = vmatpush2.bf16.msra.mxu0 0
        %920 = vmatprep.subr.bf16.mxu0 0
        %921 = vmatpush2.bf16.msra.mxu0 0
        %922 = vmatprep.subr.bf16.mxu0 0
        %923 = vmatpush2.bf16.msra.mxu0 0
        %924 = vmatprep.subr.bf16.mxu0 0
        %925 = vmatpush2.bf16.msra.mxu0 0
        %926 = vmatprep.subr.bf16.mxu0 0
        %927 = vmatpush2.bf16.msra.mxu0 0
        %928 = vmatprep.subr.bf16.mxu0 0
        %929 = vmatpush2.bf16.msra.mxu0 0
        %930 = vmatprep.subr.bf16.mxu0 0
        %931 = vmatpush2.bf16.msra.mxu0 0
        %932 = vmatprep.subr.bf16.mxu0 0
        %933 = vmatpush2.bf16.msra.mxu0 0
        %934 = vmatprep.mubr.bf16.mxu0 0
        %935 = vmatmul.mubr.bf16.gmra.mxu0 %v897
        %v936 = vpop.f32.mrf.mxu0
        %v937 = vadd.f32 0.0, %v936
        %v938 = vpop.f32.mrf.mxu0
        %v939 = vpop.f32.mrf.mxu0
        %v940 = vpop.f32.mrf.mxu0
        %941 = vdwg.mxu0
        %v943 = vsel %vm669, %v783, 0
        %v946 = vsel %vm739, %v661, 0
        %948 = vmatprep.subr.bf16.mxu0 0
        %949 = vmatpush1.bf16.msra.mxu0 0
        %950 = vmatprep.subr.bf16.mxu0 0
        %951 = vmatpush1.bf16.msra.mxu0 0
        %952 = vmatprep.subr.bf16.mxu0 0
        %953 = vmatpush1.bf16.msra.mxu0 0
        %954 = vmatprep.subr.bf16.mxu0 0
        %955 = vmatpush1.bf16.msra.mxu0 0
        %956 = vmatprep.subr.bf16.mxu0 0
        %957 = vmatpush1.bf16.msra.mxu0 0
        %958 = vmatprep.subr.bf16.mxu0 0
        %959 = vmatpush1.bf16.msra.mxu0 0
        %960 = vmatprep.subr.bf16.mxu0 0
        %961 = vmatpush1.bf16.msra.mxu0 0
        %962 = vmatprep.subr.bf16.mxu0 0
        %963 = vmatpush1.bf16.msra.mxu0 %v946
        %964 = vmatprep.subr.bf16.mxu0 0
        %965 = vmatpush2.bf16.msra.mxu0 0
        %966 = vmatprep.subr.bf16.mxu0 0
        %967 = vmatpush2.bf16.msra.mxu0 0
        %968 = vmatprep.subr.bf16.mxu0 0
        %969 = vmatpush2.bf16.msra.mxu0 0
        %970 = vmatprep.subr.bf16.mxu0 0
        %971 = vmatpush2.bf16.msra.mxu0 0
        %972 = vmatprep.subr.bf16.mxu0 0
        %973 = vmatpush2.bf16.msra.mxu0 0
        %974 = vmatprep.subr.bf16.mxu0 0
        %975 = vmatpush2.bf16.msra.mxu0 0
        %976 = vmatprep.subr.bf16.mxu0 0
        %977 = vmatpush2.bf16.msra.mxu0 0
        %978 = vmatprep.subr.bf16.mxu0 0
        %979 = vmatpush2.bf16.msra.mxu0 0
        %980 = vmatprep.mubr.bf16.mxu0 0
        %981 = vmatmul.mubr.bf16.gmra.mxu0 %v943
        %v982 = vpop.f32.mrf.mxu0
        %v983 = vadd.f32 %v937, %v982
        %v984 = vpop.f32.mrf.mxu0
        %v985 = vpop.f32.mrf.mxu0
        %v986 = vpop.f32.mrf.mxu0
        %987 = vdwg.mxu0
        %988 = vrot.lane.b32.xlu0 %v665, 112
        %v989 = vpop.permute.xlu0 %988
        %990 = vrot.lane.b32.xlu0 %v665, 80
        %v991 = vpop.permute.xlu0 %990
        %v993 = vsel %vm669, %v989, 0
        %v996 = vsel %vm669, %v991, 0
        %998 = vmatprep.subr.bf16.mxu0 0
        %999 = vmatpush1.bf16.xpose.msra.mxu0 0
        %1000 = vmatprep.subr.bf16.mxu0 0
        %1001 = vmatpush1.bf16.xpose.msra.mxu0 0
        %1002 = vmatprep.subr.bf16.mxu0 0
        %1003 = vmatpush1.bf16.xpose.msra.mxu0 0
        %1004 = vmatprep.subr.bf16.mxu0 0
        %1005 = vmatpush1.bf16.xpose.msra.mxu0 0
        %1006 = vmatprep.subr.bf16.mxu0 0
        %1007 = vmatpush1.bf16.xpose.msra.mxu0 0
        %1008 = vmatprep.subr.bf16.mxu0 0
        %1009 = vmatpush1.bf16.xpose.msra.mxu0 0
        %1010 = vmatprep.subr.bf16.mxu0 0
        %1011 = vmatpush1.bf16.xpose.msra.mxu0 0
        %1012 = vmatprep.subr.bf16.mxu0 0
        %1013 = vmatpush1.bf16.xpose.msra.mxu0 %v996
        %1014 = vmatprep.subr.bf16.mxu0 0
        %1015 = vmatpush2.bf16.xpose.msra.mxu0 0
        %1016 = vmatprep.subr.bf16.mxu0 0
        %1017 = vmatpush2.bf16.xpose.msra.mxu0 0
        %1018 = vmatprep.subr.bf16.mxu0 0
        %1019 = vmatpush2.bf16.xpose.msra.mxu0 0
        %1020 = vmatprep.subr.bf16.mxu0 0
        %1021 = vmatpush2.bf16.xpose.msra.mxu0 0
        %1022 = vmatprep.subr.bf16.mxu0 0
        %1023 = vmatpush2.bf16.xpose.msra.mxu0 0
        %1024 = vmatprep.subr.bf16.mxu0 0
        %1025 = vmatpush2.bf16.xpose.msra.mxu0 0
        %1026 = vmatprep.subr.bf16.mxu0 0
        %1027 = vmatpush2.bf16.xpose.msra.mxu0 0
        %1028 = vmatprep.subr.bf16.mxu0 0
        %1029 = vmatpush2.bf16.xpose.msra.mxu0 0
        %1030 = vmatprep.mubr.bf16.mxu0 0
        %1031 = vmatmul.mubr.bf16.gmra.mxu0 %v993
        %v1032 = vpop.f32.mrf.mxu0
        %v1033 = vadd.f32 0.0, %v1032
        %v1034 = vpop.f32.mrf.mxu0
        %v1035 = vpop.f32.mrf.mxu0
        %v1036 = vpop.f32.mrf.mxu0
        %1037 = vdwg.mxu0
        %v1038 = vsel %vm720, %v1033, -1e+09
        %v1039 = vsel %vm669, %v1038, -inf
        %1040 = vmax.xlane.f32.xlu0 %v1039
        %v1041 = vpop.xlane.xlu0 %1040
        %v1042 = vsub.f32 %v1038, %v1041
        %v1043 = vmul.f32 %v1042, 1.442695
        %v1044 = vpow.pop %v1043
        %v1045 = vsel %vm669, %v1044, 0.0
        %1046 = vadd.xlane.f32.xlu0 %v1045
        %v1047 = vpop.xlane.xlu0 %1046
        %v1048 = vrcp.pop %v1047
        %v1049 = vmul.f32 %v1044, %v1048
        %v1050 = vpack.c.bf16 %v1049, %v1049
        %1051 = vrot.lane.b32.xlu0 %v665, 48
        %v1052 = vpop.permute.xlu0 %1051
        %v1054 = vsel %vm669, %v1050, 0
        %v1057 = vsel %vm739, %v1052, 0
        %1059 = vmatprep.subr.bf16.mxu0 0
        %1060 = vmatpush1.bf16.msra.mxu0 0
        %1061 = vmatprep.subr.bf16.mxu0 0
        %1062 = vmatpush1.bf16.msra.mxu0 0
        %1063 = vmatprep.subr.bf16.mxu0 0
        %1064 = vmatpush1.bf16.msra.mxu0 0
        %1065 = vmatprep.subr.bf16.mxu0 0
        %1066 = vmatpush1.bf16.msra.mxu0 0
        %1067 = vmatprep.subr.bf16.mxu0 0
        %1068 = vmatpush1.bf16.msra.mxu0 0
        %1069 = vmatprep.subr.bf16.mxu0 0
        %1070 = vmatpush1.bf16.msra.mxu0 0
        %1071 = vmatprep.subr.bf16.mxu0 0
        %1072 = vmatpush1.bf16.msra.mxu0 0
        %1073 = vmatprep.subr.bf16.mxu0 0
        %1074 = vmatpush1.bf16.msra.mxu0 %v1057
        %1075 = vmatprep.subr.bf16.mxu0 0
        %1076 = vmatpush2.bf16.msra.mxu0 0
        %1077 = vmatprep.subr.bf16.mxu0 0
        %1078 = vmatpush2.bf16.msra.mxu0 0
        %1079 = vmatprep.subr.bf16.mxu0 0
        %1080 = vmatpush2.bf16.msra.mxu0 0
        %1081 = vmatprep.subr.bf16.mxu0 0
        %1082 = vmatpush2.bf16.msra.mxu0 0
        %1083 = vmatprep.subr.bf16.mxu0 0
        %1084 = vmatpush2.bf16.msra.mxu0 0
        %1085 = vmatprep.subr.bf16.mxu0 0
        %1086 = vmatpush2.bf16.msra.mxu0 0
        %1087 = vmatprep.subr.bf16.mxu0 0
        %1088 = vmatpush2.bf16.msra.mxu0 0
        %1089 = vmatprep.subr.bf16.mxu0 0
        %1090 = vmatpush2.bf16.msra.mxu0 0
        %1091 = vmatprep.mubr.bf16.mxu0 0
        %1092 = vmatmul.mubr.bf16.gmra.mxu0 %v1054
        %v1093 = vpop.f32.mrf.mxu0
        %v1094 = vadd.f32 0.0, %v1093
        %v1095 = vpop.f32.mrf.mxu0
        %v1096 = vpop.f32.mrf.mxu0
        %v1097 = vpop.f32.mrf.mxu0
        %1098 = vdwg.mxu0
        %v1099 = vpack.c.bf16 %v1094, %v1094
        %v1101 = vsel %vm669, %v1099, 0
        %v1104 = vsel %vm739, %v663, 0
        %1106 = vmatprep.subr.bf16.mxu0 0
        %1107 = vmatpush1.bf16.msra.mxu0 0
        %1108 = vmatprep.subr.bf16.mxu0 0
        %1109 = vmatpush1.bf16.msra.mxu0 0
        %1110 = vmatprep.subr.bf16.mxu0 0
        %1111 = vmatpush1.bf16.msra.mxu0 0
        %1112 = vmatprep.subr.bf16.mxu0 0
        %1113 = vmatpush1.bf16.msra.mxu0 0
        %1114 = vmatprep.subr.bf16.mxu0 0
        %1115 = vmatpush1.bf16.msra.mxu0 0
        %1116 = vmatprep.subr.bf16.mxu0 0
        %1117 = vmatpush1.bf16.msra.mxu0 0
        %1118 = vmatprep.subr.bf16.mxu0 0
        %1119 = vmatpush1.bf16.msra.mxu0 0
        %1120 = vmatprep.subr.bf16.mxu0 0
        %1121 = vmatpush1.bf16.msra.mxu0 %v1104
        %1122 = vmatprep.subr.bf16.mxu0 0
        %1123 = vmatpush2.bf16.msra.mxu0 0
        %1124 = vmatprep.subr.bf16.mxu0 0
        %1125 = vmatpush2.bf16.msra.mxu0 0
        %1126 = vmatprep.subr.bf16.mxu0 0
        %1127 = vmatpush2.bf16.msra.mxu0 0
        %1128 = vmatprep.subr.bf16.mxu0 0
        %1129 = vmatpush2.bf16.msra.mxu0 0
        %1130 = vmatprep.subr.bf16.mxu0 0
        %1131 = vmatpush2.bf16.msra.mxu0 0
        %1132 = vmatprep.subr.bf16.mxu0 0
        %1133 = vmatpush2.bf16.msra.mxu0 0
        %1134 = vmatprep.subr.bf16.mxu0 0
        %1135 = vmatpush2.bf16.msra.mxu0 0
        %1136 = vmatprep.subr.bf16.mxu0 0
        %1137 = vmatpush2.bf16.msra.mxu0 0
        %1138 = vmatprep.mubr.bf16.mxu0 0
        %1139 = vmatmul.mubr.bf16.gmra.mxu0 %v1101
        %v1140 = vpop.f32.mrf.mxu0
        %v1141 = vadd.f32 0.0, %v1140
        %v1142 = vpop.f32.mrf.mxu0
        %v1143 = vpop.f32.mrf.mxu0
        %v1144 = vpop.f32.mrf.mxu0
        %1145 = vdwg.mxu0
        %v1146 = vadd.f32 %v983, %v1141
        %1147 = vrot.lane.b32.xlu0 %v665, 104
        %v1148 = vpop.permute.xlu0 %1147
        %1149 = vrot.lane.b32.xlu0 %v665, 72
        %v1150 = vpop.permute.xlu0 %1149
        %v1152 = vsel %vm669, %v1148, 0
        %v1155 = vsel %vm669, %v1150, 0
        %1157 = vmatprep.subr.bf16.mxu0 0
        %1158 = vmatpush1.bf16.xpose.msra.mxu0 0
        %1159 = vmatprep.subr.bf16.mxu0 0
        %1160 = vmatpush1.bf16.xpose.msra.mxu0 0
        %1161 = vmatprep.subr.bf16.mxu0 0
        %1162 = vmatpush1.bf16.xpose.msra.mxu0 0
        %1163 = vmatprep.subr.bf16.mxu0 0
        %1164 = vmatpush1.bf16.xpose.msra.mxu0 0
        %1165 = vmatprep.subr.bf16.mxu0 0
        %1166 = vmatpush1.bf16.xpose.msra.mxu0 0
        %1167 = vmatprep.subr.bf16.mxu0 0
        %1168 = vmatpush1.bf16.xpose.msra.mxu0 0
        %1169 = vmatprep.subr.bf16.mxu0 0
        %1170 = vmatpush1.bf16.xpose.msra.mxu0 0
        %1171 = vmatprep.subr.bf16.mxu0 0
        %1172 = vmatpush1.bf16.xpose.msra.mxu0 %v1155
        %1173 = vmatprep.subr.bf16.mxu0 0
        %1174 = vmatpush2.bf16.xpose.msra.mxu0 0
        %1175 = vmatprep.subr.bf16.mxu0 0
        %1176 = vmatpush2.bf16.xpose.msra.mxu0 0
        %1177 = vmatprep.subr.bf16.mxu0 0
        %1178 = vmatpush2.bf16.xpose.msra.mxu0 0
        %1179 = vmatprep.subr.bf16.mxu0 0
        %1180 = vmatpush2.bf16.xpose.msra.mxu0 0
        %1181 = vmatprep.subr.bf16.mxu0 0
        %1182 = vmatpush2.bf16.xpose.msra.mxu0 0
        %1183 = vmatprep.subr.bf16.mxu0 0
        %1184 = vmatpush2.bf16.xpose.msra.mxu0 0
        %1185 = vmatprep.subr.bf16.mxu0 0
        %1186 = vmatpush2.bf16.xpose.msra.mxu0 0
        %1187 = vmatprep.subr.bf16.mxu0 0
        %1188 = vmatpush2.bf16.xpose.msra.mxu0 0
        %1189 = vmatprep.mubr.bf16.mxu0 0
        %1190 = vmatmul.mubr.bf16.gmra.mxu0 %v1152
        %v1191 = vpop.f32.mrf.mxu0
        %v1192 = vadd.f32 0.0, %v1191
        %v1193 = vpop.f32.mrf.mxu0
        %v1194 = vpop.f32.mrf.mxu0
        %v1195 = vpop.f32.mrf.mxu0
        %1196 = vdwg.mxu0
        %v1197 = vsel %vm720, %v1192, -1e+09
        %v1198 = vsel %vm669, %v1197, -inf
        %1199 = vmax.xlane.f32.xlu0 %v1198
        %v1200 = vpop.xlane.xlu0 %1199
        %v1201 = vsub.f32 %v1197, %v1200
        %v1202 = vmul.f32 %v1201, 1.442695
        %v1203 = vpow.pop %v1202
        %v1204 = vsel %vm669, %v1203, 0.0
        %1205 = vadd.xlane.f32.xlu0 %v1204
        %v1206 = vpop.xlane.xlu0 %1205
        %v1207 = vrcp.pop %v1206
        %v1208 = vmul.f32 %v1203, %v1207
        %v1209 = vpack.c.bf16 %v1208, %v1208
        %1210 = vrot.lane.b32.xlu0 %v665, 40
        %v1211 = vpop.permute.xlu0 %1210
        %v1213 = vsel %vm669, %v1209, 0
        %v1216 = vsel %vm739, %v1211, 0
        %1218 = vmatprep.subr.bf16.mxu0 0
        %1219 = vmatpush1.bf16.msra.mxu0 0
        %1220 = vmatprep.subr.bf16.mxu0 0
        %1221 = vmatpush1.bf16.msra.mxu0 0
        %1222 = vmatprep.subr.bf16.mxu0 0
        %1223 = vmatpush1.bf16.msra.mxu0 0
        %1224 = vmatprep.subr.bf16.mxu0 0
        %1225 = vmatpush1.bf16.msra.mxu0 0
        %1226 = vmatprep.subr.bf16.mxu0 0
        %1227 = vmatpush1.bf16.msra.mxu0 0
        %1228 = vmatprep.subr.bf16.mxu0 0
        %1229 = vmatpush1.bf16.msra.mxu0 0
        %1230 = vmatprep.subr.bf16.mxu0 0
        %1231 = vmatpush1.bf16.msra.mxu0 0
        %1232 = vmatprep.subr.bf16.mxu0 0
        %1233 = vmatpush1.bf16.msra.mxu0 %v1216
        %1234 = vmatprep.subr.bf16.mxu0 0
        %1235 = vmatpush2.bf16.msra.mxu0 0
        %1236 = vmatprep.subr.bf16.mxu0 0
        %1237 = vmatpush2.bf16.msra.mxu0 0
        %1238 = vmatprep.subr.bf16.mxu0 0
        %1239 = vmatpush2.bf16.msra.mxu0 0
        %1240 = vmatprep.subr.bf16.mxu0 0
        %1241 = vmatpush2.bf16.msra.mxu0 0
        %1242 = vmatprep.subr.bf16.mxu0 0
        %1243 = vmatpush2.bf16.msra.mxu0 0
        %1244 = vmatprep.subr.bf16.mxu0 0
        %1245 = vmatpush2.bf16.msra.mxu0 0
        %1246 = vmatprep.subr.bf16.mxu0 0
        %1247 = vmatpush2.bf16.msra.mxu0 0
        %1248 = vmatprep.subr.bf16.mxu0 0
        %1249 = vmatpush2.bf16.msra.mxu0 0
        %1250 = vmatprep.mubr.bf16.mxu0 0
        %1251 = vmatmul.mubr.bf16.gmra.mxu0 %v1213
        %v1252 = vpop.f32.mrf.mxu0
        %v1253 = vadd.f32 0.0, %v1252
        %v1254 = vpop.f32.mrf.mxu0
        %v1255 = vpop.f32.mrf.mxu0
        %v1256 = vpop.f32.mrf.mxu0
        %1257 = vdwg.mxu0
        %v1258 = vpack.c.bf16 %v1253, %v1253
        %v1260 = vsel %vm669, %v1258, 0
        %v1263 = vsel %vm739, %v664, 0
        %1265 = vmatprep.subr.bf16.mxu0 0
        %1266 = vmatpush1.bf16.msra.mxu0 0
        %1267 = vmatprep.subr.bf16.mxu0 0
        %1268 = vmatpush1.bf16.msra.mxu0 0
        %1269 = vmatprep.subr.bf16.mxu0 0
        %1270 = vmatpush1.bf16.msra.mxu0 0
        %1271 = vmatprep.subr.bf16.mxu0 0
        %1272 = vmatpush1.bf16.msra.mxu0 0
        %1273 = vmatprep.subr.bf16.mxu0 0
        %1274 = vmatpush1.bf16.msra.mxu0 0
        %1275 = vmatprep.subr.bf16.mxu0 0
        %1276 = vmatpush1.bf16.msra.mxu0 0
        %1277 = vmatprep.subr.bf16.mxu0 0
        %1278 = vmatpush1.bf16.msra.mxu0 0
        %1279 = vmatprep.subr.bf16.mxu0 0
        %1280 = vmatpush1.bf16.msra.mxu0 %v1263
        %1281 = vmatprep.subr.bf16.mxu0 0
        %1282 = vmatpush2.bf16.msra.mxu0 0
        %1283 = vmatprep.subr.bf16.mxu0 0
        %1284 = vmatpush2.bf16.msra.mxu0 0
        %1285 = vmatprep.subr.bf16.mxu0 0
        %1286 = vmatpush2.bf16.msra.mxu0 0
        %1287 = vmatprep.subr.bf16.mxu0 0
        %1288 = vmatpush2.bf16.msra.mxu0 0
        %1289 = vmatprep.subr.bf16.mxu0 0
        %1290 = vmatpush2.bf16.msra.mxu0 0
        %1291 = vmatprep.subr.bf16.mxu0 0
        %1292 = vmatpush2.bf16.msra.mxu0 0
        %1293 = vmatprep.subr.bf16.mxu0 0
        %1294 = vmatpush2.bf16.msra.mxu0 0
        %1295 = vmatprep.subr.bf16.mxu0 0
        %1296 = vmatpush2.bf16.msra.mxu0 0
        %1297 = vmatprep.mubr.bf16.mxu0 0
        %1298 = vmatmul.mubr.bf16.gmra.mxu0 %v1260
        %v1299 = vpop.f32.mrf.mxu0
        %v1300 = vadd.f32 0.0, %v1299
        %v1301 = vpop.f32.mrf.mxu0
        %v1302 = vpop.f32.mrf.mxu0
        %v1303 = vpop.f32.mrf.mxu0
        %1304 = vdwg.mxu0
        %v1305 = vadd.f32 %v1146, %v1300
        %v1306 = vadd.f32 %v562, %v1305
        %v1307 = vld [vmem:[%s12 + $0x1] sm:$0x1]
        %v1308 = vld [vmem:[%s13 + $0x1] sm:$0x1]
        %v1309 = vsel %vm568, %v1306, 0.0
        %1310 = vadd.xlane.f32.xlu0 %v1309
        %v1311 = vpop.xlane.xlu0 %1310
        %v1312 = vmul.f32 %v1311, %v572
        %v1313 = vsub.f32 %v1306, %v1312
        %v1314 = vmul.f32 %v1313, %v1313
        %v1315 = vsel %vm568, %v1314, 0.0
        %1316 = vadd.xlane.f32.xlu0 %v1315
        %v1317 = vpop.xlane.xlu0 %1316
        %v1318 = vmul.f32 %v1317, %v579
        %v1319 = vrsqrt.pop %v1318
        %v1320 = vmul.f32 %v1318, %v1319
        %vm1321 = vcmp.eq.f32.partialorder %v1318, inf
        %v1322 = vsel %vm1321, %v1318, %v1320
        %vm1323 = vcmp.eq.f32.partialorder %v1318, 0.0
        %v1324 = vand.u32 %v1318, 2147483648
        %v1325 = vsel %vm1323, %v1324, %v1322
        %v1326 = vadd.f32 %v1325, 1e-06
        %v1327 = vrcp.pop %v1326
        %v1328 = vlaneseq
        %v1329 = vshrl.u32 %v1328, 7
        %v1330 = vsub.s32 0, %v1329
        %v1331 = vrot.slane %v1307, %v1330
        %v1332 = vmul.f32 %v1331, %v1313
        %v1333 = vmul.f32 %v1332, %v1327
        %v1334 = vlaneseq
        %v1335 = vshrl.u32 %v1334, 7
        %v1336 = vsub.s32 0, %v1335
        %v1337 = vrot.slane %v1308, %v1336
        %v1338 = vadd.f32 %v1333, %v1337
        %v1339 = vpack.c.bf16 %v1338, %v1338
        %v1340 = vld [vmem:[%s5] sm:$0xf]
        %v1341 = vld [vmem:[%s5 + $0x4] sm:$0xf]
        %v1342 = vld [vmem:[%s5 + $0x8] sm:$0xf]
        %v1343 = vld [vmem:[%s5 + $0xc] sm:$0xf]
        %v1348 = vunpack.c.l.b16 %v1340
        %v1349 = vunpack.c.l.b16 %v1341
        %v1350 = vunpack.c.l.b16 %v1342
        %v1351 = vunpack.c.l.b16 %v1343
        %v1352 = vpack.c.b16 %v1349, %v1348
        %v1353 = vpack.c.b16 %v1351, %v1350
        %v1357 = vsel %vm568, %v1339, 0
        %1359 = vmatprep.subr.bf16.mxu0 0
        %1360 = vmatpush1.bf16.msra.mxu0 0
        %1361 = vmatprep.subr.bf16.mxu0 0
        %1362 = vmatpush1.bf16.msra.mxu0 0
        %1363 = vmatprep.subr.bf16.mxu0 0
        %1364 = vmatpush1.bf16.msra.mxu0 0
        %1365 = vmatprep.subr.bf16.mxu0 0
        %1366 = vmatpush1.bf16.msra.mxu0 0
        %1367 = vmatprep.subr.bf16.mxu0 0
        %1368 = vmatpush1.bf16.msra.mxu0 0
        %1369 = vmatprep.subr.bf16.mxu0 0
        %1370 = vmatpush1.bf16.msra.mxu0 0
        %1371 = vmatprep.subr.bf16.mxu0 0
        %1372 = vmatpush1.bf16.msra.mxu0 %v1353
        %1373 = vmatprep.subr.bf16.mxu0 0
        %1374 = vmatpush1.bf16.msra.mxu0 %v1352
        %1375 = vmatprep.subr.bf16.mxu0 0
        %1376 = vmatpush2.bf16.msra.mxu0 0
        %1377 = vmatprep.subr.bf16.mxu0 0
        %1378 = vmatpush2.bf16.msra.mxu0 0
        %1379 = vmatprep.subr.bf16.mxu0 0
        %1380 = vmatpush2.bf16.msra.mxu0 0
        %1381 = vmatprep.subr.bf16.mxu0 0
        %1382 = vmatpush2.bf16.msra.mxu0 0
        %1383 = vmatprep.subr.bf16.mxu0 0
        %1384 = vmatpush2.bf16.msra.mxu0 0
        %1385 = vmatprep.subr.bf16.mxu0 0
        %1386 = vmatpush2.bf16.msra.mxu0 0
        %1387 = vmatprep.subr.bf16.mxu0 0
        %1388 = vmatpush2.bf16.msra.mxu0 0
        %1389 = vmatprep.subr.bf16.mxu0 0
        %1390 = vmatpush2.bf16.msra.mxu0 0
        %1391 = vmatprep.mubr.bf16.mxu0 0
        %1392 = vmatmul.mubr.bf16.gmra.mxu0 %v1357
        %v1393 = vpop.f32.mrf.mxu0
        %v1394 = vadd.f32 0.0, %v1393
        %v1395 = vpop.f32.mrf.mxu0
        %v1396 = vpop.f32.mrf.mxu0
        %v1397 = vpop.f32.mrf.mxu0
        %1398 = vdwg.mxu0
        %v1399 = vld [vmem:[#allocation5] sm:$0xf]
        %v1400 = vld [vmem:[#allocation5 + $0x4] sm:$0xf]
        %v1401 = vld [vmem:[#allocation5 + $0x8] sm:$0xf]
        %v1402 = vld [vmem:[#allocation5 + $0xc] sm:$0xf]
        %v1405 = vunpack.c.l.b16 %v563
        %v1406 = vunpack.c.l.b16 %v564
        %v1407 = vpack.c.b16 %v1406, %v1405
        %v1412 = vunpack.c.l.b16 %v1399
        %v1413 = vunpack.c.l.b16 %v1400
        %v1414 = vunpack.c.l.b16 %v1401
        %v1415 = vunpack.c.l.b16 %v1402
        %v1416 = vpack.c.b16 %v1413, %v1412
        %v1417 = vpack.c.b16 %v1415, %v1414
        %v1421 = vsel %vm568, %v1407, 0
        %1423 = vmatprep.subr.bf16.mxu0 0
        %1424 = vmatpush1.bf16.msra.mxu0 0
        %1425 = vmatprep.subr.bf16.mxu0 0
        %1426 = vmatpush1.bf16.msra.mxu0 0
        %1427 = vmatprep.subr.bf16.mxu0 0
        %1428 = vmatpush1.bf16.msra.mxu0 0
        %1429 = vmatprep.subr.bf16.mxu0 0
        %1430 = vmatpush1.bf16.msra.mxu0 0
        %1431 = vmatprep.subr.bf16.mxu0 0
        %1432 = vmatpush1.bf16.msra.mxu0 0
        %1433 = vmatprep.subr.bf16.mxu0 0
        %1434 = vmatpush1.bf16.msra.mxu0 0
        %1435 = vmatprep.subr.bf16.mxu0 0
        %1436 = vmatpush1.bf16.msra.mxu0 %v1417
        %1437 = vmatprep.subr.bf16.mxu0 0
        %1438 = vmatpush1.bf16.msra.mxu0 %v1416
        %1439 = vmatprep.subr.bf16.mxu0 0
        %1440 = vmatpush2.bf16.msra.mxu0 0
        %1441 = vmatprep.subr.bf16.mxu0 0
        %1442 = vmatpush2.bf16.msra.mxu0 0
        %1443 = vmatprep.subr.bf16.mxu0 0
        %1444 = vmatpush2.bf16.msra.mxu0 0
        %1445 = vmatprep.subr.bf16.mxu0 0
        %1446 = vmatpush2.bf16.msra.mxu0 0
        %1447 = vmatprep.subr.bf16.mxu0 0
        %1448 = vmatpush2.bf16.msra.mxu0 0
        %1449 = vmatprep.subr.bf16.mxu0 0
        %1450 = vmatpush2.bf16.msra.mxu0 0
        %1451 = vmatprep.subr.bf16.mxu0 0
        %1452 = vmatpush2.bf16.msra.mxu0 0
        %1453 = vmatprep.subr.bf16.mxu0 0
        %1454 = vmatpush2.bf16.msra.mxu0 0
        %1455 = vmatprep.mubr.bf16.mxu0 0
        %1456 = vmatmul.mubr.bf16.gmra.mxu0 %v1421
        %v1457 = vpop.f32.mrf.mxu0
        %v1458 = vadd.f32 0.0, %v1457
        %v1459 = vpop.f32.mrf.mxu0
        %v1460 = vpop.f32.mrf.mxu0
        %v1461 = vadd.f32 0.0, %v1460
        %v1462 = vpop.f32.mrf.mxu0
        %1463 = vdwg.mxu0
        %v1464 = vld [vmem:[#allocation7] sm:$0xf]
        %v1465 = vld [vmem:[#allocation7 + $0x4] sm:$0xf]
        %v1466 = vld [vmem:[#allocation7 + $0x8] sm:$0xf]
        %v1467 = vld [vmem:[#allocation7 + $0xc] sm:$0xf]
        %v1468 = vpack.c.bf16 %v1394, %v1394
        %v1469 = vpack.c.bf16 %v1461, %v1458
        %v1471 = vlaneseq
        %v1472 = vshrl.u32 %v1471, 7
        %v1473 = vsub.s32 0, %v1472
        %v1474 = vrot.slane %v565, %v1473
        %v1477 = vsel %vm669, %v1468, 0
        %v1480 = vsel %vm669, %v1469, 0
        %1482 = vmatprep.subr.bf16.mxu0 0
        %1483 = vmatpush1.bf16.xpose.msra.mxu0 0
        %1484 = vmatprep.subr.bf16.mxu0 0
        %1485 = vmatpush1.bf16.xpose.msra.mxu0 0
        %1486 = vmatprep.subr.bf16.mxu0 0
        %1487 = vmatpush1.bf16.xpose.msra.mxu0 0
        %1488 = vmatprep.subr.bf16.mxu0 0
        %1489 = vmatpush1.bf16.xpose.msra.mxu0 0
        %1490 = vmatprep.subr.bf16.mxu0 0
        %1491 = vmatpush1.bf16.xpose.msra.mxu0 0
        %1492 = vmatprep.subr.bf16.mxu0 0
        %1493 = vmatpush1.bf16.xpose.msra.mxu0 0
        %1494 = vmatprep.subr.bf16.mxu0 0
        %1495 = vmatpush1.bf16.xpose.msra.mxu0 0
        %1496 = vmatprep.subr.bf16.mxu0 0
        %1497 = vmatpush1.bf16.xpose.msra.mxu0 %v1480
        %1498 = vmatprep.subr.bf16.mxu0 0
        %1499 = vmatpush2.bf16.xpose.msra.mxu0 0
        %1500 = vmatprep.subr.bf16.mxu0 0
        %1501 = vmatpush2.bf16.xpose.msra.mxu0 0
        %1502 = vmatprep.subr.bf16.mxu0 0
        %1503 = vmatpush2.bf16.xpose.msra.mxu0 0
        %1504 = vmatprep.subr.bf16.mxu0 0
        %1505 = vmatpush2.bf16.xpose.msra.mxu0 0
        %1506 = vmatprep.subr.bf16.mxu0 0
        %1507 = vmatpush2.bf16.xpose.msra.mxu0 0
        %1508 = vmatprep.subr.bf16.mxu0 0
        %1509 = vmatpush2.bf16.xpose.msra.mxu0 0
        %1510 = vmatprep.subr.bf16.mxu0 0
        %1511 = vmatpush2.bf16.xpose.msra.mxu0 0
        %1512 = vmatprep.subr.bf16.mxu0 0
        %1513 = vmatpush2.bf16.xpose.msra.mxu0 0
        %1514 = vmatprep.mubr.bf16.mxu0 0
        %1515 = vmatmul.mubr.bf16.gmra.mxu0 %v1477
        %v1516 = vpop.f32.mrf.mxu0
        %v1517 = vadd.f32 %v1474, %v1516
        %v1518 = vpop.f32.mrf.mxu0
        %v1519 = vpop.f32.mrf.mxu0
        %v1520 = vpop.f32.mrf.mxu0
        %1521 = vdwg.mxu0
        %vm1522 = vcmask 80896
        %v1523 = vsel %vm1522, %v1517, -inf
        %1524 = vmax.xlane.f32.xlu0 %v1523
        %v1525 = vpop.xlane.xlu0 %1524
        %v1526 = vsub.f32 %v1517, %v1525
        %v1527 = vmul.f32 %v1526, 1.442695
        %v1528 = vpow.pop %v1527
        %v1529 = vsel %vm1522, %v1528, 0.0
        %1530 = vadd.xlane.f32.xlu0 %v1529
        %v1531 = vpop.xlane.xlu0 %1530
        %v1532 = vrcp.pop %v1531
        %v1533 = vmul.f32 %v1528, %v1532
        %v1534 = vpack.c.bf16 %v1533, %v1533
        %1536 = vrot.lane.b32.xlu0 %v1469, 96
        %v1537 = vpop.permute.xlu0 %1536
        %v1539 = vsel %vm1522, %v1534, 0
        %vm1541 = vcmask 1044480
        %v1543 = vsel %vm1541, %v1537, 0
        %1545 = vmatprep.subr.bf16.mxu0 0
        %1546 = vmatpush1.bf16.msra.mxu0 0
        %1547 = vmatprep.subr.bf16.mxu0 0
        %1548 = vmatpush1.bf16.msra.mxu0 0
        %1549 = vmatprep.subr.bf16.mxu0 0
        %1550 = vmatpush1.bf16.msra.mxu0 0
        %1551 = vmatprep.subr.bf16.mxu0 0
        %1552 = vmatpush1.bf16.msra.mxu0 0
        %1553 = vmatprep.subr.bf16.mxu0 0
        %1554 = vmatpush1.bf16.msra.mxu0 0
        %1555 = vmatprep.subr.bf16.mxu0 0
        %1556 = vmatpush1.bf16.msra.mxu0 0
        %1557 = vmatprep.subr.bf16.mxu0 0
        %1558 = vmatpush1.bf16.msra.mxu0 0
        %1559 = vmatprep.subr.bf16.mxu0 0
        %1560 = vmatpush1.bf16.msra.mxu0 %v1543
        %1561 = vmatprep.subr.bf16.mxu0 0
        %1562 = vmatpush2.bf16.msra.mxu0 0
        %1563 = vmatprep.subr.bf16.mxu0 0
        %1564 = vmatpush2.bf16.msra.mxu0 0
        %1565 = vmatprep.subr.bf16.mxu0 0
        %1566 = vmatpush2.bf16.msra.mxu0 0
        %1567 = vmatprep.subr.bf16.mxu0 0
        %1568 = vmatpush2.bf16.msra.mxu0 0
        %1569 = vmatprep.subr.bf16.mxu0 0
        %1570 = vmatpush2.bf16.msra.mxu0 0
        %1571 = vmatprep.subr.bf16.mxu0 0
        %1572 = vmatpush2.bf16.msra.mxu0 0
        %1573 = vmatprep.subr.bf16.mxu0 0
        %1574 = vmatpush2.bf16.msra.mxu0 0
        %1575 = vmatprep.subr.bf16.mxu0 0
        %1576 = vmatpush2.bf16.msra.mxu0 0
        %1577 = vmatprep.mubr.bf16.mxu0 0
        %1578 = vmatmul.mubr.bf16.gmra.mxu0 %v1539
        %v1579 = vpop.f32.mrf.mxu0
        %v1580 = vadd.f32 0.0, %v1579
        %v1581 = vpop.f32.mrf.mxu0
        %v1582 = vpop.f32.mrf.mxu0
        %v1583 = vpop.f32.mrf.mxu0
        %1584 = vdwg.mxu0
        %v1585 = vpack.c.bf16 %v1580, %v1580
        %1587 = vrot.lane.b32.xlu0 %v1468, 120
        %v1588 = vpop.permute.xlu0 %1587
        %1589 = vrot.lane.b32.xlu0 %v1469, 120
        %v1590 = vpop.permute.xlu0 %1589
        %v1592 = vsel %vm669, %v1588, 0
        %v1595 = vsel %vm669, %v1590, 0
        %1597 = vmatprep.subr.bf16.mxu0 0
        %1598 = vmatpush1.bf16.xpose.msra.mxu0 0
        %1599 = vmatprep.subr.bf16.mxu0 0
        %1600 = vmatpush1.bf16.xpose.msra.mxu0 0
        %1601 = vmatprep.subr.bf16.mxu0 0
        %1602 = vmatpush1.bf16.xpose.msra.mxu0 0
        %1603 = vmatprep.subr.bf16.mxu0 0
        %1604 = vmatpush1.bf16.xpose.msra.mxu0 0
        %1605 = vmatprep.subr.bf16.mxu0 0
        %1606 = vmatpush1.bf16.xpose.msra.mxu0 0
        %1607 = vmatprep.subr.bf16.mxu0 0
        %1608 = vmatpush1.bf16.xpose.msra.mxu0 0
        %1609 = vmatprep.subr.bf16.mxu0 0
        %1610 = vmatpush1.bf16.xpose.msra.mxu0 0
        %1611 = vmatprep.subr.bf16.mxu0 0
        %1612 = vmatpush1.bf16.xpose.msra.mxu0 %v1595
        %1613 = vmatprep.subr.bf16.mxu0 0
        %1614 = vmatpush2.bf16.xpose.msra.mxu0 0
        %1615 = vmatprep.subr.bf16.mxu0 0
        %1616 = vmatpush2.bf16.xpose.msra.mxu0 0
        %1617 = vmatprep.subr.bf16.mxu0 0
        %1618 = vmatpush2.bf16.xpose.msra.mxu0 0
        %1619 = vmatprep.subr.bf16.mxu0 0
        %1620 = vmatpush2.bf16.xpose.msra.mxu0 0
        %1621 = vmatprep.subr.bf16.mxu0 0
        %1622 = vmatpush2.bf16.xpose.msra.mxu0 0
        %1623 = vmatprep.subr.bf16.mxu0 0
        %1624 = vmatpush2.bf16.xpose.msra.mxu0 0
        %1625 = vmatprep.subr.bf16.mxu0 0
        %1626 = vmatpush2.bf16.xpose.msra.mxu0 0
        %1627 = vmatprep.subr.bf16.mxu0 0
        %1628 = vmatpush2.bf16.xpose.msra.mxu0 0
        %1629 = vmatprep.mubr.bf16.mxu0 0
        %1630 = vmatmul.mubr.bf16.gmra.mxu0 %v1592
        %v1631 = vpop.f32.mrf.mxu0
        %v1632 = vadd.f32 %v1474, %v1631
        %v1633 = vpop.f32.mrf.mxu0
        %v1634 = vpop.f32.mrf.mxu0
        %v1635 = vpop.f32.mrf.mxu0
        %1636 = vdwg.mxu0
        %v1637 = vsel %vm1522, %v1632, -inf
        %1638 = vmax.xlane.f32.xlu0 %v1637
        %v1639 = vpop.xlane.xlu0 %1638
        %v1640 = vsub.f32 %v1632, %v1639
        %v1641 = vmul.f32 %v1640, 1.442695
        %v1642 = vpow.pop %v1641
        %v1643 = vsel %vm1522, %v1642, 0.0
        %1644 = vadd.xlane.f32.xlu0 %v1643
        %v1645 = vpop.xlane.xlu0 %1644
        %v1646 = vrcp.pop %v1645
        %v1647 = vmul.f32 %v1642, %v1646
        %v1648 = vpack.c.bf16 %v1647, %v1647
        %1649 = vrot.lane.b32.xlu0 %v1469, 88
        %v1650 = vpop.permute.xlu0 %1649
        %v1652 = vsel %vm1522, %v1648, 0
        %v1655 = vsel %vm1541, %v1650, 0
        %1657 = vmatprep.subr.bf16.mxu0 0
        %1658 = vmatpush1.bf16.msra.mxu0 0
        %1659 = vmatprep.subr.bf16.mxu0 0
        %1660 = vmatpush1.bf16.msra.mxu0 0
        %1661 = vmatprep.subr.bf16.mxu0 0
        %1662 = vmatpush1.bf16.msra.mxu0 0
        %1663 = vmatprep.subr.bf16.mxu0 0
        %1664 = vmatpush1.bf16.msra.mxu0 0
        %1665 = vmatprep.subr.bf16.mxu0 0
        %1666 = vmatpush1.bf16.msra.mxu0 0
        %1667 = vmatprep.subr.bf16.mxu0 0
        %1668 = vmatpush1.bf16.msra.mxu0 0
        %1669 = vmatprep.subr.bf16.mxu0 0
        %1670 = vmatpush1.bf16.msra.mxu0 0
        %1671 = vmatprep.subr.bf16.mxu0 0
        %1672 = vmatpush1.bf16.msra.mxu0 %v1655
        %1673 = vmatprep.subr.bf16.mxu0 0
        %1674 = vmatpush2.bf16.msra.mxu0 0
        %1675 = vmatprep.subr.bf16.mxu0 0
        %1676 = vmatpush2.bf16.msra.mxu0 0
        %1677 = vmatprep.subr.bf16.mxu0 0
        %1678 = vmatpush2.bf16.msra.mxu0 0
        %1679 = vmatprep.subr.bf16.mxu0 0
        %1680 = vmatpush2.bf16.msra.mxu0 0
        %1681 = vmatprep.subr.bf16.mxu0 0
        %1682 = vmatpush2.bf16.msra.mxu0 0
        %1683 = vmatprep.subr.bf16.mxu0 0
        %1684 = vmatpush2.bf16.msra.mxu0 0
        %1685 = vmatprep.subr.bf16.mxu0 0
        %1686 = vmatpush2.bf16.msra.mxu0 0
        %1687 = vmatprep.subr.bf16.mxu0 0
        %1688 = vmatpush2.bf16.msra.mxu0 0
        %1689 = vmatprep.mubr.bf16.mxu0 0
        %1690 = vmatmul.mubr.bf16.gmra.mxu0 %v1652
        %v1691 = vpop.f32.mrf.mxu0
        %v1692 = vadd.f32 0.0, %v1691
        %v1693 = vpop.f32.mrf.mxu0
        %v1694 = vpop.f32.mrf.mxu0
        %v1695 = vpop.f32.mrf.mxu0
        %1696 = vdwg.mxu0
        %v1697 = vpack.c.bf16 %v1692, %v1692
        %v1699 = vsel %vm669, %v1697, 0
        %v1702 = vsel %vm739, %v1465, 0
        %1704 = vmatprep.subr.bf16.mxu0 0
        %1705 = vmatpush1.bf16.msra.mxu0 0
        %1706 = vmatprep.subr.bf16.mxu0 0
        %1707 = vmatpush1.bf16.msra.mxu0 0
        %1708 = vmatprep.subr.bf16.mxu0 0
        %1709 = vmatpush1.bf16.msra.mxu0 0
        %1710 = vmatprep.subr.bf16.mxu0 0
        %1711 = vmatpush1.bf16.msra.mxu0 0
        %1712 = vmatprep.subr.bf16.mxu0 0
        %1713 = vmatpush1.bf16.msra.mxu0 0
        %1714 = vmatprep.subr.bf16.mxu0 0
        %1715 = vmatpush1.bf16.msra.mxu0 0
        %1716 = vmatprep.subr.bf16.mxu0 0
        %1717 = vmatpush1.bf16.msra.mxu0 0
        %1718 = vmatprep.subr.bf16.mxu0 0
        %1719 = vmatpush1.bf16.msra.mxu0 %v1702
        %1720 = vmatprep.subr.bf16.mxu0 0
        %1721 = vmatpush2.bf16.msra.mxu0 0
        %1722 = vmatprep.subr.bf16.mxu0 0
        %1723 = vmatpush2.bf16.msra.mxu0 0
        %1724 = vmatprep.subr.bf16.mxu0 0
        %1725 = vmatpush2.bf16.msra.mxu0 0
        %1726 = vmatprep.subr.bf16.mxu0 0
        %1727 = vmatpush2.bf16.msra.mxu0 0
        %1728 = vmatprep.subr.bf16.mxu0 0
        %1729 = vmatpush2.bf16.msra.mxu0 0
        %1730 = vmatprep.subr.bf16.mxu0 0
        %1731 = vmatpush2.bf16.msra.mxu0 0
        %1732 = vmatprep.subr.bf16.mxu0 0
        %1733 = vmatpush2.bf16.msra.mxu0 0
        %1734 = vmatprep.subr.bf16.mxu0 0
        %1735 = vmatpush2.bf16.msra.mxu0 0
        %1736 = vmatprep.mubr.bf16.mxu0 0
        %1737 = vmatmul.mubr.bf16.gmra.mxu0 %v1699
        %v1738 = vpop.f32.mrf.mxu0
        %v1739 = vadd.f32 0.0, %v1738
        %v1740 = vpop.f32.mrf.mxu0
        %v1741 = vpop.f32.mrf.mxu0
        %v1742 = vpop.f32.mrf.mxu0
        %1743 = vdwg.mxu0
        %v1745 = vsel %vm669, %v1585, 0
        %v1748 = vsel %vm739, %v1464, 0
        %1750 = vmatprep.subr.bf16.mxu0 0
        %1751 = vmatpush1.bf16.msra.mxu0 0
        %1752 = vmatprep.subr.bf16.mxu0 0
        %1753 = vmatpush1.bf16.msra.mxu0 0
        %1754 = vmatprep.subr.bf16.mxu0 0
        %1755 = vmatpush1.bf16.msra.mxu0 0
        %1756 = vmatprep.subr.bf16.mxu0 0
        %1757 = vmatpush1.bf16.msra.mxu0 0
        %1758 = vmatprep.subr.bf16.mxu0 0
        %1759 = vmatpush1.bf16.msra.mxu0 0
        %1760 = vmatprep.subr.bf16.mxu0 0
        %1761 = vmatpush1.bf16.msra.mxu0 0
        %1762 = vmatprep.subr.bf16.mxu0 0
        %1763 = vmatpush1.bf16.msra.mxu0 0
        %1764 = vmatprep.subr.bf16.mxu0 0
        %1765 = vmatpush1.bf16.msra.mxu0 %v1748
        %1766 = vmatprep.subr.bf16.mxu0 0
        %1767 = vmatpush2.bf16.msra.mxu0 0
        %1768 = vmatprep.subr.bf16.mxu0 0
        %1769 = vmatpush2.bf16.msra.mxu0 0
        %1770 = vmatprep.subr.bf16.mxu0 0
        %1771 = vmatpush2.bf16.msra.mxu0 0
        %1772 = vmatprep.subr.bf16.mxu0 0
        %1773 = vmatpush2.bf16.msra.mxu0 0
        %1774 = vmatprep.subr.bf16.mxu0 0
        %1775 = vmatpush2.bf16.msra.mxu0 0
        %1776 = vmatprep.subr.bf16.mxu0 0
        %1777 = vmatpush2.bf16.msra.mxu0 0
        %1778 = vmatprep.subr.bf16.mxu0 0
        %1779 = vmatpush2.bf16.msra.mxu0 0
        %1780 = vmatprep.subr.bf16.mxu0 0
        %1781 = vmatpush2.bf16.msra.mxu0 0
        %1782 = vmatprep.mubr.bf16.mxu0 0
        %1783 = vmatmul.mubr.bf16.gmra.mxu0 %v1745
        %v1784 = vpop.f32.mrf.mxu0
        %v1785 = vadd.f32 %v1739, %v1784
        %v1786 = vpop.f32.mrf.mxu0
        %v1787 = vpop.f32.mrf.mxu0
        %v1788 = vpop.f32.mrf.mxu0
        %1789 = vdwg.mxu0
        %1790 = vrot.lane.b32.xlu0 %v1468, 112
        %v1791 = vpop.permute.xlu0 %1790
        %1792 = vrot.lane.b32.xlu0 %v1469, 112
        %v1793 = vpop.permute.xlu0 %1792
        %v1795 = vsel %vm669, %v1791, 0
        %v1798 = vsel %vm669, %v1793, 0
        %1800 = vmatprep.subr.bf16.mxu0 0
        %1801 = vmatpush1.bf16.xpose.msra.mxu0 0
        %1802 = vmatprep.subr.bf16.mxu0 0
        %1803 = vmatpush1.bf16.xpose.msra.mxu0 0
        %1804 = vmatprep.subr.bf16.mxu0 0
        %1805 = vmatpush1.bf16.xpose.msra.mxu0 0
        %1806 = vmatprep.subr.bf16.mxu0 0
        %1807 = vmatpush1.bf16.xpose.msra.mxu0 0
        %1808 = vmatprep.subr.bf16.mxu0 0
        %1809 = vmatpush1.bf16.xpose.msra.mxu0 0
        %1810 = vmatprep.subr.bf16.mxu0 0
        %1811 = vmatpush1.bf16.xpose.msra.mxu0 0
        %1812 = vmatprep.subr.bf16.mxu0 0
        %1813 = vmatpush1.bf16.xpose.msra.mxu0 0
        %1814 = vmatprep.subr.bf16.mxu0 0
        %1815 = vmatpush1.bf16.xpose.msra.mxu0 %v1798
        %1816 = vmatprep.subr.bf16.mxu0 0
        %1817 = vmatpush2.bf16.xpose.msra.mxu0 0
        %1818 = vmatprep.subr.bf16.mxu0 0
        %1819 = vmatpush2.bf16.xpose.msra.mxu0 0
        %1820 = vmatprep.subr.bf16.mxu0 0
        %1821 = vmatpush2.bf16.xpose.msra.mxu0 0
        %1822 = vmatprep.subr.bf16.mxu0 0
        %1823 = vmatpush2.bf16.xpose.msra.mxu0 0
        %1824 = vmatprep.subr.bf16.mxu0 0
        %1825 = vmatpush2.bf16.xpose.msra.mxu0 0
        %1826 = vmatprep.subr.bf16.mxu0 0
        %1827 = vmatpush2.bf16.xpose.msra.mxu0 0
        %1828 = vmatprep.subr.bf16.mxu0 0
        %1829 = vmatpush2.bf16.xpose.msra.mxu0 0
        %1830 = vmatprep.subr.bf16.mxu0 0
        %1831 = vmatpush2.bf16.xpose.msra.mxu0 0
        %1832 = vmatprep.mubr.bf16.mxu0 0
        %1833 = vmatmul.mubr.bf16.gmra.mxu0 %v1795
        %v1834 = vpop.f32.mrf.mxu0
        %v1835 = vadd.f32 %v1474, %v1834
        %v1836 = vpop.f32.mrf.mxu0
        %v1837 = vpop.f32.mrf.mxu0
        %v1838 = vpop.f32.mrf.mxu0
        %1839 = vdwg.mxu0
        %v1840 = vsel %vm1522, %v1835, -inf
        %1841 = vmax.xlane.f32.xlu0 %v1840
        %v1842 = vpop.xlane.xlu0 %1841
        %v1843 = vsub.f32 %v1835, %v1842
        %v1844 = vmul.f32 %v1843, 1.442695
        %v1845 = vpow.pop %v1844
        %v1846 = vsel %vm1522, %v1845, 0.0
        %1847 = vadd.xlane.f32.xlu0 %v1846
        %v1848 = vpop.xlane.xlu0 %1847
        %v1849 = vrcp.pop %v1848
        %v1850 = vmul.f32 %v1845, %v1849
        %v1851 = vpack.c.bf16 %v1850, %v1850
        %1852 = vrot.lane.b32.xlu0 %v1469, 80
        %v1853 = vpop.permute.xlu0 %1852
        %v1855 = vsel %vm1522, %v1851, 0
        %v1858 = vsel %vm1541, %v1853, 0
        %1860 = vmatprep.subr.bf16.mxu0 0
        %1861 = vmatpush1.bf16.msra.mxu0 0
        %1862 = vmatprep.subr.bf16.mxu0 0
        %1863 = vmatpush1.bf16.msra.mxu0 0
        %1864 = vmatprep.subr.bf16.mxu0 0
        %1865 = vmatpush1.bf16.msra.mxu0 0
        %1866 = vmatprep.subr.bf16.mxu0 0
        %1867 = vmatpush1.bf16.msra.mxu0 0
        %1868 = vmatprep.subr.bf16.mxu0 0
        %1869 = vmatpush1.bf16.msra.mxu0 0
        %1870 = vmatprep.subr.bf16.mxu0 0
        %1871 = vmatpush1.bf16.msra.mxu0 0
        %1872 = vmatprep.subr.bf16.mxu0 0
        %1873 = vmatpush1.bf16.msra.mxu0 0
        %1874 = vmatprep.subr.bf16.mxu0 0
        %1875 = vmatpush1.bf16.msra.mxu0 %v1858
        %1876 = vmatprep.subr.bf16.mxu0 0
        %1877 = vmatpush2.bf16.msra.mxu0 0
        %1878 = vmatprep.subr.bf16.mxu0 0
        %1879 = vmatpush2.bf16.msra.mxu0 0
        %1880 = vmatprep.subr.bf16.mxu0 0
        %1881 = vmatpush2.bf16.msra.mxu0 0
        %1882 = vmatprep.subr.bf16.mxu0 0
        %1883 = vmatpush2.bf16.msra.mxu0 0
        %1884 = vmatprep.subr.bf16.mxu0 0
        %1885 = vmatpush2.bf16.msra.mxu0 0
        %1886 = vmatprep.subr.bf16.mxu0 0
        %1887 = vmatpush2.bf16.msra.mxu0 0
        %1888 = vmatprep.subr.bf16.mxu0 0
        %1889 = vmatpush2.bf16.msra.mxu0 0
        %1890 = vmatprep.subr.bf16.mxu0 0
        %1891 = vmatpush2.bf16.msra.mxu0 0
        %1892 = vmatprep.mubr.bf16.mxu0 0
        %1893 = vmatmul.mubr.bf16.gmra.mxu0 %v1855
        %v1894 = vpop.f32.mrf.mxu0
        %v1895 = vadd.f32 0.0, %v1894
        %v1896 = vpop.f32.mrf.mxu0
        %v1897 = vpop.f32.mrf.mxu0
        %v1898 = vpop.f32.mrf.mxu0
        %1899 = vdwg.mxu0
        %v1900 = vpack.c.bf16 %v1895, %v1895
        %v1902 = vsel %vm669, %v1900, 0
        %v1905 = vsel %vm739, %v1466, 0
        %1907 = vmatprep.subr.bf16.mxu0 0
        %1908 = vmatpush1.bf16.msra.mxu0 0
        %1909 = vmatprep.subr.bf16.mxu0 0
        %1910 = vmatpush1.bf16.msra.mxu0 0
        %1911 = vmatprep.subr.bf16.mxu0 0
        %1912 = vmatpush1.bf16.msra.mxu0 0
        %1913 = vmatprep.subr.bf16.mxu0 0
        %1914 = vmatpush1.bf16.msra.mxu0 0
        %1915 = vmatprep.subr.bf16.mxu0 0
        %1916 = vmatpush1.bf16.msra.mxu0 0
        %1917 = vmatprep.subr.bf16.mxu0 0
        %1918 = vmatpush1.bf16.msra.mxu0 0
        %1919 = vmatprep.subr.bf16.mxu0 0
        %1920 = vmatpush1.bf16.msra.mxu0 0
        %1921 = vmatprep.subr.bf16.mxu0 0
        %1922 = vmatpush1.bf16.msra.mxu0 %v1905
        %1923 = vmatprep.subr.bf16.mxu0 0
        %1924 = vmatpush2.bf16.msra.mxu0 0
        %1925 = vmatprep.subr.bf16.mxu0 0
        %1926 = vmatpush2.bf16.msra.mxu0 0
        %1927 = vmatprep.subr.bf16.mxu0 0
        %1928 = vmatpush2.bf16.msra.mxu0 0
        %1929 = vmatprep.subr.bf16.mxu0 0
        %1930 = vmatpush2.bf16.msra.mxu0 0
        %1931 = vmatprep.subr.bf16.mxu0 0
        %1932 = vmatpush2.bf16.msra.mxu0 0
        %1933 = vmatprep.subr.bf16.mxu0 0
        %1934 = vmatpush2.bf16.msra.mxu0 0
        %1935 = vmatprep.subr.bf16.mxu0 0
        %1936 = vmatpush2.bf16.msra.mxu0 0
        %1937 = vmatprep.subr.bf16.mxu0 0
        %1938 = vmatpush2.bf16.msra.mxu0 0
        %1939 = vmatprep.mubr.bf16.mxu0 0
        %1940 = vmatmul.mubr.bf16.gmra.mxu0 %v1902
        %v1941 = vpop.f32.mrf.mxu0
        %v1942 = vadd.f32 0.0, %v1941
        %v1943 = vpop.f32.mrf.mxu0
        %v1944 = vpop.f32.mrf.mxu0
        %v1945 = vpop.f32.mrf.mxu0
        %1946 = vdwg.mxu0
        %v1947 = vadd.f32 %v1785, %v1942
        %1948 = vrot.lane.b32.xlu0 %v1468, 104
        %v1949 = vpop.permute.xlu0 %1948
        %1950 = vrot.lane.b32.xlu0 %v1469, 104
        %v1951 = vpop.permute.xlu0 %1950
        %v1953 = vsel %vm669, %v1949, 0
        %v1956 = vsel %vm669, %v1951, 0
        %1958 = vmatprep.subr.bf16.mxu0 0
        %1959 = vmatpush1.bf16.xpose.msra.mxu0 0
        %1960 = vmatprep.subr.bf16.mxu0 0
        %1961 = vmatpush1.bf16.xpose.msra.mxu0 0
        %1962 = vmatprep.subr.bf16.mxu0 0
        %1963 = vmatpush1.bf16.xpose.msra.mxu0 0
        %1964 = vmatprep.subr.bf16.mxu0 0
        %1965 = vmatpush1.bf16.xpose.msra.mxu0 0
        %1966 = vmatprep.subr.bf16.mxu0 0
        %1967 = vmatpush1.bf16.xpose.msra.mxu0 0
        %1968 = vmatprep.subr.bf16.mxu0 0
        %1969 = vmatpush1.bf16.xpose.msra.mxu0 0
        %1970 = vmatprep.subr.bf16.mxu0 0
        %1971 = vmatpush1.bf16.xpose.msra.mxu0 0
        %1972 = vmatprep.subr.bf16.mxu0 0
        %1973 = vmatpush1.bf16.xpose.msra.mxu0 %v1956
        %1974 = vmatprep.subr.bf16.mxu0 0
        %1975 = vmatpush2.bf16.xpose.msra.mxu0 0
        %1976 = vmatprep.subr.bf16.mxu0 0
        %1977 = vmatpush2.bf16.xpose.msra.mxu0 0
        %1978 = vmatprep.subr.bf16.mxu0 0
        %1979 = vmatpush2.bf16.xpose.msra.mxu0 0
        %1980 = vmatprep.subr.bf16.mxu0 0
        %1981 = vmatpush2.bf16.xpose.msra.mxu0 0
        %1982 = vmatprep.subr.bf16.mxu0 0
        %1983 = vmatpush2.bf16.xpose.msra.mxu0 0
        %1984 = vmatprep.subr.bf16.mxu0 0
        %1985 = vmatpush2.bf16.xpose.msra.mxu0 0
        %1986 = vmatprep.subr.bf16.mxu0 0
        %1987 = vmatpush2.bf16.xpose.msra.mxu0 0
        %1988 = vmatprep.subr.bf16.mxu0 0
        %1989 = vmatpush2.bf16.xpose.msra.mxu0 0
        %1990 = vmatprep.mubr.bf16.mxu0 0
        %1991 = vmatmul.mubr.bf16.gmra.mxu0 %v1953
        %v1992 = vpop.f32.mrf.mxu0
        %v1993 = vadd.f32 %v1474, %v1992
        %v1994 = vpop.f32.mrf.mxu0
        %v1995 = vpop.f32.mrf.mxu0
        %v1996 = vpop.f32.mrf.mxu0
        %1997 = vdwg.mxu0
        %v1998 = vsel %vm1522, %v1993, -inf
        %1999 = vmax.xlane.f32.xlu0 %v1998
        %v2000 = vpop.xlane.xlu0 %1999
        %v2001 = vsub.f32 %v1993, %v2000
        %v2002 = vmul.f32 %v2001, 1.442695
        %v2003 = vpow.pop %v2002
        %v2004 = vsel %vm1522, %v2003, 0.0
        %2005 = vadd.xlane.f32.xlu0 %v2004
        %v2006 = vpop.xlane.xlu0 %2005
        %v2007 = vrcp.pop %v2006
        %v2008 = vmul.f32 %v2003, %v2007
        %v2009 = vpack.c.bf16 %v2008, %v2008
        %2010 = vrot.lane.b32.xlu0 %v1469, 72
        %v2011 = vpop.permute.xlu0 %2010
        %v2013 = vsel %vm1522, %v2009, 0
        %v2016 = vsel %vm1541, %v2011, 0
        %2018 = vmatprep.subr.bf16.mxu0 0
        %2019 = vmatpush1.bf16.msra.mxu0 0
        %2020 = vmatprep.subr.bf16.mxu0 0
        %2021 = vmatpush1.bf16.msra.mxu0 0
        %2022 = vmatprep.subr.bf16.mxu0 0
        %2023 = vmatpush1.bf16.msra.mxu0 0
        %2024 = vmatprep.subr.bf16.mxu0 0
        %2025 = vmatpush1.bf16.msra.mxu0 0
        %2026 = vmatprep.subr.bf16.mxu0 0
        %2027 = vmatpush1.bf16.msra.mxu0 0
        %2028 = vmatprep.subr.bf16.mxu0 0
        %2029 = vmatpush1.bf16.msra.mxu0 0
        %2030 = vmatprep.subr.bf16.mxu0 0
        %2031 = vmatpush1.bf16.msra.mxu0 0
        %2032 = vmatprep.subr.bf16.mxu0 0
        %2033 = vmatpush1.bf16.msra.mxu0 %v2016
        %2034 = vmatprep.subr.bf16.mxu0 0
        %2035 = vmatpush2.bf16.msra.mxu0 0
        %2036 = vmatprep.subr.bf16.mxu0 0
        %2037 = vmatpush2.bf16.msra.mxu0 0
        %2038 = vmatprep.subr.bf16.mxu0 0
        %2039 = vmatpush2.bf16.msra.mxu0 0
        %2040 = vmatprep.subr.bf16.mxu0 0
        %2041 = vmatpush2.bf16.msra.mxu0 0
        %2042 = vmatprep.subr.bf16.mxu0 0
        %2043 = vmatpush2.bf16.msra.mxu0 0
        %2044 = vmatprep.subr.bf16.mxu0 0
        %2045 = vmatpush2.bf16.msra.mxu0 0
        %2046 = vmatprep.subr.bf16.mxu0 0
        %2047 = vmatpush2.bf16.msra.mxu0 0
        %2048 = vmatprep.subr.bf16.mxu0 0
        %2049 = vmatpush2.bf16.msra.mxu0 0
        %2050 = vmatprep.mubr.bf16.mxu0 0
        %2051 = vmatmul.mubr.bf16.gmra.mxu0 %v2013
        %v2052 = vpop.f32.mrf.mxu0
        %v2053 = vadd.f32 0.0, %v2052
        %v2054 = vpop.f32.mrf.mxu0
        %v2055 = vpop.f32.mrf.mxu0
        %v2056 = vpop.f32.mrf.mxu0
        %2057 = vdwg.mxu0
        %v2058 = vpack.c.bf16 %v2053, %v2053
        %v2060 = vsel %vm669, %v2058, 0
        %v2063 = vsel %vm739, %v1467, 0
        %2065 = vmatprep.subr.bf16.mxu0 0
        %2066 = vmatpush1.bf16.msra.mxu0 0
        %2067 = vmatprep.subr.bf16.mxu0 0
        %2068 = vmatpush1.bf16.msra.mxu0 0
        %2069 = vmatprep.subr.bf16.mxu0 0
        %2070 = vmatpush1.bf16.msra.mxu0 0
        %2071 = vmatprep.subr.bf16.mxu0 0
        %2072 = vmatpush1.bf16.msra.mxu0 0
        %2073 = vmatprep.subr.bf16.mxu0 0
        %2074 = vmatpush1.bf16.msra.mxu0 0
        %2075 = vmatprep.subr.bf16.mxu0 0
        %2076 = vmatpush1.bf16.msra.mxu0 0
        %2077 = vmatprep.subr.bf16.mxu0 0
        %2078 = vmatpush1.bf16.msra.mxu0 0
        %2079 = vmatprep.subr.bf16.mxu0 0
        %2080 = vmatpush1.bf16.msra.mxu0 %v2063
        %2081 = vmatprep.subr.bf16.mxu0 0
        %2082 = vmatpush2.bf16.msra.mxu0 0
        %2083 = vmatprep.subr.bf16.mxu0 0
        %2084 = vmatpush2.bf16.msra.mxu0 0
        %2085 = vmatprep.subr.bf16.mxu0 0
        %2086 = vmatpush2.bf16.msra.mxu0 0
        %2087 = vmatprep.subr.bf16.mxu0 0
        %2088 = vmatpush2.bf16.msra.mxu0 0
        %2089 = vmatprep.subr.bf16.mxu0 0
        %2090 = vmatpush2.bf16.msra.mxu0 0
        %2091 = vmatprep.subr.bf16.mxu0 0
        %2092 = vmatpush2.bf16.msra.mxu0 0
        %2093 = vmatprep.subr.bf16.mxu0 0
        %2094 = vmatpush2.bf16.msra.mxu0 0
        %2095 = vmatprep.subr.bf16.mxu0 0
        %2096 = vmatpush2.bf16.msra.mxu0 0
        %2097 = vmatprep.mubr.bf16.mxu0 0
        %2098 = vmatmul.mubr.bf16.gmra.mxu0 %v2060
        %v2099 = vpop.f32.mrf.mxu0
        %v2100 = vadd.f32 0.0, %v2099
        %v2101 = vpop.f32.mrf.mxu0
        %v2102 = vpop.f32.mrf.mxu0
        %v2103 = vpop.f32.mrf.mxu0
        %2104 = vdwg.mxu0
        %v2105 = vadd.f32 %v1947, %v2100
        %v2106 = vadd.f32 %v1306, %v2105
        %v2107 = vld [vmem:[%s12 + $0x2] sm:$0x1]
        %v2108 = vld [vmem:[%s13 + $0x2] sm:$0x1]
        %v2109 = vsel %vm568, %v2106, 0.0
        %2110 = vadd.xlane.f32.xlu0 %v2109
        %v2111 = vpop.xlane.xlu0 %2110
        %v2112 = vmul.f32 %v2111, %v572
        %v2113 = vsub.f32 %v2106, %v2112
        %v2114 = vmul.f32 %v2113, %v2113
        %v2115 = vsel %vm568, %v2114, 0.0
        %2116 = vadd.xlane.f32.xlu0 %v2115
        %v2117 = vpop.xlane.xlu0 %2116
        %v2118 = vmul.f32 %v2117, %v579
        %v2119 = vrsqrt.pop %v2118
        %v2120 = vmul.f32 %v2118, %v2119
        %vm2121 = vcmp.eq.f32.partialorder %v2118, inf
        %v2122 = vsel %vm2121, %v2118, %v2120
        %vm2123 = vcmp.eq.f32.partialorder %v2118, 0.0
        %v2124 = vand.u32 %v2118, 2147483648
        %v2125 = vsel %vm2123, %v2124, %v2122
        %v2126 = vadd.f32 %v2125, 1e-06
        %v2127 = vrcp.pop %v2126
        %v2128 = vlaneseq
        %v2129 = vshrl.u32 %v2128, 7
        %v2130 = vsub.s32 0, %v2129
        %v2131 = vrot.slane %v2107, %v2130
        %v2132 = vmul.f32 %v2131, %v2113
        %v2133 = vmul.f32 %v2132, %v2127
        %v2134 = vlaneseq
        %v2135 = vshrl.u32 %v2134, 7
        %v2136 = vsub.s32 0, %v2135
        %v2137 = vrot.slane %v2108, %v2136
        %v2138 = vadd.f32 %v2133, %v2137
        %v2139 = vpack.c.bf16 %v2138, %v2138
        %v2140 = vld [vmem:[#allocation8] sm:$0xf]
        %v2141 = vld [vmem:[#allocation8 + $0x4] sm:$0xf]
        %v2142 = vld [vmem:[#allocation8 + $0x8] sm:$0xf]
        %v2143 = vld [vmem:[#allocation8 + $0xc] sm:$0xf]
        %v2144 = vld [vmem:[%s9] sm:$0x1]
        %v2146 = vlaneseq
        %v2147 = vshrl.u32 %v2146, 7
        %v2148 = vsub.s32 0, %v2147
        %v2149 = vrot.slane %v2144, %v2148
        %v2155 = vunpack.c.l.b16 %v2140
        %v2156 = vunpack.c.l.b16 %v2141
        %v2157 = vunpack.c.l.b16 %v2142
        %v2158 = vunpack.c.l.b16 %v2143
        %v2159 = vpack.c.b16 %v2156, %v2155
        %v2160 = vpack.c.b16 %v2158, %v2157
        %v2164 = vsel %vm568, %v2139, 0
        %2166 = vmatprep.subr.bf16.mxu0 0
        %2167 = vmatpush1.bf16.msra.mxu0 0
        %2168 = vmatprep.subr.bf16.mxu0 0
        %2169 = vmatpush1.bf16.msra.mxu0 0
        %2170 = vmatprep.subr.bf16.mxu0 0
        %2171 = vmatpush1.bf16.msra.mxu0 0
        %2172 = vmatprep.subr.bf16.mxu0 0
        %2173 = vmatpush1.bf16.msra.mxu0 0
        %2174 = vmatprep.subr.bf16.mxu0 0
        %2175 = vmatpush1.bf16.msra.mxu0 0
        %2176 = vmatprep.subr.bf16.mxu0 0
        %2177 = vmatpush1.bf16.msra.mxu0 0
        %2178 = vmatprep.subr.bf16.mxu0 0
        %2179 = vmatpush1.bf16.msra.mxu0 %v2160
        %2180 = vmatprep.subr.bf16.mxu0 0
        %2181 = vmatpush1.bf16.msra.mxu0 %v2159
        %2182 = vmatprep.subr.bf16.mxu0 0
        %2183 = vmatpush2.bf16.msra.mxu0 0
        %2184 = vmatprep.subr.bf16.mxu0 0
        %2185 = vmatpush2.bf16.msra.mxu0 0
        %2186 = vmatprep.subr.bf16.mxu0 0
        %2187 = vmatpush2.bf16.msra.mxu0 0
        %2188 = vmatprep.subr.bf16.mxu0 0
        %2189 = vmatpush2.bf16.msra.mxu0 0
        %2190 = vmatprep.subr.bf16.mxu0 0
        %2191 = vmatpush2.bf16.msra.mxu0 0
        %2192 = vmatprep.subr.bf16.mxu0 0
        %2193 = vmatpush2.bf16.msra.mxu0 0
        %2194 = vmatprep.subr.bf16.mxu0 0
        %2195 = vmatpush2.bf16.msra.mxu0 0
        %2196 = vmatprep.subr.bf16.mxu0 0
        %2197 = vmatpush2.bf16.msra.mxu0 0
        %2198 = vmatprep.mubr.bf16.mxu0 0
        %2199 = vmatmul.mubr.bf16.gmra.mxu0 %v2164
        %v2200 = vpop.f32.mrf.mxu0
        %v2201 = vadd.f32 %v2149, %v2200
        %v2202 = vpop.f32.mrf.mxu0
        %v2203 = vpop.f32.mrf.mxu0
        %v2204 = vpop.f32.mrf.mxu0
        %2205 = vdwg.mxu0
        %v2206 = vmax.f32 %v2201, 0.0
        %v2207 = vpack.c.bf16 %v2206, %v2206
        %v2208 = vld [vmem:[%s10] sm:$0xf]
        %v2209 = vld [vmem:[%s10 + $0x4] sm:$0xf]
        %v2210 = vld [vmem:[%s10 + $0x8] sm:$0xf]
        %v2211 = vld [vmem:[%s10 + $0xc] sm:$0xf]
        %v2212 = vld [vmem:[%s10 + $0x10] sm:$0xf]
        %v2213 = vld [vmem:[%s10 + $0x14] sm:$0xf]
        %v2214 = vld [vmem:[%s10 + $0x18] sm:$0xf]
        %v2215 = vld [vmem:[%s10 + $0x1c] sm:$0xf]
        %v2216 = vld [vmem:[%s11] sm:$0x1]
        %v2218 = vlaneseq
        %v2219 = vshrl.u32 %v2218, 7
        %v2220 = vsub.s32 0, %v2219
        %v2221 = vrot.slane %v2216, %v2220
        %v2231 = vunpack.c.l.b16 %v2208
        %v2232 = vunpack.c.l.b16 %v2209
        %v2233 = vunpack.c.l.b16 %v2210
        %v2234 = vunpack.c.l.b16 %v2211
        %v2235 = vunpack.c.l.b16 %v2212
        %v2236 = vunpack.c.l.b16 %v2213
        %v2237 = vunpack.c.l.b16 %v2214
        %v2238 = vunpack.c.l.b16 %v2215
        %v2239 = vpack.c.b16 %v2232, %v2231
        %v2240 = vpack.c.b16 %v2234, %v2233
        %v2241 = vpack.c.b16 %v2236, %v2235
        %v2242 = vpack.c.b16 %v2238, %v2237
        %vm2247 = vcmask 523264
        %v2249 = vsel %vm2247, %v2207, 0
        %2251 = vmatprep.subr.bf16.mxu0 0
        %2252 = vmatpush1.bf16.msra.mxu0 0
        %2253 = vmatprep.subr.bf16.mxu0 0
        %2254 = vmatpush1.bf16.msra.mxu0 0
        %2255 = vmatprep.subr.bf16.mxu0 0
        %2256 = vmatpush1.bf16.msra.mxu0 0
        %2257 = vmatprep.subr.bf16.mxu0 0
        %2258 = vmatpush1.bf16.msra.mxu0 0
        %2259 = vmatprep.subr.bf16.mxu0 0
        %2260 = vmatpush1.bf16.msra.mxu0 %v2242
        %2261 = vmatprep.subr.bf16.mxu0 0
        %2262 = vmatpush1.bf16.msra.mxu0 %v2241
        %2263 = vmatprep.subr.bf16.mxu0 0
        %2264 = vmatpush1.bf16.msra.mxu0 %v2240
        %2265 = vmatprep.subr.bf16.mxu0 0
        %2266 = vmatpush1.bf16.msra.mxu0 %v2239
        %2267 = vmatprep.subr.bf16.mxu0 0
        %2268 = vmatpush2.bf16.msra.mxu0 0
        %2269 = vmatprep.subr.bf16.mxu0 0
        %2270 = vmatpush2.bf16.msra.mxu0 0
        %2271 = vmatprep.subr.bf16.mxu0 0
        %2272 = vmatpush2.bf16.msra.mxu0 0
        %2273 = vmatprep.subr.bf16.mxu0 0
        %2274 = vmatpush2.bf16.msra.mxu0 0
        %2275 = vmatprep.subr.bf16.mxu0 0
        %2276 = vmatpush2.bf16.msra.mxu0 0
        %2277 = vmatprep.subr.bf16.mxu0 0
        %2278 = vmatpush2.bf16.msra.mxu0 0
        %2279 = vmatprep.subr.bf16.mxu0 0
        %2280 = vmatpush2.bf16.msra.mxu0 0
        %2281 = vmatprep.subr.bf16.mxu0 0
        %2282 = vmatpush2.bf16.msra.mxu0 0
        %2283 = vmatprep.mubr.bf16.mxu0 0
        %2284 = vmatmul.mubr.bf16.gmra.mxu0 %v2249
        %v2285 = vpop.f32.mrf.mxu0
        %v2286 = vadd.f32 %v2221, %v2285
        %v2287 = vpop.f32.mrf.mxu0
        %v2288 = vpop.f32.mrf.mxu0
        %v2289 = vpop.f32.mrf.mxu0
        %2290 = vdwg.mxu0
        %v2291 = vadd.f32 %v2106, %v2286
        %2292 = vst.msk [vmem:[%s551] sm:$0xff] %vm568, %v2291
        %s2293 = sand.u32 %s350, 1
        %s2294 = scalar_lea.sflag [#allocation4], %s2293
        %s2295 = sand.u32 %s350, 1
        %s2296 = smul.addr %s2295, 8
        %s2297 = scalar_lea.vmem [#allocation10], %s2296
        // Predicated region
        $region93: #{tpu_custom_call.1} parent=75 // pred_check
          %p2298 = pneg %p360
        $region94: #{tpu_custom_call.1} parent=75 // pred_check_branch
          %2300 = sbr.rel (%p2298) target = $region96
        $region95: #{tpu_custom_call.1} parent=75 // pred_region
          %s2302 = ssub.s32 128, 128
          %2303 = vsyncadd %s2294, %s2302
          %s2304 = smul.addr %s33, 128
          %s2305 = scalar_lea.hbm %s14, %s2304
          %s2307 = sshll.u32 %s2297, 4
          %s2308 = int_to_ptr.vmem [resolvable:$true] %s2307
          %2310 = dma.vmem_to_hbm [thread:$0]  %s2308, 128, %s2305, %s2294
        $region96: #{tpu_custom_call.1} parent=75 // pred_fallthru
          _
      $region76: #{tpu_custom_call.1} parent=5 // pred_fallthru
        _
      %p2311 = scmp.le.s32.totalorder 2, %s28
      // Predicated region
      $region97: #{tpu_custom_call.1} parent=5 // pred_check
        %p2312 = pneg %p2311
      $region98: #{tpu_custom_call.1} parent=5 // pred_check_branch
        %2314 = sbr.rel (%p2312) target = $region100
      $region99: #{tpu_custom_call.1} parent=5 // pred_region
        %s2315 = ssub.s32 %s28, 2
        // Predicated region
        $region101: #{tpu_custom_call.1} parent=99 // pred_check
          %p2316 = pneg %p366
        $region102: #{tpu_custom_call.1} parent=99 // pred_check_branch
          %2318 = sbr.rel (%p2316) target = $region104
        $region103: #{tpu_custom_call.1} parent=99 // pred_region
          %s2319 = sand.u32 %s351, 1
          %s2320 = scalar_lea.sflag [#allocation4], %s2319
          %s2321 = sand.u32 %s351, 1
          %s2322 = smul.addr %s2321, 8
          %s2323 = scalar_lea.vmem [#allocation10], %s2322
          %2324 = dma.done %s2320, 128
        $region104: #{tpu_custom_call.1} parent=99 // pred_fallthru
          _
      $region100: #{tpu_custom_call.1} parent=5 // pred_fallthru
        _
    $region6: #{tpu_custom_call.1} parent=1 // loop_footer
      %s32 = sadd.s32 1, %s28
    $region7: #{tpu_custom_call.1} parent=1 // loop_footer_branch
      %27 = sbr.rel target = $region3
    $region8: #{tpu_custom_call.1} parent=1 // loop_exit
      _
    %2325 = vsyncpa [#allocation3], 1
    %s2326 = scalar_lea.sflag [#allocation3], 1
    %2327 = vsyncpa %s2326, 1
    %2328 = vsyncpa [#allocation6], 1
    %2329 = vsyncpa [#allocation9], 1
    %2330 = vsyncpa [#allocation4], 1
    %s2331 = scalar_lea.sflag [#allocation4], 1
    %2332 = vsyncpa %s2331, 1

</llo_original>
